<compile_context>
chip_gen: v7x
topology: tpu7x:2x2x1
jax: 0.10.0
libtpu: 0.0.40
codegen_flags: <defaults>
</compile_context>

<pallas_src>
import functools

import jax
import jax.numpy as jnp
from jax.experimental import pallas as pl
from jax.experimental.pallas import tpu as pltpu


def _round_up(x, m):
    return ((x + m - 1) // m) * m


def _rnn_net_kernel(*refs, num_layers, time_chunk, batch):
    """One grid step == one chunk of `time_chunk` timesteps.

    refs (L = num_layers, Hp = padded hidden, Bp = padded batch, TB = T*Bp):
      x_ref      : (TB, D)          chunk of inputs, rows ordered (t, b)
      w_ih0_ref  : (D, Hp)          layer-0 input->hidden weight, pre-transposed
      w_hh0_ref  : (Hp, Hp)         layer-0 hidden->hidden weight, pre-transposed
      b0_ref     : (1, Hp)          layer-0 combined bias (b_ih + b_hh)
      [w_cat_ref : (L-1, 2*Hp, Hp)  layers 1..L-1 fused [W_ih^T; W_hh^T]]
      [b_r_ref   : (L-1, 1, Hp)     layers 1..L-1 combined biases]
      w_fc_ref   : (Hp, Hp)         final Linear weight, pre-transposed
      b_fc_ref   : (1, Hp)          final Linear bias
      o_ref      : (TB, Hp)         chunk of outputs
      h_scr      : (L, Bp, Hp)      persistent hidden state (VMEM scratch)
    """
    if num_layers > 1:
        (x_ref, w_ih0_ref, w_hh0_ref, b0_ref, w_cat_ref, b_r_ref,
         w_fc_ref, b_fc_ref, o_ref, h_scr) = refs
    else:
        (x_ref, w_ih0_ref, w_hh0_ref, b0_ref,
         w_fc_ref, b_fc_ref, o_ref, h_scr) = refs
        w_cat_ref = None
        b_r_ref = None

    Bp = batch
    Hp = o_ref.shape[-1]
    c = pl.program_id(0)

    # h_0 = zeros, matching PyTorch's default initial hidden state.
    @pl.when(c == 0)
    def _():
        h_scr[...] = jnp.zeros_like(h_scr)

    # Hoisted layer-0 input projection for the whole chunk (no recurrence dep).
    xproj = (jnp.dot(x_ref[...], w_ih0_ref[...],
                     preferred_element_type=jnp.float32)
             + b0_ref[...])                                        # (TB, Hp)

    # Hoisted bias broadcasts for layers >= 1 (broadcast_in_dim is not CSE'd).
    if num_layers > 1:
        b_rs = [jnp.broadcast_to(b_r_ref[l - 1], (Bp, Hp))
                for l in range(1, num_layers)]

    # Load the hidden-state carry once per chunk; keep it in registers.
    h = [h_scr[l] for l in range(num_layers)]                      # each (Bp, Hp)

    ys = []                                                        # last-layer hiddens
    for t in range(time_chunk):                                    # static unroll
        r0 = t * Bp
        # ---- layer 0: tanh(xW_ih^T + b + h W_hh^T) ----
        z0 = xproj[r0:r0 + Bp, :] + jnp.dot(
            h[0], w_hh0_ref[...], preferred_element_type=jnp.float32)
        h[0] = jnp.tanh(z0)
        inp = h[0]
        # ---- layers 1 .. L-1: fused K = 2*Hp matmul ----
        for l in range(1, num_layers):
            cat = jnp.concatenate([inp, h[l]], axis=-1)            # (Bp, 2*Hp)
            z = jnp.dot(cat, w_cat_ref[l - 1],
                        preferred_element_type=jnp.float32) + b_rs[l - 1]
            h[l] = jnp.tanh(z)
            inp = h[l]
        ys.append(inp)

    # Write the carry back once per chunk.
    for l in range(num_layers):
        h_scr[l] = h[l]

    # ---- batched fc over the whole chunk (hiddens stayed in registers) ----
    hcat = jnp.concatenate(ys, axis=0)                             # (TB, Hp)
    y = (jnp.dot(hcat, w_fc_ref[...], preferred_element_type=jnp.float32)
         + b_fc_ref[...])
    o_ref[...] = y.astype(o_ref.dtype)


def rnn_net_forward(x, params, num_layers, *, time_chunk=16,
                    weight_dtype=jnp.float32):
    """x: (S, B, D) float32 -> (S, B, H).  params are PyTorch-style tensors.

    weight_dtype=jnp.bfloat16 halves weight HBM/VMEM and uses the bf16 MXU on
    v6e/v7x (keep f32 here so the f32 reference check stays tight).
    """
    S, B, D = x.shape
    H = params["w_hh"][0].shape[0]
    Hp = _round_up(H, 128)                 # lane-dense hidden / output width
    Bp = _round_up(B, 8)                   # whole-sublane row group per timestep

    T = max(1, int(time_chunk))
    S_pad = _round_up(S, T)
    TB = T * Bp

    f32 = jnp.float32

    def pad2(w, rows, cols):
        return jnp.pad(w.astype(f32),
                       ((0, rows - w.shape[0]),
                        (0, cols - w.shape[1]))).astype(weight_dtype)

    def pad_bias(b):
        return jnp.pad(b.astype(f32), (0, Hp - H)).reshape(1, Hp)

    # ---- one-time weight prep (pre-transpose + fuse ih/hh + fuse biases + pad) ----
    w_ih0_T = pad2(params["w_ih"][0].T, D, Hp)                       # (D, Hp)
    w_hh0_T = pad2(params["w_hh"][0].T, Hp, Hp)                      # (Hp, Hp)
    b0 = pad_bias(params["b_ih"][0] + params["b_hh"][0])             # (1, Hp)
    if num_layers > 1:
        w_cat_T = jnp.stack([
            jnp.concatenate([pad2(params["w_ih"][l].T, Hp, Hp),
                             pad2(params["w_hh"][l].T, Hp, Hp)], axis=0)
            for l in range(1, num_layers)])                          # (L-1, 2*Hp, Hp)
        b_r = jnp.stack([pad_bias(params["b_ih"][l] + params["b_hh"][l])
                         for l in range(1, num_layers)])             # (L-1, 1, Hp)
    w_fc_T = pad2(params["w_fc"].T, Hp, Hp)                          # (Hp, Hp)
    b_fc = pad_bias(params["b_fc"])                                  # (1, Hp)

    # ---- input prep: pad time + batch, flatten to a lane-friendly 2-D slab ----
    x_pad = jnp.pad(x.astype(f32),
                    ((0, S_pad - S), (0, Bp - B), (0, 0)))           # (S_pad, Bp, D)
    x2d = x_pad.reshape(S_pad * Bp, D)

    kernel = functools.partial(_rnn_net_kernel, num_layers=num_layers,
                               time_chunk=T, batch=Bp)

    in_specs = [
        pl.BlockSpec((TB, D), lambda c: (c, 0)),                     # x chunk
        pl.BlockSpec((D, Hp), lambda c: (0, 0)),                     # w_ih0^T
        pl.BlockSpec((Hp, Hp), lambda c: (0, 0)),                    # w_hh0^T
        pl.BlockSpec((1, Hp), lambda c: (0, 0)),                     # b0
    ]
    args = [x2d, w_ih0_T, w_hh0_T, b0]
    if num_layers > 1:
        in_specs += [
            pl.BlockSpec((num_layers - 1, 2 * Hp, Hp), lambda c: (0, 0, 0)),
            pl.BlockSpec((num_layers - 1, 1, Hp), lambda c: (0, 0, 0)),
        ]
        args += [w_cat_T, b_r]
    in_specs += [
        pl.BlockSpec((Hp, Hp), lambda c: (0, 0)),                    # w_fc^T
        pl.BlockSpec((1, Hp), lambda c: (0, 0)),                     # b_fc
    ]
    args += [w_fc_T, b_fc]

    # Advisory cost estimate for XLA's scheduler.
    rows = S_pad * Bp
    flops = 2 * rows * (D * Hp + Hp * Hp
                        + max(num_layers - 1, 0) * 2 * Hp * Hp
                        + Hp * Hp)
    transcendentals = rows * Hp * num_layers
    weight_bytes = 4 * (D * Hp + Hp * Hp
                        + max(num_layers - 1, 0) * (2 * Hp * Hp + Hp)
                        + Hp * Hp + 2 * Hp)
    bytes_accessed = 4 * (rows * D + rows * Hp) + weight_bytes

    out2d = pl.pallas_call(
        kernel,
        out_shape=jax.ShapeDtypeStruct((S_pad * Bp, Hp), x.dtype),
        grid_spec=pltpu.PrefetchScalarGridSpec(
            num_scalar_prefetch=0,
            grid=(S_pad // T,),
            in_specs=in_specs,
            out_specs=pl.BlockSpec((TB, Hp), lambda c: (c, 0)),
            scratch_shapes=[
                pltpu.VMEM((num_layers, Bp, Hp), jnp.float32),       # hidden carry
            ],
        ),
        compiler_params=pltpu.CompilerParams(
            # Sequential recurrence over time -> the single grid axis must stay
            # "arbitrary" so the VMEM hidden-state carry is valid.
            dimension_semantics=("arbitrary",),
        ),
        cost_estimate=pl.CostEstimate(flops=flops,
                                      transcendentals=transcendentals,
                                      bytes_accessed=bytes_accessed),
    )(*args)

    # Free reshape + strip time / batch / lane padding.
    return out2d.reshape(S_pad, Bp, Hp)[:S, :B, :H]


def init_params(key, input_dim, hidden_dim, num_layers, dtype=jnp.float32):
    """PyTorch-style parameters: U(-1/sqrt(H), 1/sqrt(H))."""
    H, D = hidden_dim, input_dim
    bound = 1.0 / (H ** 0.5)

    def u(k, shape):
        return jax.random.uniform(k, shape, dtype, -bound, bound)

    keys = iter(jax.random.split(key, 4 * num_layers + 2))
    w_ih, w_hh, b_ih, b_hh = [], [], [], []
    for l in range(num_layers):
        in_dim = D if l == 0 else H
        w_ih.append(u(next(keys), (H, in_dim)))
        w_hh.append(u(next(keys), (H, H)))
        b_ih.append(u(next(keys), (H,)))
        b_hh.append(u(next(keys), (H,)))
    return {
        "w_ih": w_ih, "w_hh": w_hh, "b_ih": b_ih, "b_hh": b_hh,
        "w_fc": u(next(keys), (H, H)),
        "b_fc": u(next(keys), (H,)),
    }


def reference_forward(x, params, num_layers):
    """Pure-JAX reference (matches torch nn.RNN(tanh) + Linear)."""
    S, B, D = x.shape
    H = params["w_hh"][0].shape[0]

    def step(h, x_t):
        inp = x_t
        new_h = []
        for l in range(num_layers):
            hl = jnp.tanh(inp @ params["w_ih"][l].T
                          + h[l] @ params["w_hh"][l].T
                          + params["b_ih"][l] + params["b_hh"][l])
            new_h.append(hl)
            inp = hl
        return jnp.stack(new_h), inp

    h0 = jnp.zeros((num_layers, B, H), jnp.float32)
    _, hs = jax.lax.scan(step, h0, x)                 # hs: (S, B, H)
    return hs @ params["w_fc"].T + params["b_fc"]


if __name__ == "__main__":
    SEQ, BATCH, INPUT_DIM, HIDDEN_DIM, NUM_LAYERS = 64, 4, 16, 32, 2

    key = jax.random.PRNGKey(0)
    kx, kp = jax.random.split(key)
    x = jax.random.normal(kx, (SEQ, BATCH, INPUT_DIM), jnp.float32)
    params = init_params(kp, INPUT_DIM, HIDDEN_DIM, NUM_LAYERS)

    fwd = jax.jit(functools.partial(rnn_net_forward,
                                    num_layers=NUM_LAYERS, time_chunk=16))
    out = jax.block_until_ready(fwd(x, params))

    ref = reference_forward(x, params, NUM_LAYERS)
    assert out.shape == (SEQ, BATCH, HIDDEN_DIM), out.shape
    assert jnp.allclose(out, ref, atol=1e-4, rtol=1e-4), \
        f"mismatch vs reference, max abs err = {jnp.max(jnp.abs(out - ref))}"

    print("KERNEL_OK")
</pallas_src>

<mosaic_0001>
module attributes {stable_mosaic.version = 11 : i64} {
  func.func @_rnn_net_kernel(%arg0: i32, %arg1: memref<128x16xf32, #tpu.memory_space<vmem>>, %arg2: memref<16x128xf32, #tpu.memory_space<vmem>>, %arg3: memref<128x128xf32, #tpu.memory_space<vmem>>, %arg4: memref<1x128xf32, #tpu.memory_space<vmem>>, %arg5: memref<1x256x128xf32, #tpu.memory_space<vmem>>, %arg6: memref<1x1x128xf32, #tpu.memory_space<vmem>>, %arg7: memref<128x128xf32, #tpu.memory_space<vmem>>, %arg8: memref<1x128xf32, #tpu.memory_space<vmem>>, %arg9: memref<128x128xf32, #tpu.memory_space<vmem>>, %arg10: memref<2x8x128xf32, #tpu.memory_space<vmem>>) attributes {dimension_semantics = [#tpu.dimension_semantics<arbitrary>], iteration_bounds = array<i64: 4>, scalar_prefetch = 0 : i64, scratch_operands = 1 : i64, tpu.core_type = #tpu.core_type<tc>, window_params = [{transform_indices = @transform_0, window_bounds = array<i64: 128, 16>}, {pipeline_mode = #tpu.pipeline_mode<synchronous>, transform_indices = @transform_1, window_bounds = array<i64: 16, 128>}, {pipeline_mode = #tpu.pipeline_mode<synchronous>, transform_indices = @transform_2, window_bounds = array<i64: 128, 128>}, {pipeline_mode = #tpu.pipeline_mode<synchronous>, transform_indices = @transform_3, window_bounds = array<i64: 1, 128>}, {pipeline_mode = #tpu.pipeline_mode<synchronous>, transform_indices = @transform_4, window_bounds = array<i64: 1, 256, 128>}, {pipeline_mode = #tpu.pipeline_mode<synchronous>, transform_indices = @transform_5, window_bounds = array<i64: 1, 1, 128>}, {pipeline_mode = #tpu.pipeline_mode<synchronous>, transform_indices = @transform_6, window_bounds = array<i64: 128, 128>}, {pipeline_mode = #tpu.pipeline_mode<synchronous>, transform_indices = @transform_7, window_bounds = array<i64: 1, 128>}, {transform_indices = @transform_8, window_bounds = array<i64: 128, 128>}]} {
    %c0_i32 = arith.constant 0 : i32
    %0 = arith.cmpi eq, %arg0, %c0_i32 : i32
    %1 = arith.extui %0 : i1 to i32
    %c0_i32_0 = arith.constant 0 : i32
    %2 = arith.cmpi ne, %1, %c0_i32_0 : i32
    scf.if %2 {
      %cst_139 = arith.constant 0.000000e+00 : f32
      %206 = vector.broadcast %cst_139 : f32 to vector<2x8x128xf32>
      %c0_140 = arith.constant 0 : index
      %c0_141 = arith.constant 0 : index
      %c0_142 = arith.constant 0 : index
      %207 = vector.load %arg10[%c0_140, %c0_141, %c0_142] : memref<2x8x128xf32, #tpu.memory_space<vmem>>, vector<2x8x128xf32>
      tpu.vector_store %arg10[%c0_140, %c0_141, %c0_142], %206 {strides = array<i32>} : memref<2x8x128xf32, #tpu.memory_space<vmem>>, vector<2x8x128xf32>,
    } else {
    }
    %c0 = arith.constant 0 : index
    %c0_1 = arith.constant 0 : index
    %3 = vector.load %arg1[%c0, %c0_1] : memref<128x16xf32, #tpu.memory_space<vmem>>, vector<128x16xf32>
    %c0_2 = arith.constant 0 : index
    %c0_3 = arith.constant 0 : index
    %4 = vector.load %arg2[%c0_2, %c0_3] : memref<16x128xf32, #tpu.memory_space<vmem>>, vector<16x128xf32>
    %cst = arith.constant dense<0.000000e+00> : vector<128x128xf32>
    %5 = tpu.matmul %3, %4, %cst {dimension_numbers = #tpu.dot_dimension_numbers<[1], [0], [0], [1], [0, 0, 1, 1], [], []>} : vector<128x16xf32>, vector<16x128xf32>, vector<128x128xf32> -> vector<128x128xf32>
    %c0_4 = arith.constant 0 : index
    %c0_5 = arith.constant 0 : index
    %6 = vector.load %arg4[%c0_4, %c0_5] : memref<1x128xf32, #tpu.memory_space<vmem>>, vector<1x128xf32>
    %7 = vector.broadcast %6 : vector<1x128xf32> to vector<128x128xf32>
    %8 = arith.addf %5, %7 : vector<128x128xf32>
    %c0_6 = arith.constant 0 : index
    %c0_7 = arith.constant 0 : index
    %c0_8 = arith.constant 0 : index
    %9 = vector.load %arg6[%c0_6, %c0_7, %c0_8] : memref<1x1x128xf32, #tpu.memory_space<vmem>>, vector<1x1x128xf32>
    %10 = vector.shape_cast %9 : vector<1x1x128xf32> to vector<1x128xf32>
    %11 = vector.shape_cast %10 : vector<1x128xf32> to vector<1x128xf32>
    %12 = vector.broadcast %11 : vector<1x128xf32> to vector<8x128xf32>
    %c0_9 = arith.constant 0 : index
    %c0_10 = arith.constant 0 : index
    %c0_11 = arith.constant 0 : index
    %13 = vector.load %arg10[%c0_9, %c0_10, %c0_11] : memref<2x8x128xf32, #tpu.memory_space<vmem>>, vector<1x8x128xf32>
    %14 = vector.shape_cast %13 : vector<1x8x128xf32> to vector<8x128xf32>
    %c1 = arith.constant 1 : index
    %c0_12 = arith.constant 0 : index
    %c0_13 = arith.constant 0 : index
    %15 = vector.load %arg10[%c1, %c0_12, %c0_13] : memref<2x8x128xf32, #tpu.memory_space<vmem>>, vector<1x8x128xf32>
    %16 = vector.shape_cast %15 : vector<1x8x128xf32> to vector<8x128xf32>
    %17 = vector.extract_strided_slice %8 {offsets = [0, 0], sizes = [8, 128], strides = [1, 1]} : vector<128x128xf32> to vector<8x128xf32>
    %c0_14 = arith.constant 0 : index
    %c0_15 = arith.constant 0 : index
    %18 = vector.load %arg3[%c0_14, %c0_15] : memref<128x128xf32, #tpu.memory_space<vmem>>, vector<128x128xf32>
    %cst_16 = arith.constant dense<0.000000e+00> : vector<8x128xf32>
    %19 = tpu.matmul %14, %18, %cst_16 {dimension_numbers = #tpu.dot_dimension_numbers<[1], [0], [0], [1], [0, 0, 1, 1], [], []>} : vector<8x128xf32>, vector<128x128xf32>, vector<8x128xf32> -> vector<8x128xf32>
    %20 = arith.addf %17, %19 : vector<8x128xf32>
    %21 = math.tanh %20 : vector<8x128xf32>
    %22 = tpu.concatenate %21, %16 in 1 : vector<8x128xf32>, vector<8x128xf32> -> vector<8x256xf32>
    %c0_17 = arith.constant 0 : index
    %c0_18 = arith.constant 0 : index
    %c0_19 = arith.constant 0 : index
    %23 = vector.load %arg5[%c0_17, %c0_18, %c0_19] : memref<1x256x128xf32, #tpu.memory_space<vmem>>, vector<1x256x128xf32>
    %24 = vector.shape_cast %23 : vector<1x256x128xf32> to vector<256x128xf32>
    %cst_20 = arith.constant dense<0.000000e+00> : vector<8x128xf32>
    %25 = tpu.matmul %22, %24, %cst_20 {dimension_numbers = #tpu.dot_dimension_numbers<[1], [0], [0], [1], [0, 0, 1, 1], [], []>} : vector<8x256xf32>, vector<256x128xf32>, vector<8x128xf32> -> vector<8x128xf32>
    %26 = arith.addf %25, %12 : vector<8x128xf32>
    %27 = math.tanh %26 : vector<8x128xf32>
    %28 = vector.extract_strided_slice %8 {offsets = [8, 0], sizes = [8, 128], strides = [1, 1]} : vector<128x128xf32> to vector<8x128xf32>
    %c0_21 = arith.constant 0 : index
    %c0_22 = arith.constant 0 : index
    %29 = vector.load %arg3[%c0_21, %c0_22] : memref<128x128xf32, #tpu.memory_space<vmem>>, vector<128x128xf32>
    %cst_23 = arith.constant dense<0.000000e+00> : vector<8x128xf32>
    %30 = tpu.matmul %21, %29, %cst_23 {dimension_numbers = #tpu.dot_dimension_numbers<[1], [0], [0], [1], [0, 0, 1, 1], [], []>} : vector<8x128xf32>, vector<128x128xf32>, vector<8x128xf32> -> vector<8x128xf32>
    %31 = arith.addf %28, %30 : vector<8x128xf32>
    %32 = math.tanh %31 : vector<8x128xf32>
    %33 = tpu.concatenate %32, %27 in 1 : vector<8x128xf32>, vector<8x128xf32> -> vector<8x256xf32>
    %c0_24 = arith.constant 0 : index
    %c0_25 = arith.constant 0 : index
    %c0_26 = arith.constant 0 : index
    %34 = vector.load %arg5[%c0_24, %c0_25, %c0_26] : memref<1x256x128xf32, #tpu.memory_space<vmem>>, vector<1x256x128xf32>
    %35 = vector.shape_cast %34 : vector<1x256x128xf32> to vector<256x128xf32>
    %cst_27 = arith.constant dense<0.000000e+00> : vector<8x128xf32>
    %36 = tpu.matmul %33, %35, %cst_27 {dimension_numbers = #tpu.dot_dimension_numbers<[1], [0], [0], [1], [0, 0, 1, 1], [], []>} : vector<8x256xf32>, vector<256x128xf32>, vector<8x128xf32> -> vector<8x128xf32>
    %37 = arith.addf %36, %12 : vector<8x128xf32>
    %38 = math.tanh %37 : vector<8x128xf32>
    %39 = vector.extract_strided_slice %8 {offsets = [16, 0], sizes = [8, 128], strides = [1, 1]} : vector<128x128xf32> to vector<8x128xf32>
    %c0_28 = arith.constant 0 : index
    %c0_29 = arith.constant 0 : index
    %40 = vector.load %arg3[%c0_28, %c0_29] : memref<128x128xf32, #tpu.memory_space<vmem>>, vector<128x128xf32>
    %cst_30 = arith.constant dense<0.000000e+00> : vector<8x128xf32>
    %41 = tpu.matmul %32, %40, %cst_30 {dimension_numbers = #tpu.dot_dimension_numbers<[1], [0], [0], [1], [0, 0, 1, 1], [], []>} : vector<8x128xf32>, vector<128x128xf32>, vector<8x128xf32> -> vector<8x128xf32>
    %42 = arith.addf %39, %41 : vector<8x128xf32>
    %43 = math.tanh %42 : vector<8x128xf32>
    %44 = tpu.concatenate %43, %38 in 1 : vector<8x128xf32>, vector<8x128xf32> -> vector<8x256xf32>
    %c0_31 = arith.constant 0 : index
    %c0_32 = arith.constant 0 : index
    %c0_33 = arith.constant 0 : index
    %45 = vector.load %arg5[%c0_31, %c0_32, %c0_33] : memref<1x256x128xf32, #tpu.memory_space<vmem>>, vector<1x256x128xf32>
    %46 = vector.shape_cast %45 : vector<1x256x128xf32> to vector<256x128xf32>
    %cst_34 = arith.constant dense<0.000000e+00> : vector<8x128xf32>
    %47 = tpu.matmul %44, %46, %cst_34 {dimension_numbers = #tpu.dot_dimension_numbers<[1], [0], [0], [1], [0, 0, 1, 1], [], []>} : vector<8x256xf32>, vector<256x128xf32>, vector<8x128xf32> -> vector<8x128xf32>
    %48 = arith.addf %47, %12 : vector<8x128xf32>
    %49 = math.tanh %48 : vector<8x128xf32>
    %50 = vector.extract_strided_slice %8 {offsets = [24, 0], sizes = [8, 128], strides = [1, 1]} : vector<128x128xf32> to vector<8x128xf32>
    %c0_35 = arith.constant 0 : index
    %c0_36 = arith.constant 0 : index
    %51 = vector.load %arg3[%c0_35, %c0_36] : memref<128x128xf32, #tpu.memory_space<vmem>>, vector<128x128xf32>
    %cst_37 = arith.constant dense<0.000000e+00> : vector<8x128xf32>
    %52 = tpu.matmul %43, %51, %cst_37 {dimension_numbers = #tpu.dot_dimension_numbers<[1], [0], [0], [1], [0, 0, 1, 1], [], []>} : vector<8x128xf32>, vector<128x128xf32>, vector<8x128xf32> -> vector<8x128xf32>
    %53 = arith.addf %50, %52 : vector<8x128xf32>
    %54 = math.tanh %53 : vector<8x128xf32>
    %55 = tpu.concatenate %54, %49 in 1 : vector<8x128xf32>, vector<8x128xf32> -> vector<8x256xf32>
    %c0_38 = arith.constant 0 : index
    %c0_39 = arith.constant 0 : index
    %c0_40 = arith.constant 0 : index
    %56 = vector.load %arg5[%c0_38, %c0_39, %c0_40] : memref<1x256x128xf32, #tpu.memory_space<vmem>>, vector<1x256x128xf32>
    %57 = vector.shape_cast %56 : vector<1x256x128xf32> to vector<256x128xf32>
    %cst_41 = arith.constant dense<0.000000e+00> : vector<8x128xf32>
    %58 = tpu.matmul %55, %57, %cst_41 {dimension_numbers = #tpu.dot_dimension_numbers<[1], [0], [0], [1], [0, 0, 1, 1], [], []>} : vector<8x256xf32>, vector<256x128xf32>, vector<8x128xf32> -> vector<8x128xf32>
    %59 = arith.addf %58, %12 : vector<8x128xf32>
    %60 = math.tanh %59 : vector<8x128xf32>
    %61 = vector.extract_strided_slice %8 {offsets = [32, 0], sizes = [8, 128], strides = [1, 1]} : vector<128x128xf32> to vector<8x128xf32>
    %c0_42 = arith.constant 0 : index
    %c0_43 = arith.constant 0 : index
    %62 = vector.load %arg3[%c0_42, %c0_43] : memref<128x128xf32, #tpu.memory_space<vmem>>, vector<128x128xf32>
    %cst_44 = arith.constant dense<0.000000e+00> : vector<8x128xf32>
    %63 = tpu.matmul %54, %62, %cst_44 {dimension_numbers = #tpu.dot_dimension_numbers<[1], [0], [0], [1], [0, 0, 1, 1], [], []>} : vector<8x128xf32>, vector<128x128xf32>, vector<8x128xf32> -> vector<8x128xf32>
    %64 = arith.addf %61, %63 : vector<8x128xf32>
    %65 = math.tanh %64 : vector<8x128xf32>
    %66 = tpu.concatenate %65, %60 in 1 : vector<8x128xf32>, vector<8x128xf32> -> vector<8x256xf32>
    %c0_45 = arith.constant 0 : index
    %c0_46 = arith.constant 0 : index
    %c0_47 = arith.constant 0 : index
    %67 = vector.load %arg5[%c0_45, %c0_46, %c0_47] : memref<1x256x128xf32, #tpu.memory_space<vmem>>, vector<1x256x128xf32>
    %68 = vector.shape_cast %67 : vector<1x256x128xf32> to vector<256x128xf32>
    %cst_48 = arith.constant dense<0.000000e+00> : vector<8x128xf32>
    %69 = tpu.matmul %66, %68, %cst_48 {dimension_numbers = #tpu.dot_dimension_numbers<[1], [0], [0], [1], [0, 0, 1, 1], [], []>} : vector<8x256xf32>, vector<256x128xf32>, vector<8x128xf32> -> vector<8x128xf32>
    %70 = arith.addf %69, %12 : vector<8x128xf32>
    %71 = math.tanh %70 : vector<8x128xf32>
    %72 = vector.extract_strided_slice %8 {offsets = [40, 0], sizes = [8, 128], strides = [1, 1]} : vector<128x128xf32> to vector<8x128xf32>
    %c0_49 = arith.constant 0 : index
    %c0_50 = arith.constant 0 : index
    %73 = vector.load %arg3[%c0_49, %c0_50] : memref<128x128xf32, #tpu.memory_space<vmem>>, vector<128x128xf32>
    %cst_51 = arith.constant dense<0.000000e+00> : vector<8x128xf32>
    %74 = tpu.matmul %65, %73, %cst_51 {dimension_numbers = #tpu.dot_dimension_numbers<[1], [0], [0], [1], [0, 0, 1, 1], [], []>} : vector<8x128xf32>, vector<128x128xf32>, vector<8x128xf32> -> vector<8x128xf32>
    %75 = arith.addf %72, %74 : vector<8x128xf32>
    %76 = math.tanh %75 : vector<8x128xf32>
    %77 = tpu.concatenate %76, %71 in 1 : vector<8x128xf32>, vector<8x128xf32> -> vector<8x256xf32>
    %c0_52 = arith.constant 0 : index
    %c0_53 = arith.constant 0 : index
    %c0_54 = arith.constant 0 : index
    %78 = vector.load %arg5[%c0_52, %c0_53, %c0_54] : memref<1x256x128xf32, #tpu.memory_space<vmem>>, vector<1x256x128xf32>
    %79 = vector.shape_cast %78 : vector<1x256x128xf32> to vector<256x128xf32>
    %cst_55 = arith.constant dense<0.000000e+00> : vector<8x128xf32>
    %80 = tpu.matmul %77, %79, %cst_55 {dimension_numbers = #tpu.dot_dimension_numbers<[1], [0], [0], [1], [0, 0, 1, 1], [], []>} : vector<8x256xf32>, vector<256x128xf32>, vector<8x128xf32> -> vector<8x128xf32>
    %81 = arith.addf %80, %12 : vector<8x128xf32>
    %82 = math.tanh %81 : vector<8x128xf32>
    %83 = vector.extract_strided_slice %8 {offsets = [48, 0], sizes = [8, 128], strides = [1, 1]} : vector<128x128xf32> to vector<8x128xf32>
    %c0_56 = arith.constant 0 : index
    %c0_57 = arith.constant 0 : index
    %84 = vector.load %arg3[%c0_56, %c0_57] : memref<128x128xf32, #tpu.memory_space<vmem>>, vector<128x128xf32>
    %cst_58 = arith.constant dense<0.000000e+00> : vector<8x128xf32>
    %85 = tpu.matmul %76, %84, %cst_58 {dimension_numbers = #tpu.dot_dimension_numbers<[1], [0], [0], [1], [0, 0, 1, 1], [], []>} : vector<8x128xf32>, vector<128x128xf32>, vector<8x128xf32> -> vector<8x128xf32>
    %86 = arith.addf %83, %85 : vector<8x128xf32>
    %87 = math.tanh %86 : vector<8x128xf32>
    %88 = tpu.concatenate %87, %82 in 1 : vector<8x128xf32>, vector<8x128xf32> -> vector<8x256xf32>
    %c0_59 = arith.constant 0 : index
    %c0_60 = arith.constant 0 : index
    %c0_61 = arith.constant 0 : index
    %89 = vector.load %arg5[%c0_59, %c0_60, %c0_61] : memref<1x256x128xf32, #tpu.memory_space<vmem>>, vector<1x256x128xf32>
    %90 = vector.shape_cast %89 : vector<1x256x128xf32> to vector<256x128xf32>
    %cst_62 = arith.constant dense<0.000000e+00> : vector<8x128xf32>
    %91 = tpu.matmul %88, %90, %cst_62 {dimension_numbers = #tpu.dot_dimension_numbers<[1], [0], [0], [1], [0, 0, 1, 1], [], []>} : vector<8x256xf32>, vector<256x128xf32>, vector<8x128xf32> -> vector<8x128xf32>
    %92 = arith.addf %91, %12 : vector<8x128xf32>
    %93 = math.tanh %92 : vector<8x128xf32>
    %94 = vector.extract_strided_slice %8 {offsets = [56, 0], sizes = [8, 128], strides = [1, 1]} : vector<128x128xf32> to vector<8x128xf32>
    %c0_63 = arith.constant 0 : index
    %c0_64 = arith.constant 0 : index
    %95 = vector.load %arg3[%c0_63, %c0_64] : memref<128x128xf32, #tpu.memory_space<vmem>>, vector<128x128xf32>
    %cst_65 = arith.constant dense<0.000000e+00> : vector<8x128xf32>
    %96 = tpu.matmul %87, %95, %cst_65 {dimension_numbers = #tpu.dot_dimension_numbers<[1], [0], [0], [1], [0, 0, 1, 1], [], []>} : vector<8x128xf32>, vector<128x128xf32>, vector<8x128xf32> -> vector<8x128xf32>
    %97 = arith.addf %94, %96 : vector<8x128xf32>
    %98 = math.tanh %97 : vector<8x128xf32>
    %99 = tpu.concatenate %98, %93 in 1 : vector<8x128xf32>, vector<8x128xf32> -> vector<8x256xf32>
    %c0_66 = arith.constant 0 : index
    %c0_67 = arith.constant 0 : index
    %c0_68 = arith.constant 0 : index
    %100 = vector.load %arg5[%c0_66, %c0_67, %c0_68] : memref<1x256x128xf32, #tpu.memory_space<vmem>>, vector<1x256x128xf32>
    %101 = vector.shape_cast %100 : vector<1x256x128xf32> to vector<256x128xf32>
    %cst_69 = arith.constant dense<0.000000e+00> : vector<8x128xf32>
    %102 = tpu.matmul %99, %101, %cst_69 {dimension_numbers = #tpu.dot_dimension_numbers<[1], [0], [0], [1], [0, 0, 1, 1], [], []>} : vector<8x256xf32>, vector<256x128xf32>, vector<8x128xf32> -> vector<8x128xf32>
    %103 = arith.addf %102, %12 : vector<8x128xf32>
    %104 = math.tanh %103 : vector<8x128xf32>
    %105 = vector.extract_strided_slice %8 {offsets = [64, 0], sizes = [8, 128], strides = [1, 1]} : vector<128x128xf32> to vector<8x128xf32>
    %c0_70 = arith.constant 0 : index
    %c0_71 = arith.constant 0 : index
    %106 = vector.load %arg3[%c0_70, %c0_71] : memref<128x128xf32, #tpu.memory_space<vmem>>, vector<128x128xf32>
    %cst_72 = arith.constant dense<0.000000e+00> : vector<8x128xf32>
    %107 = tpu.matmul %98, %106, %cst_72 {dimension_numbers = #tpu.dot_dimension_numbers<[1], [0], [0], [1], [0, 0, 1, 1], [], []>} : vector<8x128xf32>, vector<128x128xf32>, vector<8x128xf32> -> vector<8x128xf32>
    %108 = arith.addf %105, %107 : vector<8x128xf32>
    %109 = math.tanh %108 : vector<8x128xf32>
    %110 = tpu.concatenate %109, %104 in 1 : vector<8x128xf32>, vector<8x128xf32> -> vector<8x256xf32>
    %c0_73 = arith.constant 0 : index
    %c0_74 = arith.constant 0 : index
    %c0_75 = arith.constant 0 : index
    %111 = vector.load %arg5[%c0_73, %c0_74, %c0_75] : memref<1x256x128xf32, #tpu.memory_space<vmem>>, vector<1x256x128xf32>
    %112 = vector.shape_cast %111 : vector<1x256x128xf32> to vector<256x128xf32>
    %cst_76 = arith.constant dense<0.000000e+00> : vector<8x128xf32>
    %113 = tpu.matmul %110, %112, %cst_76 {dimension_numbers = #tpu.dot_dimension_numbers<[1], [0], [0], [1], [0, 0, 1, 1], [], []>} : vector<8x256xf32>, vector<256x128xf32>, vector<8x128xf32> -> vector<8x128xf32>
    %114 = arith.addf %113, %12 : vector<8x128xf32>
    %115 = math.tanh %114 : vector<8x128xf32>
    %116 = vector.extract_strided_slice %8 {offsets = [72, 0], sizes = [8, 128], strides = [1, 1]} : vector<128x128xf32> to vector<8x128xf32>
    %c0_77 = arith.constant 0 : index
    %c0_78 = arith.constant 0 : index
    %117 = vector.load %arg3[%c0_77, %c0_78] : memref<128x128xf32, #tpu.memory_space<vmem>>, vector<128x128xf32>
    %cst_79 = arith.constant dense<0.000000e+00> : vector<8x128xf32>
    %118 = tpu.matmul %109, %117, %cst_79 {dimension_numbers = #tpu.dot_dimension_numbers<[1], [0], [0], [1], [0, 0, 1, 1], [], []>} : vector<8x128xf32>, vector<128x128xf32>, vector<8x128xf32> -> vector<8x128xf32>
    %119 = arith.addf %116, %118 : vector<8x128xf32>
    %120 = math.tanh %119 : vector<8x128xf32>
    %121 = tpu.concatenate %120, %115 in 1 : vector<8x128xf32>, vector<8x128xf32> -> vector<8x256xf32>
    %c0_80 = arith.constant 0 : index
    %c0_81 = arith.constant 0 : index
    %c0_82 = arith.constant 0 : index
    %122 = vector.load %arg5[%c0_80, %c0_81, %c0_82] : memref<1x256x128xf32, #tpu.memory_space<vmem>>, vector<1x256x128xf32>
    %123 = vector.shape_cast %122 : vector<1x256x128xf32> to vector<256x128xf32>
    %cst_83 = arith.constant dense<0.000000e+00> : vector<8x128xf32>
    %124 = tpu.matmul %121, %123, %cst_83 {dimension_numbers = #tpu.dot_dimension_numbers<[1], [0], [0], [1], [0, 0, 1, 1], [], []>} : vector<8x256xf32>, vector<256x128xf32>, vector<8x128xf32> -> vector<8x128xf32>
    %125 = arith.addf %124, %12 : vector<8x128xf32>
    %126 = math.tanh %125 : vector<8x128xf32>
    %127 = vector.extract_strided_slice %8 {offsets = [80, 0], sizes = [8, 128], strides = [1, 1]} : vector<128x128xf32> to vector<8x128xf32>
    %c0_84 = arith.constant 0 : index
    %c0_85 = arith.constant 0 : index
    %128 = vector.load %arg3[%c0_84, %c0_85] : memref<128x128xf32, #tpu.memory_space<vmem>>, vector<128x128xf32>
    %cst_86 = arith.constant dense<0.000000e+00> : vector<8x128xf32>
    %129 = tpu.matmul %120, %128, %cst_86 {dimension_numbers = #tpu.dot_dimension_numbers<[1], [0], [0], [1], [0, 0, 1, 1], [], []>} : vector<8x128xf32>, vector<128x128xf32>, vector<8x128xf32> -> vector<8x128xf32>
    %130 = arith.addf %127, %129 : vector<8x128xf32>
    %131 = math.tanh %130 : vector<8x128xf32>
    %132 = tpu.concatenate %131, %126 in 1 : vector<8x128xf32>, vector<8x128xf32> -> vector<8x256xf32>
    %c0_87 = arith.constant 0 : index
    %c0_88 = arith.constant 0 : index
    %c0_89 = arith.constant 0 : index
    %133 = vector.load %arg5[%c0_87, %c0_88, %c0_89] : memref<1x256x128xf32, #tpu.memory_space<vmem>>, vector<1x256x128xf32>
    %134 = vector.shape_cast %133 : vector<1x256x128xf32> to vector<256x128xf32>
    %cst_90 = arith.constant dense<0.000000e+00> : vector<8x128xf32>
    %135 = tpu.matmul %132, %134, %cst_90 {dimension_numbers = #tpu.dot_dimension_numbers<[1], [0], [0], [1], [0, 0, 1, 1], [], []>} : vector<8x256xf32>, vector<256x128xf32>, vector<8x128xf32> -> vector<8x128xf32>
    %136 = arith.addf %135, %12 : vector<8x128xf32>
    %137 = math.tanh %136 : vector<8x128xf32>
    %138 = vector.extract_strided_slice %8 {offsets = [88, 0], sizes = [8, 128], strides = [1, 1]} : vector<128x128xf32> to vector<8x128xf32>
    %c0_91 = arith.constant 0 : index
    %c0_92 = arith.constant 0 : index
    %139 = vector.load %arg3[%c0_91, %c0_92] : memref<128x128xf32, #tpu.memory_space<vmem>>, vector<128x128xf32>
    %cst_93 = arith.constant dense<0.000000e+00> : vector<8x128xf32>
    %140 = tpu.matmul %131, %139, %cst_93 {dimension_numbers = #tpu.dot_dimension_numbers<[1], [0], [0], [1], [0, 0, 1, 1], [], []>} : vector<8x128xf32>, vector<128x128xf32>, vector<8x128xf32> -> vector<8x128xf32>
    %141 = arith.addf %138, %140 : vector<8x128xf32>
    %142 = math.tanh %141 : vector<8x128xf32>
    %143 = tpu.concatenate %142, %137 in 1 : vector<8x128xf32>, vector<8x128xf32> -> vector<8x256xf32>
    %c0_94 = arith.constant 0 : index
    %c0_95 = arith.constant 0 : index
    %c0_96 = arith.constant 0 : index
    %144 = vector.load %arg5[%c0_94, %c0_95, %c0_96] : memref<1x256x128xf32, #tpu.memory_space<vmem>>, vector<1x256x128xf32>
    %145 = vector.shape_cast %144 : vector<1x256x128xf32> to vector<256x128xf32>
    %cst_97 = arith.constant dense<0.000000e+00> : vector<8x128xf32>
    %146 = tpu.matmul %143, %145, %cst_97 {dimension_numbers = #tpu.dot_dimension_numbers<[1], [0], [0], [1], [0, 0, 1, 1], [], []>} : vector<8x256xf32>, vector<256x128xf32>, vector<8x128xf32> -> vector<8x128xf32>
    %147 = arith.addf %146, %12 : vector<8x128xf32>
    %148 = math.tanh %147 : vector<8x128xf32>
    %149 = vector.extract_strided_slice %8 {offsets = [96, 0], sizes = [8, 128], strides = [1, 1]} : vector<128x128xf32> to vector<8x128xf32>
    %c0_98 = arith.constant 0 : index
    %c0_99 = arith.constant 0 : index
    %150 = vector.load %arg3[%c0_98, %c0_99] : memref<128x128xf32, #tpu.memory_space<vmem>>, vector<128x128xf32>
    %cst_100 = arith.constant dense<0.000000e+00> : vector<8x128xf32>
    %151 = tpu.matmul %142, %150, %cst_100 {dimension_numbers = #tpu.dot_dimension_numbers<[1], [0], [0], [1], [0, 0, 1, 1], [], []>} : vector<8x128xf32>, vector<128x128xf32>, vector<8x128xf32> -> vector<8x128xf32>
    %152 = arith.addf %149, %151 : vector<8x128xf32>
    %153 = math.tanh %152 : vector<8x128xf32>
    %154 = tpu.concatenate %153, %148 in 1 : vector<8x128xf32>, vector<8x128xf32> -> vector<8x256xf32>
    %c0_101 = arith.constant 0 : index
    %c0_102 = arith.constant 0 : index
    %c0_103 = arith.constant 0 : index
    %155 = vector.load %arg5[%c0_101, %c0_102, %c0_103] : memref<1x256x128xf32, #tpu.memory_space<vmem>>, vector<1x256x128xf32>
    %156 = vector.shape_cast %155 : vector<1x256x128xf32> to vector<256x128xf32>
    %cst_104 = arith.constant dense<0.000000e+00> : vector<8x128xf32>
    %157 = tpu.matmul %154, %156, %cst_104 {dimension_numbers = #tpu.dot_dimension_numbers<[1], [0], [0], [1], [0, 0, 1, 1], [], []>} : vector<8x256xf32>, vector<256x128xf32>, vector<8x128xf32> -> vector<8x128xf32>
    %158 = arith.addf %157, %12 : vector<8x128xf32>
    %159 = math.tanh %158 : vector<8x128xf32>
    %160 = vector.extract_strided_slice %8 {offsets = [104, 0], sizes = [8, 128], strides = [1, 1]} : vector<128x128xf32> to vector<8x128xf32>
    %c0_105 = arith.constant 0 : index
    %c0_106 = arith.constant 0 : index
    %161 = vector.load %arg3[%c0_105, %c0_106] : memref<128x128xf32, #tpu.memory_space<vmem>>, vector<128x128xf32>
    %cst_107 = arith.constant dense<0.000000e+00> : vector<8x128xf32>
    %162 = tpu.matmul %153, %161, %cst_107 {dimension_numbers = #tpu.dot_dimension_numbers<[1], [0], [0], [1], [0, 0, 1, 1], [], []>} : vector<8x128xf32>, vector<128x128xf32>, vector<8x128xf32> -> vector<8x128xf32>
    %163 = arith.addf %160, %162 : vector<8x128xf32>
    %164 = math.tanh %163 : vector<8x128xf32>
    %165 = tpu.concatenate %164, %159 in 1 : vector<8x128xf32>, vector<8x128xf32> -> vector<8x256xf32>
    %c0_108 = arith.constant 0 : index
    %c0_109 = arith.constant 0 : index
    %c0_110 = arith.constant 0 : index
    %166 = vector.load %arg5[%c0_108, %c0_109, %c0_110] : memref<1x256x128xf32, #tpu.memory_space<vmem>>, vector<1x256x128xf32>
    %167 = vector.shape_cast %166 : vector<1x256x128xf32> to vector<256x128xf32>
    %cst_111 = arith.constant dense<0.000000e+00> : vector<8x128xf32>
    %168 = tpu.matmul %165, %167, %cst_111 {dimension_numbers = #tpu.dot_dimension_numbers<[1], [0], [0], [1], [0, 0, 1, 1], [], []>} : vector<8x256xf32>, vector<256x128xf32>, vector<8x128xf32> -> vector<8x128xf32>
    %169 = arith.addf %168, %12 : vector<8x128xf32>
    %170 = math.tanh %169 : vector<8x128xf32>
    %171 = vector.extract_strided_slice %8 {offsets = [112, 0], sizes = [8, 128], strides = [1, 1]} : vector<128x128xf32> to vector<8x128xf32>
    %c0_112 = arith.constant 0 : index
    %c0_113 = arith.constant 0 : index
    %172 = vector.load %arg3[%c0_112, %c0_113] : memref<128x128xf32, #tpu.memory_space<vmem>>, vector<128x128xf32>
    %cst_114 = arith.constant dense<0.000000e+00> : vector<8x128xf32>
    %173 = tpu.matmul %164, %172, %cst_114 {dimension_numbers = #tpu.dot_dimension_numbers<[1], [0], [0], [1], [0, 0, 1, 1], [], []>} : vector<8x128xf32>, vector<128x128xf32>, vector<8x128xf32> -> vector<8x128xf32>
    %174 = arith.addf %171, %173 : vector<8x128xf32>
    %175 = math.tanh %174 : vector<8x128xf32>
    %176 = tpu.concatenate %175, %170 in 1 : vector<8x128xf32>, vector<8x128xf32> -> vector<8x256xf32>
    %c0_115 = arith.constant 0 : index
    %c0_116 = arith.constant 0 : index
    %c0_117 = arith.constant 0 : index
    %177 = vector.load %arg5[%c0_115, %c0_116, %c0_117] : memref<1x256x128xf32, #tpu.memory_space<vmem>>, vector<1x256x128xf32>
    %178 = vector.shape_cast %177 : vector<1x256x128xf32> to vector<256x128xf32>
    %cst_118 = arith.constant dense<0.000000e+00> : vector<8x128xf32>
    %179 = tpu.matmul %176, %178, %cst_118 {dimension_numbers = #tpu.dot_dimension_numbers<[1], [0], [0], [1], [0, 0, 1, 1], [], []>} : vector<8x256xf32>, vector<256x128xf32>, vector<8x128xf32> -> vector<8x128xf32>
    %180 = arith.addf %179, %12 : vector<8x128xf32>
    %181 = math.tanh %180 : vector<8x128xf32>
    %182 = vector.extract_strided_slice %8 {offsets = [120, 0], sizes = [8, 128], strides = [1, 1]} : vector<128x128xf32> to vector<8x128xf32>
    %c0_119 = arith.constant 0 : index
    %c0_120 = arith.constant 0 : index
    %183 = vector.load %arg3[%c0_119, %c0_120] : memref<128x128xf32, #tpu.memory_space<vmem>>, vector<128x128xf32>
    %cst_121 = arith.constant dense<0.000000e+00> : vector<8x128xf32>
    %184 = tpu.matmul %175, %183, %cst_121 {dimension_numbers = #tpu.dot_dimension_numbers<[1], [0], [0], [1], [0, 0, 1, 1], [], []>} : vector<8x128xf32>, vector<128x128xf32>, vector<8x128xf32> -> vector<8x128xf32>
    %185 = arith.addf %182, %184 : vector<8x128xf32>
    %186 = math.tanh %185 : vector<8x128xf32>
    %187 = tpu.concatenate %186, %181 in 1 : vector<8x128xf32>, vector<8x128xf32> -> vector<8x256xf32>
    %c0_122 = arith.constant 0 : index
    %c0_123 = arith.constant 0 : index
    %c0_124 = arith.constant 0 : index
    %188 = vector.load %arg5[%c0_122, %c0_123, %c0_124] : memref<1x256x128xf32, #tpu.memory_space<vmem>>, vector<1x256x128xf32>
    %189 = vector.shape_cast %188 : vector<1x256x128xf32> to vector<256x128xf32>
    %cst_125 = arith.constant dense<0.000000e+00> : vector<8x128xf32>
    %190 = tpu.matmul %187, %189, %cst_125 {dimension_numbers = #tpu.dot_dimension_numbers<[1], [0], [0], [1], [0, 0, 1, 1], [], []>} : vector<8x256xf32>, vector<256x128xf32>, vector<8x128xf32> -> vector<8x128xf32>
    %191 = arith.addf %190, %12 : vector<8x128xf32>
    %192 = math.tanh %191 : vector<8x128xf32>
    %c0_126 = arith.constant 0 : index
    %c0_127 = arith.constant 0 : index
    %c0_128 = arith.constant 0 : index
    %193 = vector.load %arg10[%c0_126, %c0_127, %c0_128] : memref<2x8x128xf32, #tpu.memory_space<vmem>>, vector<1x8x128xf32>
    %194 = vector.shape_cast %193 : vector<1x8x128xf32> to vector<8x128xf32>
    %195 = vector.shape_cast %186 : vector<8x128xf32> to vector<1x8x128xf32>
    tpu.vector_store %arg10[%c0_126, %c0_127, %c0_128], %195 {strides = array<i32>} : memref<2x8x128xf32, #tpu.memory_space<vmem>>, vector<1x8x128xf32>,
    %c1_129 = arith.constant 1 : index
    %c0_130 = arith.constant 0 : index
    %c0_131 = arith.constant 0 : index
    %196 = vector.load %arg10[%c1_129, %c0_130, %c0_131] : memref<2x8x128xf32, #tpu.memory_space<vmem>>, vector<1x8x128xf32>
    %197 = vector.shape_cast %196 : vector<1x8x128xf32> to vector<8x128xf32>
    %198 = vector.shape_cast %192 : vector<8x128xf32> to vector<1x8x128xf32>
    tpu.vector_store %arg10[%c1_129, %c0_130, %c0_131], %198 {strides = array<i32>} : memref<2x8x128xf32, #tpu.memory_space<vmem>>, vector<1x8x128xf32>,
    %199 = tpu.concatenate %27, %38, %49, %60, %71, %82, %93, %104, %115, %126, %137, %148, %159, %170, %181, %192 in 0 : vector<8x128xf32>, vector<8x128xf32>, vector<8x128xf32>, vector<8x128xf32>, vector<8x128xf32>, vector<8x128xf32>, vector<8x128xf32>, vector<8x128xf32>, vector<8x128xf32>, vector<8x128xf32>, vector<8x128xf32>, vector<8x128xf32>, vector<8x128xf32>, vector<8x128xf32>, vector<8x128xf32>, vector<8x128xf32> -> vector<128x128xf32>
    %c0_132 = arith.constant 0 : index
    %c0_133 = arith.constant 0 : index
    %200 = vector.load %arg7[%c0_132, %c0_133] : memref<128x128xf32, #tpu.memory_space<vmem>>, vector<128x128xf32>
    %cst_134 = arith.constant dense<0.000000e+00> : vector<128x128xf32>
    %201 = tpu.matmul %199, %200, %cst_134 {dimension_numbers = #tpu.dot_dimension_numbers<[1], [0], [0], [1], [0, 0, 1, 1], [], []>} : vector<128x128xf32>, vector<128x128xf32>, vector<128x128xf32> -> vector<128x128xf32>
    %c0_135 = arith.constant 0 : index
    %c0_136 = arith.constant 0 : index
    %202 = vector.load %arg8[%c0_135, %c0_136] : memref<1x128xf32, #tpu.memory_space<vmem>>, vector<1x128xf32>
    %203 = vector.broadcast %202 : vector<1x128xf32> to vector<128x128xf32>
    %204 = arith.addf %201, %203 : vector<128x128xf32>
    %c0_137 = arith.constant 0 : index
    %c0_138 = arith.constant 0 : index
    %205 = vector.load %arg9[%c0_137, %c0_138] : memref<128x128xf32, #tpu.memory_space<vmem>>, vector<128x128xf32>
    tpu.vector_store %arg9[%c0_137, %c0_138], %204 {strides = array<i32>} : memref<128x128xf32, #tpu.memory_space<vmem>>, vector<128x128xf32>,
    return
  }
  func.func @transform_0(%arg0: i32) -> (i32, i32) {
    %c0_i32 = arith.constant 0 : i32
    %c0_i32_0 = arith.constant 0 : i32
    return %arg0, %c0_i32 : i32, i32
  }
  func.func @transform_1(%arg0: i32) -> (i32, i32) {
    %c0_i32 = arith.constant 0 : i32
    %c0_i32_0 = arith.constant 0 : i32
    %c0_i32_1 = arith.constant 0 : i32
    return %c0_i32, %c0_i32_0 : i32, i32
  }
  func.func @transform_2(%arg0: i32) -> (i32, i32) {
    %c0_i32 = arith.constant 0 : i32
    %c0_i32_0 = arith.constant 0 : i32
    %c0_i32_1 = arith.constant 0 : i32
    return %c0_i32, %c0_i32_0 : i32, i32
  }
  func.func @transform_3(%arg0: i32) -> (i32, i32) {
    %c0_i32 = arith.constant 0 : i32
    %c0_i32_0 = arith.constant 0 : i32
    %c0_i32_1 = arith.constant 0 : i32
    return %c0_i32, %c0_i32_0 : i32, i32
  }
  func.func @transform_4(%arg0: i32) -> (i32, i32, i32) {
    %c0_i32 = arith.constant 0 : i32
    %c0_i32_0 = arith.constant 0 : i32
    %c0_i32_1 = arith.constant 0 : i32
    %c0_i32_2 = arith.constant 0 : i32
    return %c0_i32, %c0_i32_0, %c0_i32_1 : i32, i32, i32
  }
  func.func @transform_5(%arg0: i32) -> (i32, i32, i32) {
    %c0_i32 = arith.constant 0 : i32
    %c0_i32_0 = arith.constant 0 : i32
    %c0_i32_1 = arith.constant 0 : i32
    %c0_i32_2 = arith.constant 0 : i32
    return %c0_i32, %c0_i32_0, %c0_i32_1 : i32, i32, i32
  }
  func.func @transform_6(%arg0: i32) -> (i32, i32) {
    %c0_i32 = arith.constant 0 : i32
    %c0_i32_0 = arith.constant 0 : i32
    %c0_i32_1 = arith.constant 0 : i32
    return %c0_i32, %c0_i32_0 : i32, i32
  }
  func.func @transform_7(%arg0: i32) -> (i32, i32) {
    %c0_i32 = arith.constant 0 : i32
    %c0_i32_0 = arith.constant 0 : i32
    %c0_i32_1 = arith.constant 0 : i32
    return %c0_i32, %c0_i32_0 : i32, i32
  }
  func.func @transform_8(%arg0: i32) -> (i32, i32) {
    %c0_i32 = arith.constant 0 : i32
    %c0_i32_0 = arith.constant 0 : i32
    return %arg0, %c0_i32 : i32, i32
  }
}

</mosaic_0001>

<llo_original>
// kernel: rnn_net_forward.1
$region0: #{rnn_net_forward.1}
  #allocation0 [shape = 'u32[]', space=smem, size = 0x4, offset = 0x4, fixed_abs, tag = 'smem constant byte address 0x4 - core index']
  #allocation1 [shape = 'u32[144,128]{1,0:T(1,128)}', space=vmem, size = 0x12000, scoped, tag = 'internal scratch']
  #allocation2 [shape = 'f32[2,8,128]{2,1,0:T(8,128)}', space=vmem, size = 0x2000, scoped, tag = 'scratch operand']
  %s0 = inlined_call_operand.vmem [shape: f32[512,16], index: 0, kind: input, shape index: {}]
  %s1 = inlined_call_operand.vmem [shape: f32[16,128], index: 1, kind: input, shape index: {}]
  %s2 = inlined_call_operand.vmem [shape: f32[128,128], index: 2, kind: input, shape index: {}]
  %s3 = inlined_call_operand.vmem [shape: f32[1,128], index: 3, kind: input, shape index: {}]
  %s4 = inlined_call_operand.vmem [shape: f32[1,256,128], index: 4, kind: input, shape index: {}]
  %s5 = inlined_call_operand.vmem [shape: f32[1,1,128], index: 5, kind: input, shape index: {}]
  %s6 = inlined_call_operand.vmem [shape: f32[128,128], index: 6, kind: input, shape index: {}]
  %s7 = inlined_call_operand.vmem [shape: f32[1,128], index: 7, kind: input, shape index: {}]
  %s8 = inlined_call_operand.vmem [shape: f32[512,128], index: 8, kind: output, shape index: {}]
  %s9 = sld [smem:[#allocation0]]
  $region69: #{rnn_net_forward.1} parent=0
    _
  %s11 = ssub.s32 1, %s9
  %s12 = scalar_select 0, %s11, %s9
  loop: start=0, step=1, limit=6
  $region2: #{rnn_net_forward.1} parent=0 // loop_pre_header
    _
  $region3: #{rnn_net_forward.1} parent=0 // loop_header
    %s14 = sphi 0, %s18
    %p15 = scmp.ge.s32.totalorder %s14, 6
    %s24 = sphi 0, %s26
    %s27 = sphi 0, %s24
    %s28 = sphi 0, %s27
    %s44 = sphi 0, %s28
    %s48 = sphi 0, %s48
    %s50 = sphi 0, %s48
    %s51 = sphi 0, %s50
    %s65 = sphi 0, %s51
    %s69 = sphi 0, %s69
    %s71 = sphi 0, %s69
    %s72 = sphi 0, %s71
    %s86 = sphi 0, %s72
    %s90 = sphi 0, %s90
    %s92 = sphi 0, %s90
    %s93 = sphi 0, %s92
    %s107 = sphi 0, %s93
    %s111 = sphi 0, %s111
    %s113 = sphi 0, %s111
    %s114 = sphi 0, %s113
    %s128 = sphi 0, %s114
    %s132 = sphi 0, %s132
    %s134 = sphi 0, %s132
    %s135 = sphi 0, %s134
    %s149 = sphi 0, %s135
    %s153 = sphi 0, %s153
    %s155 = sphi 0, %s153
    %s156 = sphi 0, %s155
    %s170 = sphi 0, %s156
    %s174 = sphi 0, %s174
    %s176 = sphi 0, %s174
    %s177 = sphi 0, %s176
    %s191 = sphi 0, %s177
    %s197 = sphi 0, %s199
    %s200 = sphi 0, %s197
    %s201 = sphi 0, %s200
    %s217 = sphi 0, %s201
  $region4: #{rnn_net_forward.1} parent=0 // loop_header_branch
    %17 = sbr.rel (%p15) target = $region8
  $region5: #{rnn_net_forward.1} parent=0 // loop_body
    %s19 = ssub.s32 %s14, 1
    %s20 = ssub.s32 %s14, 2
    %s21 = sadd.s32 %s14, 1
    %s22 = ssub.s32 %s14, %s21
    %p23 = scmp.eq.s32.totalorder %s22, 0
    %s25 = sadd.s32 %s24, 1
    %s26 = scalar_select %p23, %s24, %s25
    %p29 = pneg %p23
    %p30 = scmp.eq.s32.totalorder %s14, 3
    %p31 = por %p29, %p30
    %p32 = scmp.ne.s32.totalorder %s24, %s27
    %p33 = scmp.eq.s32.totalorder %s14, 0
    %p34 = por %p32, %p33
    %p35 = scmp.ne.s32.totalorder %s24, %s27
    %p36 = scmp.eq.s32.totalorder %s19, 3
    %p37 = por %p35, %p36
    %p38 = scmp.ne.s32.totalorder %s27, %s28
    %p39 = scmp.eq.s32.totalorder %s19, 0
    %p40 = por %p38, %p39
    %p41 = scmp.ne.s32.totalorder %s27, %s28
    %p42 = scmp.eq.s32.totalorder %s20, 3
    %p43 = por %p41, %p42
    %p45 = scmp.ne.s32.totalorder %s28, %s44
    %p46 = scmp.eq.s32.totalorder %s20, 0
    %p47 = por %p45, %p46
    %s49 = sadd.s32 %s48, 1
    %p52 = scmp.eq.s32.totalorder %s14, 3
    %p53 = scmp.ne.s32.totalorder %s48, %s50
    %p54 = scmp.eq.s32.totalorder %s14, 0
    %p55 = por %p53, %p54
    %p56 = scmp.ne.s32.totalorder %s48, %s50
    %p57 = scmp.eq.s32.totalorder %s19, 3
    %p58 = por %p56, %p57
    %p59 = scmp.ne.s32.totalorder %s50, %s51
    %p60 = scmp.eq.s32.totalorder %s19, 0
    %p61 = por %p59, %p60
    %p62 = scmp.ne.s32.totalorder %s50, %s51
    %p63 = scmp.eq.s32.totalorder %s20, 3
    %p64 = por %p62, %p63
    %p66 = scmp.ne.s32.totalorder %s51, %s65
    %p67 = scmp.eq.s32.totalorder %s20, 0
    %p68 = por %p66, %p67
    %s70 = sadd.s32 %s69, 1
    %p73 = scmp.eq.s32.totalorder %s14, 3
    %p74 = scmp.ne.s32.totalorder %s69, %s71
    %p75 = scmp.eq.s32.totalorder %s14, 0
    %p76 = por %p74, %p75
    %p77 = scmp.ne.s32.totalorder %s69, %s71
    %p78 = scmp.eq.s32.totalorder %s19, 3
    %p79 = por %p77, %p78
    %p80 = scmp.ne.s32.totalorder %s71, %s72
    %p81 = scmp.eq.s32.totalorder %s19, 0
    %p82 = por %p80, %p81
    %p83 = scmp.ne.s32.totalorder %s71, %s72
    %p84 = scmp.eq.s32.totalorder %s20, 3
    %p85 = por %p83, %p84
    %p87 = scmp.ne.s32.totalorder %s72, %s86
    %p88 = scmp.eq.s32.totalorder %s20, 0
    %p89 = por %p87, %p88
    %s91 = sadd.s32 %s90, 1
    %p94 = scmp.eq.s32.totalorder %s14, 3
    %p95 = scmp.ne.s32.totalorder %s90, %s92
    %p96 = scmp.eq.s32.totalorder %s14, 0
    %p97 = por %p95, %p96
    %p98 = scmp.ne.s32.totalorder %s90, %s92
    %p99 = scmp.eq.s32.totalorder %s19, 3
    %p100 = por %p98, %p99
    %p101 = scmp.ne.s32.totalorder %s92, %s93
    %p102 = scmp.eq.s32.totalorder %s19, 0
    %p103 = por %p101, %p102
    %p104 = scmp.ne.s32.totalorder %s92, %s93
    %p105 = scmp.eq.s32.totalorder %s20, 3
    %p106 = por %p104, %p105
    %p108 = scmp.ne.s32.totalorder %s93, %s107
    %p109 = scmp.eq.s32.totalorder %s20, 0
    %p110 = por %p108, %p109
    %s112 = sadd.s32 %s111, 1
    %p115 = scmp.eq.s32.totalorder %s14, 3
    %p116 = scmp.ne.s32.totalorder %s111, %s113
    %p117 = scmp.eq.s32.totalorder %s14, 0
    %p118 = por %p116, %p117
    %p119 = scmp.ne.s32.totalorder %s111, %s113
    %p120 = scmp.eq.s32.totalorder %s19, 3
    %p121 = por %p119, %p120
    %p122 = scmp.ne.s32.totalorder %s113, %s114
    %p123 = scmp.eq.s32.totalorder %s19, 0
    %p124 = por %p122, %p123
    %p125 = scmp.ne.s32.totalorder %s113, %s114
    %p126 = scmp.eq.s32.totalorder %s20, 3
    %p127 = por %p125, %p126
    %p129 = scmp.ne.s32.totalorder %s114, %s128
    %p130 = scmp.eq.s32.totalorder %s20, 0
    %p131 = por %p129, %p130
    %s133 = sadd.s32 %s132, 1
    %p136 = scmp.eq.s32.totalorder %s14, 3
    %p137 = scmp.ne.s32.totalorder %s132, %s134
    %p138 = scmp.eq.s32.totalorder %s14, 0
    %p139 = por %p137, %p138
    %p140 = scmp.ne.s32.totalorder %s132, %s134
    %p141 = scmp.eq.s32.totalorder %s19, 3
    %p142 = por %p140, %p141
    %p143 = scmp.ne.s32.totalorder %s134, %s135
    %p144 = scmp.eq.s32.totalorder %s19, 0
    %p145 = por %p143, %p144
    %p146 = scmp.ne.s32.totalorder %s134, %s135
    %p147 = scmp.eq.s32.totalorder %s20, 3
    %p148 = por %p146, %p147
    %p150 = scmp.ne.s32.totalorder %s135, %s149
    %p151 = scmp.eq.s32.totalorder %s20, 0
    %p152 = por %p150, %p151
    %s154 = sadd.s32 %s153, 1
    %p157 = scmp.eq.s32.totalorder %s14, 3
    %p158 = scmp.ne.s32.totalorder %s153, %s155
    %p159 = scmp.eq.s32.totalorder %s14, 0
    %p160 = por %p158, %p159
    %p161 = scmp.ne.s32.totalorder %s153, %s155
    %p162 = scmp.eq.s32.totalorder %s19, 3
    %p163 = por %p161, %p162
    %p164 = scmp.ne.s32.totalorder %s155, %s156
    %p165 = scmp.eq.s32.totalorder %s19, 0
    %p166 = por %p164, %p165
    %p167 = scmp.ne.s32.totalorder %s155, %s156
    %p168 = scmp.eq.s32.totalorder %s20, 3
    %p169 = por %p167, %p168
    %p171 = scmp.ne.s32.totalorder %s156, %s170
    %p172 = scmp.eq.s32.totalorder %s20, 0
    %p173 = por %p171, %p172
    %s175 = sadd.s32 %s174, 1
    %p178 = scmp.eq.s32.totalorder %s14, 3
    %p179 = scmp.ne.s32.totalorder %s174, %s176
    %p180 = scmp.eq.s32.totalorder %s14, 0
    %p181 = por %p179, %p180
    %p182 = scmp.ne.s32.totalorder %s174, %s176
    %p183 = scmp.eq.s32.totalorder %s19, 3
    %p184 = por %p182, %p183
    %p185 = scmp.ne.s32.totalorder %s176, %s177
    %p186 = scmp.eq.s32.totalorder %s19, 0
    %p187 = por %p185, %p186
    %p188 = scmp.ne.s32.totalorder %s176, %s177
    %p189 = scmp.eq.s32.totalorder %s20, 3
    %p190 = por %p188, %p189
    %p192 = scmp.ne.s32.totalorder %s177, %s191
    %p193 = scmp.eq.s32.totalorder %s20, 0
    %p194 = por %p192, %p193
    %s195 = ssub.s32 %s14, %s21
    %p196 = scmp.eq.s32.totalorder %s195, 0
    %s198 = sadd.s32 %s197, 1
    %s199 = scalar_select %p196, %s197, %s198
    %p202 = pneg %p196
    %p203 = scmp.eq.s32.totalorder %s14, 3
    %p204 = por %p202, %p203
    %p205 = scmp.ne.s32.totalorder %s197, %s200
    %p206 = scmp.eq.s32.totalorder %s14, 0
    %p207 = por %p205, %p206
    %p208 = scmp.ne.s32.totalorder %s197, %s200
    %p209 = scmp.eq.s32.totalorder %s19, 3
    %p210 = por %p208, %p209
    %p211 = scmp.ne.s32.totalorder %s200, %s201
    %p212 = scmp.eq.s32.totalorder %s19, 0
    %p213 = por %p211, %p212
    %p214 = scmp.ne.s32.totalorder %s200, %s201
    %p215 = scmp.eq.s32.totalorder %s20, 3
    %p216 = por %p214, %p215
    %p218 = scmp.ne.s32.totalorder %s201, %s217
    %p219 = scmp.eq.s32.totalorder %s20, 0
    %p220 = por %p218, %p219
    %p221 = scmp.le.s32.totalorder 1, %s14
    %p222 = scmp.lt.s32.totalorder %s14, 5
    %p223 = pnand %p221, %p222
    %p224 = pneg %p223
    // Predicated region
    $region9: #{rnn_net_forward.1} parent=5 // pred_check
      _
    $region10: #{rnn_net_forward.1} parent=5 // pred_check_branch
      %226 = sbr.rel (%p223) target = $region12
    $region11: #{rnn_net_forward.1} parent=5 // pred_region
      %s227 = ssub.s32 %s14, 1
      // Predicated region
      $region13: #{rnn_net_forward.1} parent=11 // pred_check
        %p228 = pneg %p61
      $region14: #{rnn_net_forward.1} parent=11 // pred_check_branch
        %230 = sbr.rel (%p228) target = $region16
      $region15: #{rnn_net_forward.1} parent=11 // pred_region
        _
      $region16: #{rnn_net_forward.1} parent=11 // pred_fallthru
        _
      // Predicated region
      $region17: #{rnn_net_forward.1} parent=11 // pred_check
        %p231 = pneg %p82
      $region18: #{rnn_net_forward.1} parent=11 // pred_check_branch
        %233 = sbr.rel (%p231) target = $region20
      $region19: #{rnn_net_forward.1} parent=11 // pred_region
        _
      $region20: #{rnn_net_forward.1} parent=11 // pred_fallthru
        _
      // Predicated region
      $region21: #{rnn_net_forward.1} parent=11 // pred_check
        %p234 = pneg %p103
      $region22: #{rnn_net_forward.1} parent=11 // pred_check_branch
        %236 = sbr.rel (%p234) target = $region24
      $region23: #{rnn_net_forward.1} parent=11 // pred_region
        _
      $region24: #{rnn_net_forward.1} parent=11 // pred_fallthru
        _
      // Predicated region
      $region25: #{rnn_net_forward.1} parent=11 // pred_check
        %p237 = pneg %p124
      $region26: #{rnn_net_forward.1} parent=11 // pred_check_branch
        %239 = sbr.rel (%p237) target = $region28
      $region27: #{rnn_net_forward.1} parent=11 // pred_region
        _
      $region28: #{rnn_net_forward.1} parent=11 // pred_fallthru
        _
      // Predicated region
      $region29: #{rnn_net_forward.1} parent=11 // pred_check
        %p240 = pneg %p145
      $region30: #{rnn_net_forward.1} parent=11 // pred_check_branch
        %242 = sbr.rel (%p240) target = $region32
      $region31: #{rnn_net_forward.1} parent=11 // pred_region
        _
      $region32: #{rnn_net_forward.1} parent=11 // pred_fallthru
        _
      // Predicated region
      $region33: #{rnn_net_forward.1} parent=11 // pred_check
        %p243 = pneg %p166
      $region34: #{rnn_net_forward.1} parent=11 // pred_check_branch
        %245 = sbr.rel (%p243) target = $region36
      $region35: #{rnn_net_forward.1} parent=11 // pred_region
        _
      $region36: #{rnn_net_forward.1} parent=11 // pred_fallthru
        _
      // Predicated region
      $region37: #{rnn_net_forward.1} parent=11 // pred_check
        %p246 = pneg %p187
      $region38: #{rnn_net_forward.1} parent=11 // pred_check_branch
        %248 = sbr.rel (%p246) target = $region40
      $region39: #{rnn_net_forward.1} parent=11 // pred_region
        _
      $region40: #{rnn_net_forward.1} parent=11 // pred_fallthru
        _
    $region12: #{rnn_net_forward.1} parent=5 // pred_fallthru
      _
    %p249 = scmp.lt.s32.totalorder %s14, 4
    // Predicated region
    $region41: #{rnn_net_forward.1} parent=5 // pred_check
      %p250 = pneg %p249
    $region42: #{rnn_net_forward.1} parent=5 // pred_check_branch
      %252 = sbr.rel (%p250) target = $region44
    $region43: #{rnn_net_forward.1} parent=5 // pred_region
      // Predicated region
      $region45: #{rnn_net_forward.1} parent=43 // pred_check
        %p253 = pneg %p34
      $region46: #{rnn_net_forward.1} parent=43 // pred_check_branch
        %255 = sbr.rel (%p253) target = $region48
      $region47: #{rnn_net_forward.1} parent=43 // pred_region
        %s256 = smul.u32 16, %s14
        %p257 = scmp.lt.s32.totalorder %s256, 63
        %s258 = scalar_select %p257, %s256, 63
        %s259 = smul.addr %s258, 8
        %s260 = scalar_lea.vmem %s0, %s259
        %s261 = smul.u32 16, %s14
      $region48: #{rnn_net_forward.1} parent=43 // pred_fallthru
        _
    $region44: #{rnn_net_forward.1} parent=5 // pred_fallthru
      _
    %p262 = scmp.le.s32.totalorder 1, %s14
    %p263 = scmp.lt.s32.totalorder %s14, 5
    %p264 = pnand %p262, %p263
    %p265 = pneg %p264
    // Predicated region
    $region49: #{rnn_net_forward.1} parent=5 // pred_check
      _
    $region50: #{rnn_net_forward.1} parent=5 // pred_check_branch
      %267 = sbr.rel (%p264) target = $region52
    $region51: #{rnn_net_forward.1} parent=5 // pred_region
      %s268 = ssub.s32 %s14, 1
      %s269 = smul.u32 16, %s19
      %p270 = scmp.lt.s32.totalorder %s269, 63
      %s271 = scalar_select %p270, %s269, 63
      %s272 = smul.addr %s271, 8
      %s273 = scalar_lea.vmem %s0, %s272
      %p274 = pneg %p40
      %p275 = pneg %p37
      %p276 = pneg %p61
      %p277 = pneg %p58
      %p278 = pneg %p82
      %p279 = pneg %p79
      %p280 = pneg %p103
      %p281 = pneg %p100
      %p282 = pneg %p124
      %p283 = pneg %p121
      %p284 = pneg %p145
      %p285 = pneg %p142
      %p286 = pneg %p166
      %p287 = pneg %p163
      %p288 = pneg %p187
      %p289 = pneg %p184
      %p290 = pneg %p213
      %p291 = pneg %p210
      %s292 = smul.u32 16, %s19
      %p293 = scmp.lt.s32.totalorder %s292, 63
      %s294 = scalar_select %p293, %s292, 63
      %s295 = smul.addr %s294, 8
      %s296 = scalar_lea.vmem %s8, %s295
      %s297 = smul.u32 16, %s19
      %p298 = scmp.lt.s32.totalorder %s297, 63
      %s299 = scalar_select %p298, %s297, 63
      %s300 = smul.addr %s299, 8
      %s301 = scalar_lea.vmem %s0, %s300
      %s302 = smul.u32 16, %s19
      %s303 = smul.u32 16, %s19
      %p304 = scmp.lt.s32.totalorder %s303, 63
      %s305 = scalar_select %p304, %s303, 63
      %s306 = smul.addr %s305, 8
      %s307 = scalar_lea.vmem %s8, %s306
      %s308 = smul.u32 16, %s19
      %p309 = scmp.eq.s32.totalorder %s19, 0
      // Predicated region
      $region53: #{rnn_net_forward.1} parent=51 // pred_check
        %p310 = pneg %p309
      $region54: #{rnn_net_forward.1} parent=51 // pred_check_branch
        %312 = sbr.rel (%p310) target = $region56
      $region55: #{rnn_net_forward.1} parent=51 // pred_region
        %313 = vst [vmem:[#allocation2] sm:$0xff] 0.0
        %314 = vst [vmem:[#allocation2 + $0x8] sm:$0xff] 0.0
      $region56: #{rnn_net_forward.1} parent=51 // pred_fallthru
        _
      %v315 = vld [vmem:[%s301] sm:$0xff]
      %v316 = vld [vmem:[%s301 + $0x8] sm:$0xff]
      %v317 = vld [vmem:[%s301 + $0x10] sm:$0xff]
      %v318 = vld [vmem:[%s301 + $0x18] sm:$0xff]
      %v319 = vld [vmem:[%s301 + $0x20] sm:$0xff]
      %v320 = vld [vmem:[%s301 + $0x28] sm:$0xff]
      %v321 = vld [vmem:[%s301 + $0x30] sm:$0xff]
      %v322 = vld [vmem:[%s301 + $0x38] sm:$0xff]
      %v323 = vld [vmem:[%s301 + $0x40] sm:$0xff]
      %v324 = vld [vmem:[%s301 + $0x48] sm:$0xff]
      %v325 = vld [vmem:[%s301 + $0x50] sm:$0xff]
      %v326 = vld [vmem:[%s301 + $0x58] sm:$0xff]
      %v327 = vld [vmem:[%s301 + $0x60] sm:$0xff]
      %v328 = vld [vmem:[%s301 + $0x68] sm:$0xff]
      %v329 = vld [vmem:[%s301 + $0x70] sm:$0xff]
      %v330 = vld [vmem:[%s301 + $0x78] sm:$0xff]
      %v331 = vld [vmem:[%s1] sm:$0xff]
      %v332 = vld [vmem:[%s1 + $0x8] sm:$0xff]
      %v333 = vld [vmem:[%s3] sm:$0x1]
      %v335 = vlaneseq
      %v336 = vshrl.u32 %v335, 7
      %v337 = vsub.s32 0, %v336
      %v338 = vrot.slane %v333, %v337
      %vm340 = vcmask 130048
      %v342 = vsel %vm340, %v315, 0
      %v345 = vsel %vm340, %v316, 0
      %v348 = vsel %vm340, %v317, 0
      %v351 = vsel %vm340, %v318, 0
      %v354 = vsel %vm340, %v319, 0
      %v357 = vsel %vm340, %v320, 0
      %v360 = vsel %vm340, %v321, 0
      %v363 = vsel %vm340, %v322, 0
      %v366 = vsel %vm340, %v323, 0
      %v369 = vsel %vm340, %v324, 0
      %v372 = vsel %vm340, %v325, 0
      %v375 = vsel %vm340, %v326, 0
      %v378 = vsel %vm340, %v327, 0
      %v381 = vsel %vm340, %v328, 0
      %v384 = vsel %vm340, %v329, 0
      %v387 = vsel %vm340, %v330, 0
      %389 = vmatprep.subr.mxu0 0.0
      %390 = vmatpush1.msra.mxu0 %v331
      %391 = vmatprep.subr.mxu0 0.0
      %392 = vmatpush1.msra.mxu0 %v332
      %393 = vmatprep.subr.mxu0 0.0
      %394 = vmatpush1.msra.mxu0 0.0
      %395 = vmatprep.subr.mxu0 0.0
      %396 = vmatpush1.msra.mxu0 0.0
      %397 = vmatprep.subr.mxu0 0.0
      %398 = vmatpush1.msra.mxu0 0.0
      %399 = vmatprep.subr.mxu0 0.0
      %400 = vmatpush1.msra.mxu0 0.0
      %401 = vmatprep.subr.mxu0 0.0
      %402 = vmatpush1.msra.mxu0 0.0
      %403 = vmatprep.subr.mxu0 0.0
      %404 = vmatpush1.msra.mxu0 0.0
      %405 = vmatprep.subr.mxu0 0.0
      %406 = vmatpush1.msra.mxu0 0.0
      %407 = vmatprep.subr.mxu0 0.0
      %408 = vmatpush1.msra.mxu0 0.0
      %409 = vmatprep.subr.mxu0 0.0
      %410 = vmatpush1.msra.mxu0 0.0
      %411 = vmatprep.subr.mxu0 0.0
      %412 = vmatpush1.msra.mxu0 0.0
      %413 = vmatprep.subr.mxu0 0.0
      %414 = vmatpush1.msra.mxu0 0.0
      %415 = vmatprep.subr.mxu0 0.0
      %416 = vmatpush1.msra.mxu0 0.0
      %417 = vmatprep.subr.mxu0 0.0
      %418 = vmatpush1.msra.mxu0 0.0
      %419 = vmatprep.subr.mxu0 0.0
      %420 = vmatpush1.msra.mxu0 0.0
      %421 = vmatprep.subr.mxu0 0.0
      %422 = vmatpush1.msra.mxu0 0.0
      %423 = vmatprep.subr.mxu0 0.0
      %424 = vmatpush1.msra.mxu0 0.0
      %425 = vmatprep.subr.mxu0 0.0
      %426 = vmatpush1.msra.mxu0 0.0
      %427 = vmatprep.subr.mxu0 0.0
      %428 = vmatpush1.msra.mxu0 0.0
      %429 = vmatprep.subr.mxu0 0.0
      %430 = vmatpush1.msra.mxu0 0.0
      %431 = vmatprep.subr.mxu0 0.0
      %432 = vmatpush1.msra.mxu0 0.0
      %433 = vmatprep.subr.mxu0 0.0
      %434 = vmatpush1.msra.mxu0 0.0
      %435 = vmatprep.subr.mxu0 0.0
      %436 = vmatpush1.msra.mxu0 0.0
      %437 = vmatprep.subr.mxu0 0.0
      %438 = vmatpush1.msra.mxu0 0.0
      %439 = vmatprep.subr.mxu0 0.0
      %440 = vmatpush1.msra.mxu0 0.0
      %441 = vmatprep.subr.mxu0 0.0
      %442 = vmatpush1.msra.mxu0 0.0
      %443 = vmatprep.subr.mxu0 0.0
      %444 = vmatpush1.msra.mxu0 0.0
      %445 = vmatprep.subr.mxu0 0.0
      %446 = vmatpush1.msra.mxu0 0.0
      %447 = vmatprep.subr.mxu0 0.0
      %448 = vmatpush1.msra.mxu0 0.0
      %449 = vmatprep.subr.mxu0 0.0
      %450 = vmatpush1.msra.mxu0 0.0
      %451 = vmatprep.subr.mxu0 0.0
      %452 = vmatpush1.msra.mxu0 0.0
      %453 = vmatprep.mubr.f32.mxu0 0.0
      %454 = vmatmul.mubr.f32.gmra.mrb[0].mxu0 %v342
      %v455 = vpop.f32.mrb[0].mxu0
      %v456 = vadd.f32 %v338, %v455
      %v457 = vpop.f32.mrb[0].mxu0
      %458 = vmatprep.mubr.f32.mxu0 0.0
      %459 = vmatmul.mubr.f32.gmra.mrb[0].mxu0 %v345
      %v460 = vpop.f32.mrb[0].mxu0
      %v461 = vadd.f32 %v338, %v460
      %v462 = vpop.f32.mrb[0].mxu0
      %463 = vmatprep.mubr.f32.mxu0 0.0
      %464 = vmatmul.mubr.f32.gmra.mrb[0].mxu0 %v348
      %v465 = vpop.f32.mrb[0].mxu0
      %v466 = vadd.f32 %v338, %v465
      %v467 = vpop.f32.mrb[0].mxu0
      %468 = vmatprep.mubr.f32.mxu0 0.0
      %469 = vmatmul.mubr.f32.gmra.mrb[0].mxu0 %v351
      %v470 = vpop.f32.mrb[0].mxu0
      %v471 = vadd.f32 %v338, %v470
      %v472 = vpop.f32.mrb[0].mxu0
      %473 = vmatprep.mubr.f32.mxu0 0.0
      %474 = vmatmul.mubr.f32.gmra.mrb[0].mxu0 %v354
      %v475 = vpop.f32.mrb[0].mxu0
      %v476 = vadd.f32 %v338, %v475
      %v477 = vpop.f32.mrb[0].mxu0
      %478 = vmatprep.mubr.f32.mxu0 0.0
      %479 = vmatmul.mubr.f32.gmra.mrb[0].mxu0 %v357
      %v480 = vpop.f32.mrb[0].mxu0
      %v481 = vadd.f32 %v338, %v480
      %v482 = vpop.f32.mrb[0].mxu0
      %483 = vmatprep.mubr.f32.mxu0 0.0
      %484 = vmatmul.mubr.f32.gmra.mrb[0].mxu0 %v360
      %v485 = vpop.f32.mrb[0].mxu0
      %v486 = vadd.f32 %v338, %v485
      %v487 = vpop.f32.mrb[0].mxu0
      %488 = vmatprep.mubr.f32.mxu0 0.0
      %489 = vmatmul.mubr.f32.gmra.mrb[0].mxu0 %v363
      %v490 = vpop.f32.mrb[0].mxu0
      %v491 = vadd.f32 %v338, %v490
      %v492 = vpop.f32.mrb[0].mxu0
      %493 = vmatprep.mubr.f32.mxu0 0.0
      %494 = vmatmul.mubr.f32.gmra.mrb[0].mxu0 %v366
      %v495 = vpop.f32.mrb[0].mxu0
      %v496 = vadd.f32 %v338, %v495
      %v497 = vpop.f32.mrb[0].mxu0
      %498 = vmatprep.mubr.f32.mxu0 0.0
      %499 = vmatmul.mubr.f32.gmra.mrb[0].mxu0 %v369
      %v500 = vpop.f32.mrb[0].mxu0
      %v501 = vadd.f32 %v338, %v500
      %v502 = vpop.f32.mrb[0].mxu0
      %503 = vmatprep.mubr.f32.mxu0 0.0
      %504 = vmatmul.mubr.f32.gmra.mrb[0].mxu0 %v372
      %v505 = vpop.f32.mrb[0].mxu0
      %v506 = vadd.f32 %v338, %v505
      %v507 = vpop.f32.mrb[0].mxu0
      %508 = vmatprep.mubr.f32.mxu0 0.0
      %509 = vmatmul.mubr.f32.gmra.mrb[0].mxu0 %v375
      %v510 = vpop.f32.mrb[0].mxu0
      %v511 = vadd.f32 %v338, %v510
      %v512 = vpop.f32.mrb[0].mxu0
      %513 = vmatprep.mubr.f32.mxu0 0.0
      %514 = vmatmul.mubr.f32.gmra.mrb[0].mxu0 %v378
      %v515 = vpop.f32.mrb[0].mxu0
      %v516 = vadd.f32 %v338, %v515
      %v517 = vpop.f32.mrb[0].mxu0
      %518 = vmatprep.mubr.f32.mxu0 0.0
      %519 = vmatmul.mubr.f32.gmra.mrb[0].mxu0 %v381
      %v520 = vpop.f32.mrb[0].mxu0
      %v521 = vadd.f32 %v338, %v520
      %v522 = vpop.f32.mrb[0].mxu0
      %523 = vmatprep.mubr.f32.mxu0 0.0
      %524 = vmatmul.mubr.f32.gmra.mrb[0].mxu0 %v384
      %v525 = vpop.f32.mrb[0].mxu0
      %v526 = vadd.f32 %v338, %v525
      %v527 = vpop.f32.mrb[0].mxu0
      %528 = vmatprep.mubr.f32.mxu0 0.0
      %529 = vmatmul.mubr.f32.gmra.mrb[0].mxu0 %v387
      %v530 = vpop.f32.mrb[0].mxu0
      %v531 = vadd.f32 %v338, %v530
      %v532 = vpop.f32.mrb[0].mxu0
      %533 = vdwg.mxu0
      %v534 = vld [vmem:[%s5] sm:$0x1]
      %v536 = vlaneseq
      %v537 = vshrl.u32 %v536, 7
      %v538 = vsub.s32 0, %v537
      %v539 = vrot.slane %v534, %v538
      %v541 = vld [vmem:[#allocation2] sm:$0xff]
      %s542 = scalar_lea.vmem [#allocation2], 8
      %v543 = vld [vmem:[%s542] sm:$0xff]
      %v544 = vld [vmem:[%s2] sm:$0xff]
      %v545 = vld [vmem:[%s2 + $0x8] sm:$0xff]
      %v546 = vld [vmem:[%s2 + $0x10] sm:$0xff]
      %v547 = vld [vmem:[%s2 + $0x18] sm:$0xff]
      %v548 = vld [vmem:[%s2 + $0x20] sm:$0xff]
      %v549 = vld [vmem:[%s2 + $0x28] sm:$0xff]
      %v550 = vld [vmem:[%s2 + $0x30] sm:$0xff]
      %v551 = vld [vmem:[%s2 + $0x38] sm:$0xff]
      %v552 = vld [vmem:[%s2 + $0x40] sm:$0xff]
      %v553 = vld [vmem:[%s2 + $0x48] sm:$0xff]
      %v554 = vld [vmem:[%s2 + $0x50] sm:$0xff]
      %v555 = vld [vmem:[%s2 + $0x58] sm:$0xff]
      %v556 = vld [vmem:[%s2 + $0x60] sm:$0xff]
      %v557 = vld [vmem:[%s2 + $0x68] sm:$0xff]
      %v558 = vld [vmem:[%s2 + $0x70] sm:$0xff]
      %v559 = vld [vmem:[%s2 + $0x78] sm:$0xff]
      %560 = vmatprep.subr.mxu0 0.0
      %561 = vmatpush1.msra.mxu0 %v544
      %562 = vmatprep.subr.mxu0 0.0
      %563 = vmatpush1.msra.mxu0 %v545
      %564 = vmatprep.subr.mxu0 0.0
      %565 = vmatpush1.msra.mxu0 %v546
      %566 = vmatprep.subr.mxu0 0.0
      %567 = vmatpush1.msra.mxu0 %v547
      %568 = vmatprep.subr.mxu0 0.0
      %569 = vmatpush1.msra.mxu0 %v548
      %570 = vmatprep.subr.mxu0 0.0
      %571 = vmatpush1.msra.mxu0 %v549
      %572 = vmatprep.subr.mxu0 0.0
      %573 = vmatpush1.msra.mxu0 %v550
      %574 = vmatprep.subr.mxu0 0.0
      %575 = vmatpush1.msra.mxu0 %v551
      %576 = vmatprep.subr.mxu0 0.0
      %577 = vmatpush1.msra.mxu0 %v552
      %578 = vmatprep.subr.mxu0 0.0
      %579 = vmatpush1.msra.mxu0 %v553
      %580 = vmatprep.subr.mxu0 0.0
      %581 = vmatpush1.msra.mxu0 %v554
      %582 = vmatprep.subr.mxu0 0.0
      %583 = vmatpush1.msra.mxu0 %v555
      %584 = vmatprep.subr.mxu0 0.0
      %585 = vmatpush1.msra.mxu0 %v556
      %586 = vmatprep.subr.mxu0 0.0
      %587 = vmatpush1.msra.mxu0 %v557
      %588 = vmatprep.subr.mxu0 0.0
      %589 = vmatpush1.msra.mxu0 %v558
      %590 = vmatprep.subr.mxu0 0.0
      %591 = vmatpush1.msra.mxu0 %v559
      %592 = vmatprep.subr.mxu0 0.0
      %593 = vmatpush1.msra.mxu0 0.0
      %594 = vmatprep.subr.mxu0 0.0
      %595 = vmatpush1.msra.mxu0 0.0
      %596 = vmatprep.subr.mxu0 0.0
      %597 = vmatpush1.msra.mxu0 0.0
      %598 = vmatprep.subr.mxu0 0.0
      %599 = vmatpush1.msra.mxu0 0.0
      %600 = vmatprep.subr.mxu0 0.0
      %601 = vmatpush1.msra.mxu0 0.0
      %602 = vmatprep.subr.mxu0 0.0
      %603 = vmatpush1.msra.mxu0 0.0
      %604 = vmatprep.subr.mxu0 0.0
      %605 = vmatpush1.msra.mxu0 0.0
      %606 = vmatprep.subr.mxu0 0.0
      %607 = vmatpush1.msra.mxu0 0.0
      %608 = vmatprep.subr.mxu0 0.0
      %609 = vmatpush1.msra.mxu0 0.0
      %610 = vmatprep.subr.mxu0 0.0
      %611 = vmatpush1.msra.mxu0 0.0
      %612 = vmatprep.subr.mxu0 0.0
      %613 = vmatpush1.msra.mxu0 0.0
      %614 = vmatprep.subr.mxu0 0.0
      %615 = vmatpush1.msra.mxu0 0.0
      %616 = vmatprep.subr.mxu0 0.0
      %617 = vmatpush1.msra.mxu0 0.0
      %618 = vmatprep.subr.mxu0 0.0
      %619 = vmatpush1.msra.mxu0 0.0
      %620 = vmatprep.subr.mxu0 0.0
      %621 = vmatpush1.msra.mxu0 0.0
      %622 = vmatprep.subr.mxu0 0.0
      %623 = vmatpush1.msra.mxu0 0.0
      %624 = vmatprep.mubr.f32.mxu0 0.0
      %625 = vmatmul.mubr.f32.gmra.mrb[0].mxu0 %v541
      %v626 = vpop.f32.mrb[0].mxu0
      %v627 = vadd.f32 0.0, %v626
      %v628 = vpop.f32.mrb[0].mxu0
      %629 = vdwg.mxu0
      %v630 = vadd.f32 %v456, %v627
      %v631 = vtanh.pop %v630
      %v632 = vld [vmem:[%s4] sm:$0xff]
      %v633 = vld [vmem:[%s4 + $0x8] sm:$0xff]
      %v634 = vld [vmem:[%s4 + $0x10] sm:$0xff]
      %v635 = vld [vmem:[%s4 + $0x18] sm:$0xff]
      %v636 = vld [vmem:[%s4 + $0x20] sm:$0xff]
      %v637 = vld [vmem:[%s4 + $0x28] sm:$0xff]
      %v638 = vld [vmem:[%s4 + $0x30] sm:$0xff]
      %v639 = vld [vmem:[%s4 + $0x38] sm:$0xff]
      %v640 = vld [vmem:[%s4 + $0x40] sm:$0xff]
      %v641 = vld [vmem:[%s4 + $0x48] sm:$0xff]
      %v642 = vld [vmem:[%s4 + $0x50] sm:$0xff]
      %v643 = vld [vmem:[%s4 + $0x58] sm:$0xff]
      %v644 = vld [vmem:[%s4 + $0x60] sm:$0xff]
      %v645 = vld [vmem:[%s4 + $0x68] sm:$0xff]
      %v646 = vld [vmem:[%s4 + $0x70] sm:$0xff]
      %v647 = vld [vmem:[%s4 + $0x78] sm:$0xff]
      %v648 = vld [vmem:[%s4 + $0x80] sm:$0xff]
      %v649 = vld [vmem:[%s4 + $0x88] sm:$0xff]
      %v650 = vld [vmem:[%s4 + $0x90] sm:$0xff]
      %v651 = vld [vmem:[%s4 + $0x98] sm:$0xff]
      %v652 = vld [vmem:[%s4 + $0xa0] sm:$0xff]
      %v653 = vld [vmem:[%s4 + $0xa8] sm:$0xff]
      %v654 = vld [vmem:[%s4 + $0xb0] sm:$0xff]
      %v655 = vld [vmem:[%s4 + $0xb8] sm:$0xff]
      %v656 = vld [vmem:[%s4 + $0xc0] sm:$0xff]
      %v657 = vld [vmem:[%s4 + $0xc8] sm:$0xff]
      %v658 = vld [vmem:[%s4 + $0xd0] sm:$0xff]
      %v659 = vld [vmem:[%s4 + $0xd8] sm:$0xff]
      %v660 = vld [vmem:[%s4 + $0xe0] sm:$0xff]
      %v661 = vld [vmem:[%s4 + $0xe8] sm:$0xff]
      %v662 = vld [vmem:[%s4 + $0xf0] sm:$0xff]
      %v663 = vld [vmem:[%s4 + $0xf8] sm:$0xff]
      %664 = vmatprep.subr.mxu0 0.0
      %665 = vmatpush1.msra.mxu0 %v632
      %666 = vmatprep.subr.mxu0 0.0
      %667 = vmatpush1.msra.mxu0 %v633
      %668 = vmatprep.subr.mxu0 0.0
      %669 = vmatpush1.msra.mxu0 %v634
      %670 = vmatprep.subr.mxu0 0.0
      %671 = vmatpush1.msra.mxu0 %v635
      %672 = vmatprep.subr.mxu0 0.0
      %673 = vmatpush1.msra.mxu0 %v636
      %674 = vmatprep.subr.mxu0 0.0
      %675 = vmatpush1.msra.mxu0 %v637
      %676 = vmatprep.subr.mxu0 0.0
      %677 = vmatpush1.msra.mxu0 %v638
      %678 = vmatprep.subr.mxu0 0.0
      %679 = vmatpush1.msra.mxu0 %v639
      %680 = vmatprep.subr.mxu0 0.0
      %681 = vmatpush1.msra.mxu0 %v640
      %682 = vmatprep.subr.mxu0 0.0
      %683 = vmatpush1.msra.mxu0 %v641
      %684 = vmatprep.subr.mxu0 0.0
      %685 = vmatpush1.msra.mxu0 %v642
      %686 = vmatprep.subr.mxu0 0.0
      %687 = vmatpush1.msra.mxu0 %v643
      %688 = vmatprep.subr.mxu0 0.0
      %689 = vmatpush1.msra.mxu0 %v644
      %690 = vmatprep.subr.mxu0 0.0
      %691 = vmatpush1.msra.mxu0 %v645
      %692 = vmatprep.subr.mxu0 0.0
      %693 = vmatpush1.msra.mxu0 %v646
      %694 = vmatprep.subr.mxu0 0.0
      %695 = vmatpush1.msra.mxu0 %v647
      %696 = vmatprep.subr.mxu0 0.0
      %697 = vmatpush1.msra.mxu0 %v648
      %698 = vmatprep.subr.mxu0 0.0
      %699 = vmatpush1.msra.mxu0 %v649
      %700 = vmatprep.subr.mxu0 0.0
      %701 = vmatpush1.msra.mxu0 %v650
      %702 = vmatprep.subr.mxu0 0.0
      %703 = vmatpush1.msra.mxu0 %v651
      %704 = vmatprep.subr.mxu0 0.0
      %705 = vmatpush1.msra.mxu0 %v652
      %706 = vmatprep.subr.mxu0 0.0
      %707 = vmatpush1.msra.mxu0 %v653
      %708 = vmatprep.subr.mxu0 0.0
      %709 = vmatpush1.msra.mxu0 %v654
      %710 = vmatprep.subr.mxu0 0.0
      %711 = vmatpush1.msra.mxu0 %v655
      %712 = vmatprep.subr.mxu0 0.0
      %713 = vmatpush1.msra.mxu0 %v656
      %714 = vmatprep.subr.mxu0 0.0
      %715 = vmatpush1.msra.mxu0 %v657
      %716 = vmatprep.subr.mxu0 0.0
      %717 = vmatpush1.msra.mxu0 %v658
      %718 = vmatprep.subr.mxu0 0.0
      %719 = vmatpush1.msra.mxu0 %v659
      %720 = vmatprep.subr.mxu0 0.0
      %721 = vmatpush1.msra.mxu0 %v660
      %722 = vmatprep.subr.mxu0 0.0
      %723 = vmatpush1.msra.mxu0 %v661
      %724 = vmatprep.subr.mxu0 0.0
      %725 = vmatpush1.msra.mxu0 %v662
      %726 = vmatprep.subr.mxu0 0.0
      %727 = vmatpush1.msra.mxu0 %v663
      %728 = vmatprep.mubr.f32.mxu0 %v543
      %729 = vmatmul.mubr.f32.gmra.mrb[0].mxu0 %v631
      %v730 = vpop.f32.mrb[0].mxu0
      %v731 = vadd.f32 %v539, %v730
      %v732 = vpop.f32.mrb[0].mxu0
      %733 = vdwg.mxu0
      %v734 = vtanh.pop %v731
      %735 = vmatprep.subr.mxu0 0.0
      %736 = vmatpush1.msra.mxu0 %v544
      %737 = vmatprep.subr.mxu0 0.0
      %738 = vmatpush1.msra.mxu0 %v545
      %739 = vmatprep.subr.mxu0 0.0
      %740 = vmatpush1.msra.mxu0 %v546
      %741 = vmatprep.subr.mxu0 0.0
      %742 = vmatpush1.msra.mxu0 %v547
      %743 = vmatprep.subr.mxu0 0.0
      %744 = vmatpush1.msra.mxu0 %v548
      %745 = vmatprep.subr.mxu0 0.0
      %746 = vmatpush1.msra.mxu0 %v549
      %747 = vmatprep.subr.mxu0 0.0
      %748 = vmatpush1.msra.mxu0 %v550
      %749 = vmatprep.subr.mxu0 0.0
      %750 = vmatpush1.msra.mxu0 %v551
      %751 = vmatprep.subr.mxu0 0.0
      %752 = vmatpush1.msra.mxu0 %v552
      %753 = vmatprep.subr.mxu0 0.0
      %754 = vmatpush1.msra.mxu0 %v553
      %755 = vmatprep.subr.mxu0 0.0
      %756 = vmatpush1.msra.mxu0 %v554
      %757 = vmatprep.subr.mxu0 0.0
      %758 = vmatpush1.msra.mxu0 %v555
      %759 = vmatprep.subr.mxu0 0.0
      %760 = vmatpush1.msra.mxu0 %v556
      %761 = vmatprep.subr.mxu0 0.0
      %762 = vmatpush1.msra.mxu0 %v557
      %763 = vmatprep.subr.mxu0 0.0
      %764 = vmatpush1.msra.mxu0 %v558
      %765 = vmatprep.subr.mxu0 0.0
      %766 = vmatpush1.msra.mxu0 %v559
      %767 = vmatprep.subr.mxu0 0.0
      %768 = vmatpush1.msra.mxu0 0.0
      %769 = vmatprep.subr.mxu0 0.0
      %770 = vmatpush1.msra.mxu0 0.0
      %771 = vmatprep.subr.mxu0 0.0
      %772 = vmatpush1.msra.mxu0 0.0
      %773 = vmatprep.subr.mxu0 0.0
      %774 = vmatpush1.msra.mxu0 0.0
      %775 = vmatprep.subr.mxu0 0.0
      %776 = vmatpush1.msra.mxu0 0.0
      %777 = vmatprep.subr.mxu0 0.0
      %778 = vmatpush1.msra.mxu0 0.0
      %779 = vmatprep.subr.mxu0 0.0
      %780 = vmatpush1.msra.mxu0 0.0
      %781 = vmatprep.subr.mxu0 0.0
      %782 = vmatpush1.msra.mxu0 0.0
      %783 = vmatprep.subr.mxu0 0.0
      %784 = vmatpush1.msra.mxu0 0.0
      %785 = vmatprep.subr.mxu0 0.0
      %786 = vmatpush1.msra.mxu0 0.0
      %787 = vmatprep.subr.mxu0 0.0
      %788 = vmatpush1.msra.mxu0 0.0
      %789 = vmatprep.subr.mxu0 0.0
      %790 = vmatpush1.msra.mxu0 0.0
      %791 = vmatprep.subr.mxu0 0.0
      %792 = vmatpush1.msra.mxu0 0.0
      %793 = vmatprep.subr.mxu0 0.0
      %794 = vmatpush1.msra.mxu0 0.0
      %795 = vmatprep.subr.mxu0 0.0
      %796 = vmatpush1.msra.mxu0 0.0
      %797 = vmatprep.subr.mxu0 0.0
      %798 = vmatpush1.msra.mxu0 0.0
      %799 = vmatprep.mubr.f32.mxu0 0.0
      %800 = vmatmul.mubr.f32.gmra.mrb[0].mxu0 %v631
      %v801 = vpop.f32.mrb[0].mxu0
      %v802 = vadd.f32 0.0, %v801
      %v803 = vpop.f32.mrb[0].mxu0
      %804 = vdwg.mxu0
      %v805 = vadd.f32 %v461, %v802
      %v806 = vtanh.pop %v805
      %807 = vmatprep.subr.mxu0 0.0
      %808 = vmatpush1.msra.mxu0 %v632
      %809 = vmatprep.subr.mxu0 0.0
      %810 = vmatpush1.msra.mxu0 %v633
      %811 = vmatprep.subr.mxu0 0.0
      %812 = vmatpush1.msra.mxu0 %v634
      %813 = vmatprep.subr.mxu0 0.0
      %814 = vmatpush1.msra.mxu0 %v635
      %815 = vmatprep.subr.mxu0 0.0
      %816 = vmatpush1.msra.mxu0 %v636
      %817 = vmatprep.subr.mxu0 0.0
      %818 = vmatpush1.msra.mxu0 %v637
      %819 = vmatprep.subr.mxu0 0.0
      %820 = vmatpush1.msra.mxu0 %v638
      %821 = vmatprep.subr.mxu0 0.0
      %822 = vmatpush1.msra.mxu0 %v639
      %823 = vmatprep.subr.mxu0 0.0
      %824 = vmatpush1.msra.mxu0 %v640
      %825 = vmatprep.subr.mxu0 0.0
      %826 = vmatpush1.msra.mxu0 %v641
      %827 = vmatprep.subr.mxu0 0.0
      %828 = vmatpush1.msra.mxu0 %v642
      %829 = vmatprep.subr.mxu0 0.0
      %830 = vmatpush1.msra.mxu0 %v643
      %831 = vmatprep.subr.mxu0 0.0
      %832 = vmatpush1.msra.mxu0 %v644
      %833 = vmatprep.subr.mxu0 0.0
      %834 = vmatpush1.msra.mxu0 %v645
      %835 = vmatprep.subr.mxu0 0.0
      %836 = vmatpush1.msra.mxu0 %v646
      %837 = vmatprep.subr.mxu0 0.0
      %838 = vmatpush1.msra.mxu0 %v647
      %839 = vmatprep.subr.mxu0 0.0
      %840 = vmatpush1.msra.mxu0 %v648
      %841 = vmatprep.subr.mxu0 0.0
      %842 = vmatpush1.msra.mxu0 %v649
      %843 = vmatprep.subr.mxu0 0.0
      %844 = vmatpush1.msra.mxu0 %v650
      %845 = vmatprep.subr.mxu0 0.0
      %846 = vmatpush1.msra.mxu0 %v651
      %847 = vmatprep.subr.mxu0 0.0
      %848 = vmatpush1.msra.mxu0 %v652
      %849 = vmatprep.subr.mxu0 0.0
      %850 = vmatpush1.msra.mxu0 %v653
      %851 = vmatprep.subr.mxu0 0.0
      %852 = vmatpush1.msra.mxu0 %v654
      %853 = vmatprep.subr.mxu0 0.0
      %854 = vmatpush1.msra.mxu0 %v655
      %855 = vmatprep.subr.mxu0 0.0
      %856 = vmatpush1.msra.mxu0 %v656
      %857 = vmatprep.subr.mxu0 0.0
      %858 = vmatpush1.msra.mxu0 %v657
      %859 = vmatprep.subr.mxu0 0.0
      %860 = vmatpush1.msra.mxu0 %v658
      %861 = vmatprep.subr.mxu0 0.0
      %862 = vmatpush1.msra.mxu0 %v659
      %863 = vmatprep.subr.mxu0 0.0
      %864 = vmatpush1.msra.mxu0 %v660
      %865 = vmatprep.subr.mxu0 0.0
      %866 = vmatpush1.msra.mxu0 %v661
      %867 = vmatprep.subr.mxu0 0.0
      %868 = vmatpush1.msra.mxu0 %v662
      %869 = vmatprep.subr.mxu0 0.0
      %870 = vmatpush1.msra.mxu0 %v663
      %871 = vmatprep.mubr.f32.mxu0 %v734
      %872 = vmatmul.mubr.f32.gmra.mrb[0].mxu0 %v806
      %v873 = vpop.f32.mrb[0].mxu0
      %v874 = vadd.f32 %v539, %v873
      %v875 = vpop.f32.mrb[0].mxu0
      %876 = vdwg.mxu0
      %v877 = vtanh.pop %v874
      %878 = vmatprep.subr.mxu0 0.0
      %879 = vmatpush1.msra.mxu0 %v544
      %880 = vmatprep.subr.mxu0 0.0
      %881 = vmatpush1.msra.mxu0 %v545
      %882 = vmatprep.subr.mxu0 0.0
      %883 = vmatpush1.msra.mxu0 %v546
      %884 = vmatprep.subr.mxu0 0.0
      %885 = vmatpush1.msra.mxu0 %v547
      %886 = vmatprep.subr.mxu0 0.0
      %887 = vmatpush1.msra.mxu0 %v548
      %888 = vmatprep.subr.mxu0 0.0
      %889 = vmatpush1.msra.mxu0 %v549
      %890 = vmatprep.subr.mxu0 0.0
      %891 = vmatpush1.msra.mxu0 %v550
      %892 = vmatprep.subr.mxu0 0.0
      %893 = vmatpush1.msra.mxu0 %v551
      %894 = vmatprep.subr.mxu0 0.0
      %895 = vmatpush1.msra.mxu0 %v552
      %896 = vmatprep.subr.mxu0 0.0
      %897 = vmatpush1.msra.mxu0 %v553
      %898 = vmatprep.subr.mxu0 0.0
      %899 = vmatpush1.msra.mxu0 %v554
      %900 = vmatprep.subr.mxu0 0.0
      %901 = vmatpush1.msra.mxu0 %v555
      %902 = vmatprep.subr.mxu0 0.0
      %903 = vmatpush1.msra.mxu0 %v556
      %904 = vmatprep.subr.mxu0 0.0
      %905 = vmatpush1.msra.mxu0 %v557
      %906 = vmatprep.subr.mxu0 0.0
      %907 = vmatpush1.msra.mxu0 %v558
      %908 = vmatprep.subr.mxu0 0.0
      %909 = vmatpush1.msra.mxu0 %v559
      %910 = vmatprep.subr.mxu0 0.0
      %911 = vmatpush1.msra.mxu0 0.0
      %912 = vmatprep.subr.mxu0 0.0
      %913 = vmatpush1.msra.mxu0 0.0
      %914 = vmatprep.subr.mxu0 0.0
      %915 = vmatpush1.msra.mxu0 0.0
      %916 = vmatprep.subr.mxu0 0.0
      %917 = vmatpush1.msra.mxu0 0.0
      %918 = vmatprep.subr.mxu0 0.0
      %919 = vmatpush1.msra.mxu0 0.0
      %920 = vmatprep.subr.mxu0 0.0
      %921 = vmatpush1.msra.mxu0 0.0
      %922 = vmatprep.subr.mxu0 0.0
      %923 = vmatpush1.msra.mxu0 0.0
      %924 = vmatprep.subr.mxu0 0.0
      %925 = vmatpush1.msra.mxu0 0.0
      %926 = vmatprep.subr.mxu0 0.0
      %927 = vmatpush1.msra.mxu0 0.0
      %928 = vmatprep.subr.mxu0 0.0
      %929 = vmatpush1.msra.mxu0 0.0
      %930 = vmatprep.subr.mxu0 0.0
      %931 = vmatpush1.msra.mxu0 0.0
      %932 = vmatprep.subr.mxu0 0.0
      %933 = vmatpush1.msra.mxu0 0.0
      %934 = vmatprep.subr.mxu0 0.0
      %935 = vmatpush1.msra.mxu0 0.0
      %936 = vmatprep.subr.mxu0 0.0
      %937 = vmatpush1.msra.mxu0 0.0
      %938 = vmatprep.subr.mxu0 0.0
      %939 = vmatpush1.msra.mxu0 0.0
      %940 = vmatprep.subr.mxu0 0.0
      %941 = vmatpush1.msra.mxu0 0.0
      %942 = vmatprep.mubr.f32.mxu0 0.0
      %943 = vmatmul.mubr.f32.gmra.mrb[0].mxu0 %v806
      %v944 = vpop.f32.mrb[0].mxu0
      %v945 = vadd.f32 0.0, %v944
      %v946 = vpop.f32.mrb[0].mxu0
      %947 = vdwg.mxu0
      %v948 = vadd.f32 %v466, %v945
      %v949 = vtanh.pop %v948
      %950 = vmatprep.subr.mxu0 0.0
      %951 = vmatpush1.msra.mxu0 %v632
      %952 = vmatprep.subr.mxu0 0.0
      %953 = vmatpush1.msra.mxu0 %v633
      %954 = vmatprep.subr.mxu0 0.0
      %955 = vmatpush1.msra.mxu0 %v634
      %956 = vmatprep.subr.mxu0 0.0
      %957 = vmatpush1.msra.mxu0 %v635
      %958 = vmatprep.subr.mxu0 0.0
      %959 = vmatpush1.msra.mxu0 %v636
      %960 = vmatprep.subr.mxu0 0.0
      %961 = vmatpush1.msra.mxu0 %v637
      %962 = vmatprep.subr.mxu0 0.0
      %963 = vmatpush1.msra.mxu0 %v638
      %964 = vmatprep.subr.mxu0 0.0
      %965 = vmatpush1.msra.mxu0 %v639
      %966 = vmatprep.subr.mxu0 0.0
      %967 = vmatpush1.msra.mxu0 %v640
      %968 = vmatprep.subr.mxu0 0.0
      %969 = vmatpush1.msra.mxu0 %v641
      %970 = vmatprep.subr.mxu0 0.0
      %971 = vmatpush1.msra.mxu0 %v642
      %972 = vmatprep.subr.mxu0 0.0
      %973 = vmatpush1.msra.mxu0 %v643
      %974 = vmatprep.subr.mxu0 0.0
      %975 = vmatpush1.msra.mxu0 %v644
      %976 = vmatprep.subr.mxu0 0.0
      %977 = vmatpush1.msra.mxu0 %v645
      %978 = vmatprep.subr.mxu0 0.0
      %979 = vmatpush1.msra.mxu0 %v646
      %980 = vmatprep.subr.mxu0 0.0
      %981 = vmatpush1.msra.mxu0 %v647
      %982 = vmatprep.subr.mxu0 0.0
      %983 = vmatpush1.msra.mxu0 %v648
      %984 = vmatprep.subr.mxu0 0.0
      %985 = vmatpush1.msra.mxu0 %v649
      %986 = vmatprep.subr.mxu0 0.0
      %987 = vmatpush1.msra.mxu0 %v650
      %988 = vmatprep.subr.mxu0 0.0
      %989 = vmatpush1.msra.mxu0 %v651
      %990 = vmatprep.subr.mxu0 0.0
      %991 = vmatpush1.msra.mxu0 %v652
      %992 = vmatprep.subr.mxu0 0.0
      %993 = vmatpush1.msra.mxu0 %v653
      %994 = vmatprep.subr.mxu0 0.0
      %995 = vmatpush1.msra.mxu0 %v654
      %996 = vmatprep.subr.mxu0 0.0
      %997 = vmatpush1.msra.mxu0 %v655
      %998 = vmatprep.subr.mxu0 0.0
      %999 = vmatpush1.msra.mxu0 %v656
      %1000 = vmatprep.subr.mxu0 0.0
      %1001 = vmatpush1.msra.mxu0 %v657
      %1002 = vmatprep.subr.mxu0 0.0
      %1003 = vmatpush1.msra.mxu0 %v658
      %1004 = vmatprep.subr.mxu0 0.0
      %1005 = vmatpush1.msra.mxu0 %v659
      %1006 = vmatprep.subr.mxu0 0.0
      %1007 = vmatpush1.msra.mxu0 %v660
      %1008 = vmatprep.subr.mxu0 0.0
      %1009 = vmatpush1.msra.mxu0 %v661
      %1010 = vmatprep.subr.mxu0 0.0
      %1011 = vmatpush1.msra.mxu0 %v662
      %1012 = vmatprep.subr.mxu0 0.0
      %1013 = vmatpush1.msra.mxu0 %v663
      %1014 = vmatprep.mubr.f32.mxu0 %v877
      %1015 = vmatmul.mubr.f32.gmra.mrb[0].mxu0 %v949
      %v1016 = vpop.f32.mrb[0].mxu0
      %v1017 = vadd.f32 %v539, %v1016
      %v1018 = vpop.f32.mrb[0].mxu0
      %1019 = vdwg.mxu0
      %v1020 = vtanh.pop %v1017
      %1021 = vmatprep.subr.mxu0 0.0
      %1022 = vmatpush1.msra.mxu0 %v544
      %1023 = vmatprep.subr.mxu0 0.0
      %1024 = vmatpush1.msra.mxu0 %v545
      %1025 = vmatprep.subr.mxu0 0.0
      %1026 = vmatpush1.msra.mxu0 %v546
      %1027 = vmatprep.subr.mxu0 0.0
      %1028 = vmatpush1.msra.mxu0 %v547
      %1029 = vmatprep.subr.mxu0 0.0
      %1030 = vmatpush1.msra.mxu0 %v548
      %1031 = vmatprep.subr.mxu0 0.0
      %1032 = vmatpush1.msra.mxu0 %v549
      %1033 = vmatprep.subr.mxu0 0.0
      %1034 = vmatpush1.msra.mxu0 %v550
      %1035 = vmatprep.subr.mxu0 0.0
      %1036 = vmatpush1.msra.mxu0 %v551
      %1037 = vmatprep.subr.mxu0 0.0
      %1038 = vmatpush1.msra.mxu0 %v552
      %1039 = vmatprep.subr.mxu0 0.0
      %1040 = vmatpush1.msra.mxu0 %v553
      %1041 = vmatprep.subr.mxu0 0.0
      %1042 = vmatpush1.msra.mxu0 %v554
      %1043 = vmatprep.subr.mxu0 0.0
      %1044 = vmatpush1.msra.mxu0 %v555
      %1045 = vmatprep.subr.mxu0 0.0
      %1046 = vmatpush1.msra.mxu0 %v556
      %1047 = vmatprep.subr.mxu0 0.0
      %1048 = vmatpush1.msra.mxu0 %v557
      %1049 = vmatprep.subr.mxu0 0.0
      %1050 = vmatpush1.msra.mxu0 %v558
      %1051 = vmatprep.subr.mxu0 0.0
      %1052 = vmatpush1.msra.mxu0 %v559
      %1053 = vmatprep.subr.mxu0 0.0
      %1054 = vmatpush1.msra.mxu0 0.0
      %1055 = vmatprep.subr.mxu0 0.0
      %1056 = vmatpush1.msra.mxu0 0.0
      %1057 = vmatprep.subr.mxu0 0.0
      %1058 = vmatpush1.msra.mxu0 0.0
      %1059 = vmatprep.subr.mxu0 0.0
      %1060 = vmatpush1.msra.mxu0 0.0
      %1061 = vmatprep.subr.mxu0 0.0
      %1062 = vmatpush1.msra.mxu0 0.0
      %1063 = vmatprep.subr.mxu0 0.0
      %1064 = vmatpush1.msra.mxu0 0.0
      %1065 = vmatprep.subr.mxu0 0.0
      %1066 = vmatpush1.msra.mxu0 0.0
      %1067 = vmatprep.subr.mxu0 0.0
      %1068 = vmatpush1.msra.mxu0 0.0
      %1069 = vmatprep.subr.mxu0 0.0
      %1070 = vmatpush1.msra.mxu0 0.0
      %1071 = vmatprep.subr.mxu0 0.0
      %1072 = vmatpush1.msra.mxu0 0.0
      %1073 = vmatprep.subr.mxu0 0.0
      %1074 = vmatpush1.msra.mxu0 0.0
      %1075 = vmatprep.subr.mxu0 0.0
      %1076 = vmatpush1.msra.mxu0 0.0
      %1077 = vmatprep.subr.mxu0 0.0
      %1078 = vmatpush1.msra.mxu0 0.0
      %1079 = vmatprep.subr.mxu0 0.0
      %1080 = vmatpush1.msra.mxu0 0.0
      %1081 = vmatprep.subr.mxu0 0.0
      %1082 = vmatpush1.msra.mxu0 0.0
      %1083 = vmatprep.subr.mxu0 0.0
      %1084 = vmatpush1.msra.mxu0 0.0
      %1085 = vmatprep.mubr.f32.mxu0 0.0
      %1086 = vmatmul.mubr.f32.gmra.mrb[0].mxu0 %v949
      %v1087 = vpop.f32.mrb[0].mxu0
      %v1088 = vadd.f32 0.0, %v1087
      %v1089 = vpop.f32.mrb[0].mxu0
      %1090 = vdwg.mxu0
      %v1091 = vadd.f32 %v471, %v1088
      %v1092 = vtanh.pop %v1091
      %1093 = vmatprep.subr.mxu0 0.0
      %1094 = vmatpush1.msra.mxu0 %v632
      %1095 = vmatprep.subr.mxu0 0.0
      %1096 = vmatpush1.msra.mxu0 %v633
      %1097 = vmatprep.subr.mxu0 0.0
      %1098 = vmatpush1.msra.mxu0 %v634
      %1099 = vmatprep.subr.mxu0 0.0
      %1100 = vmatpush1.msra.mxu0 %v635
      %1101 = vmatprep.subr.mxu0 0.0
      %1102 = vmatpush1.msra.mxu0 %v636
      %1103 = vmatprep.subr.mxu0 0.0
      %1104 = vmatpush1.msra.mxu0 %v637
      %1105 = vmatprep.subr.mxu0 0.0
      %1106 = vmatpush1.msra.mxu0 %v638
      %1107 = vmatprep.subr.mxu0 0.0
      %1108 = vmatpush1.msra.mxu0 %v639
      %1109 = vmatprep.subr.mxu0 0.0
      %1110 = vmatpush1.msra.mxu0 %v640
      %1111 = vmatprep.subr.mxu0 0.0
      %1112 = vmatpush1.msra.mxu0 %v641
      %1113 = vmatprep.subr.mxu0 0.0
      %1114 = vmatpush1.msra.mxu0 %v642
      %1115 = vmatprep.subr.mxu0 0.0
      %1116 = vmatpush1.msra.mxu0 %v643
      %1117 = vmatprep.subr.mxu0 0.0
      %1118 = vmatpush1.msra.mxu0 %v644
      %1119 = vmatprep.subr.mxu0 0.0
      %1120 = vmatpush1.msra.mxu0 %v645
      %1121 = vmatprep.subr.mxu0 0.0
      %1122 = vmatpush1.msra.mxu0 %v646
      %1123 = vmatprep.subr.mxu0 0.0
      %1124 = vmatpush1.msra.mxu0 %v647
      %1125 = vmatprep.subr.mxu0 0.0
      %1126 = vmatpush1.msra.mxu0 %v648
      %1127 = vmatprep.subr.mxu0 0.0
      %1128 = vmatpush1.msra.mxu0 %v649
      %1129 = vmatprep.subr.mxu0 0.0
      %1130 = vmatpush1.msra.mxu0 %v650
      %1131 = vmatprep.subr.mxu0 0.0
      %1132 = vmatpush1.msra.mxu0 %v651
      %1133 = vmatprep.subr.mxu0 0.0
      %1134 = vmatpush1.msra.mxu0 %v652
      %1135 = vmatprep.subr.mxu0 0.0
      %1136 = vmatpush1.msra.mxu0 %v653
      %1137 = vmatprep.subr.mxu0 0.0
      %1138 = vmatpush1.msra.mxu0 %v654
      %1139 = vmatprep.subr.mxu0 0.0
      %1140 = vmatpush1.msra.mxu0 %v655
      %1141 = vmatprep.subr.mxu0 0.0
      %1142 = vmatpush1.msra.mxu0 %v656
      %1143 = vmatprep.subr.mxu0 0.0
      %1144 = vmatpush1.msra.mxu0 %v657
      %1145 = vmatprep.subr.mxu0 0.0
      %1146 = vmatpush1.msra.mxu0 %v658
      %1147 = vmatprep.subr.mxu0 0.0
      %1148 = vmatpush1.msra.mxu0 %v659
      %1149 = vmatprep.subr.mxu0 0.0
      %1150 = vmatpush1.msra.mxu0 %v660
      %1151 = vmatprep.subr.mxu0 0.0
      %1152 = vmatpush1.msra.mxu0 %v661
      %1153 = vmatprep.subr.mxu0 0.0
      %1154 = vmatpush1.msra.mxu0 %v662
      %1155 = vmatprep.subr.mxu0 0.0
      %1156 = vmatpush1.msra.mxu0 %v663
      %1157 = vmatprep.mubr.f32.mxu0 %v1020
      %1158 = vmatmul.mubr.f32.gmra.mrb[0].mxu0 %v1092
      %v1159 = vpop.f32.mrb[0].mxu0
      %v1160 = vadd.f32 %v539, %v1159
      %v1161 = vpop.f32.mrb[0].mxu0
      %1162 = vdwg.mxu0
      %v1163 = vtanh.pop %v1160
      %1164 = vmatprep.subr.mxu0 0.0
      %1165 = vmatpush1.msra.mxu0 %v544
      %1166 = vmatprep.subr.mxu0 0.0
      %1167 = vmatpush1.msra.mxu0 %v545
      %1168 = vmatprep.subr.mxu0 0.0
      %1169 = vmatpush1.msra.mxu0 %v546
      %1170 = vmatprep.subr.mxu0 0.0
      %1171 = vmatpush1.msra.mxu0 %v547
      %1172 = vmatprep.subr.mxu0 0.0
      %1173 = vmatpush1.msra.mxu0 %v548
      %1174 = vmatprep.subr.mxu0 0.0
      %1175 = vmatpush1.msra.mxu0 %v549
      %1176 = vmatprep.subr.mxu0 0.0
      %1177 = vmatpush1.msra.mxu0 %v550
      %1178 = vmatprep.subr.mxu0 0.0
      %1179 = vmatpush1.msra.mxu0 %v551
      %1180 = vmatprep.subr.mxu0 0.0
      %1181 = vmatpush1.msra.mxu0 %v552
      %1182 = vmatprep.subr.mxu0 0.0
      %1183 = vmatpush1.msra.mxu0 %v553
      %1184 = vmatprep.subr.mxu0 0.0
      %1185 = vmatpush1.msra.mxu0 %v554
      %1186 = vmatprep.subr.mxu0 0.0
      %1187 = vmatpush1.msra.mxu0 %v555
      %1188 = vmatprep.subr.mxu0 0.0
      %1189 = vmatpush1.msra.mxu0 %v556
      %1190 = vmatprep.subr.mxu0 0.0
      %1191 = vmatpush1.msra.mxu0 %v557
      %1192 = vmatprep.subr.mxu0 0.0
      %1193 = vmatpush1.msra.mxu0 %v558
      %1194 = vmatprep.subr.mxu0 0.0
      %1195 = vmatpush1.msra.mxu0 %v559
      %1196 = vmatprep.subr.mxu0 0.0
      %1197 = vmatpush1.msra.mxu0 0.0
      %1198 = vmatprep.subr.mxu0 0.0
      %1199 = vmatpush1.msra.mxu0 0.0
      %1200 = vmatprep.subr.mxu0 0.0
      %1201 = vmatpush1.msra.mxu0 0.0
      %1202 = vmatprep.subr.mxu0 0.0
      %1203 = vmatpush1.msra.mxu0 0.0
      %1204 = vmatprep.subr.mxu0 0.0
      %1205 = vmatpush1.msra.mxu0 0.0
      %1206 = vmatprep.subr.mxu0 0.0
      %1207 = vmatpush1.msra.mxu0 0.0
      %1208 = vmatprep.subr.mxu0 0.0
      %1209 = vmatpush1.msra.mxu0 0.0
      %1210 = vmatprep.subr.mxu0 0.0
      %1211 = vmatpush1.msra.mxu0 0.0
      %1212 = vmatprep.subr.mxu0 0.0
      %1213 = vmatpush1.msra.mxu0 0.0
      %1214 = vmatprep.subr.mxu0 0.0
      %1215 = vmatpush1.msra.mxu0 0.0
      %1216 = vmatprep.subr.mxu0 0.0
      %1217 = vmatpush1.msra.mxu0 0.0
      %1218 = vmatprep.subr.mxu0 0.0
      %1219 = vmatpush1.msra.mxu0 0.0
      %1220 = vmatprep.subr.mxu0 0.0
      %1221 = vmatpush1.msra.mxu0 0.0
      %1222 = vmatprep.subr.mxu0 0.0
      %1223 = vmatpush1.msra.mxu0 0.0
      %1224 = vmatprep.subr.mxu0 0.0
      %1225 = vmatpush1.msra.mxu0 0.0
      %1226 = vmatprep.subr.mxu0 0.0
      %1227 = vmatpush1.msra.mxu0 0.0
      %1228 = vmatprep.mubr.f32.mxu0 0.0
      %1229 = vmatmul.mubr.f32.gmra.mrb[0].mxu0 %v1092
      %v1230 = vpop.f32.mrb[0].mxu0
      %v1231 = vadd.f32 0.0, %v1230
      %v1232 = vpop.f32.mrb[0].mxu0
      %1233 = vdwg.mxu0
      %v1234 = vadd.f32 %v476, %v1231
      %v1235 = vtanh.pop %v1234
      %1236 = vmatprep.subr.mxu0 0.0
      %1237 = vmatpush1.msra.mxu0 %v632
      %1238 = vmatprep.subr.mxu0 0.0
      %1239 = vmatpush1.msra.mxu0 %v633
      %1240 = vmatprep.subr.mxu0 0.0
      %1241 = vmatpush1.msra.mxu0 %v634
      %1242 = vmatprep.subr.mxu0 0.0
      %1243 = vmatpush1.msra.mxu0 %v635
      %1244 = vmatprep.subr.mxu0 0.0
      %1245 = vmatpush1.msra.mxu0 %v636
      %1246 = vmatprep.subr.mxu0 0.0
      %1247 = vmatpush1.msra.mxu0 %v637
      %1248 = vmatprep.subr.mxu0 0.0
      %1249 = vmatpush1.msra.mxu0 %v638
      %1250 = vmatprep.subr.mxu0 0.0
      %1251 = vmatpush1.msra.mxu0 %v639
      %1252 = vmatprep.subr.mxu0 0.0
      %1253 = vmatpush1.msra.mxu0 %v640
      %1254 = vmatprep.subr.mxu0 0.0
      %1255 = vmatpush1.msra.mxu0 %v641
      %1256 = vmatprep.subr.mxu0 0.0
      %1257 = vmatpush1.msra.mxu0 %v642
      %1258 = vmatprep.subr.mxu0 0.0
      %1259 = vmatpush1.msra.mxu0 %v643
      %1260 = vmatprep.subr.mxu0 0.0
      %1261 = vmatpush1.msra.mxu0 %v644
      %1262 = vmatprep.subr.mxu0 0.0
      %1263 = vmatpush1.msra.mxu0 %v645
      %1264 = vmatprep.subr.mxu0 0.0
      %1265 = vmatpush1.msra.mxu0 %v646
      %1266 = vmatprep.subr.mxu0 0.0
      %1267 = vmatpush1.msra.mxu0 %v647
      %1268 = vmatprep.subr.mxu0 0.0
      %1269 = vmatpush1.msra.mxu0 %v648
      %1270 = vmatprep.subr.mxu0 0.0
      %1271 = vmatpush1.msra.mxu0 %v649
      %1272 = vmatprep.subr.mxu0 0.0
      %1273 = vmatpush1.msra.mxu0 %v650
      %1274 = vmatprep.subr.mxu0 0.0
      %1275 = vmatpush1.msra.mxu0 %v651
      %1276 = vmatprep.subr.mxu0 0.0
      %1277 = vmatpush1.msra.mxu0 %v652
      %1278 = vmatprep.subr.mxu0 0.0
      %1279 = vmatpush1.msra.mxu0 %v653
      %1280 = vmatprep.subr.mxu0 0.0
      %1281 = vmatpush1.msra.mxu0 %v654
      %1282 = vmatprep.subr.mxu0 0.0
      %1283 = vmatpush1.msra.mxu0 %v655
      %1284 = vmatprep.subr.mxu0 0.0
      %1285 = vmatpush1.msra.mxu0 %v656
      %1286 = vmatprep.subr.mxu0 0.0
      %1287 = vmatpush1.msra.mxu0 %v657
      %1288 = vmatprep.subr.mxu0 0.0
      %1289 = vmatpush1.msra.mxu0 %v658
      %1290 = vmatprep.subr.mxu0 0.0
      %1291 = vmatpush1.msra.mxu0 %v659
      %1292 = vmatprep.subr.mxu0 0.0
      %1293 = vmatpush1.msra.mxu0 %v660
      %1294 = vmatprep.subr.mxu0 0.0
      %1295 = vmatpush1.msra.mxu0 %v661
      %1296 = vmatprep.subr.mxu0 0.0
      %1297 = vmatpush1.msra.mxu0 %v662
      %1298 = vmatprep.subr.mxu0 0.0
      %1299 = vmatpush1.msra.mxu0 %v663
      %1300 = vmatprep.mubr.f32.mxu0 %v1163
      %1301 = vmatmul.mubr.f32.gmra.mrb[0].mxu0 %v1235
      %v1302 = vpop.f32.mrb[0].mxu0
      %v1303 = vadd.f32 %v539, %v1302
      %v1304 = vpop.f32.mrb[0].mxu0
      %1305 = vdwg.mxu0
      %v1306 = vtanh.pop %v1303
      %1307 = vmatprep.subr.mxu0 0.0
      %1308 = vmatpush1.msra.mxu0 %v544
      %1309 = vmatprep.subr.mxu0 0.0
      %1310 = vmatpush1.msra.mxu0 %v545
      %1311 = vmatprep.subr.mxu0 0.0
      %1312 = vmatpush1.msra.mxu0 %v546
      %1313 = vmatprep.subr.mxu0 0.0
      %1314 = vmatpush1.msra.mxu0 %v547
      %1315 = vmatprep.subr.mxu0 0.0
      %1316 = vmatpush1.msra.mxu0 %v548
      %1317 = vmatprep.subr.mxu0 0.0
      %1318 = vmatpush1.msra.mxu0 %v549
      %1319 = vmatprep.subr.mxu0 0.0
      %1320 = vmatpush1.msra.mxu0 %v550
      %1321 = vmatprep.subr.mxu0 0.0
      %1322 = vmatpush1.msra.mxu0 %v551
      %1323 = vmatprep.subr.mxu0 0.0
      %1324 = vmatpush1.msra.mxu0 %v552
      %1325 = vmatprep.subr.mxu0 0.0
      %1326 = vmatpush1.msra.mxu0 %v553
      %1327 = vmatprep.subr.mxu0 0.0
      %1328 = vmatpush1.msra.mxu0 %v554
      %1329 = vmatprep.subr.mxu0 0.0
      %1330 = vmatpush1.msra.mxu0 %v555
      %1331 = vmatprep.subr.mxu0 0.0
      %1332 = vmatpush1.msra.mxu0 %v556
      %1333 = vmatprep.subr.mxu0 0.0
      %1334 = vmatpush1.msra.mxu0 %v557
      %1335 = vmatprep.subr.mxu0 0.0
      %1336 = vmatpush1.msra.mxu0 %v558
      %1337 = vmatprep.subr.mxu0 0.0
      %1338 = vmatpush1.msra.mxu0 %v559
      %1339 = vmatprep.subr.mxu0 0.0
      %1340 = vmatpush1.msra.mxu0 0.0
      %1341 = vmatprep.subr.mxu0 0.0
      %1342 = vmatpush1.msra.mxu0 0.0
      %1343 = vmatprep.subr.mxu0 0.0
      %1344 = vmatpush1.msra.mxu0 0.0
      %1345 = vmatprep.subr.mxu0 0.0
      %1346 = vmatpush1.msra.mxu0 0.0
      %1347 = vmatprep.subr.mxu0 0.0
      %1348 = vmatpush1.msra.mxu0 0.0
      %1349 = vmatprep.subr.mxu0 0.0
      %1350 = vmatpush1.msra.mxu0 0.0
      %1351 = vmatprep.subr.mxu0 0.0
      %1352 = vmatpush1.msra.mxu0 0.0
      %1353 = vmatprep.subr.mxu0 0.0
      %1354 = vmatpush1.msra.mxu0 0.0
      %1355 = vmatprep.subr.mxu0 0.0
      %1356 = vmatpush1.msra.mxu0 0.0
      %1357 = vmatprep.subr.mxu0 0.0
      %1358 = vmatpush1.msra.mxu0 0.0
      %1359 = vmatprep.subr.mxu0 0.0
      %1360 = vmatpush1.msra.mxu0 0.0
      %1361 = vmatprep.subr.mxu0 0.0
      %1362 = vmatpush1.msra.mxu0 0.0
      %1363 = vmatprep.subr.mxu0 0.0
      %1364 = vmatpush1.msra.mxu0 0.0
      %1365 = vmatprep.subr.mxu0 0.0
      %1366 = vmatpush1.msra.mxu0 0.0
      %1367 = vmatprep.subr.mxu0 0.0
      %1368 = vmatpush1.msra.mxu0 0.0
      %1369 = vmatprep.subr.mxu0 0.0
      %1370 = vmatpush1.msra.mxu0 0.0
      %1371 = vmatprep.mubr.f32.mxu0 0.0
      %1372 = vmatmul.mubr.f32.gmra.mrb[0].mxu0 %v1235
      %v1373 = vpop.f32.mrb[0].mxu0
      %v1374 = vadd.f32 0.0, %v1373
      %v1375 = vpop.f32.mrb[0].mxu0
      %1376 = vdwg.mxu0
      %v1377 = vadd.f32 %v481, %v1374
      %v1378 = vtanh.pop %v1377
      %1379 = vmatprep.subr.mxu0 0.0
      %1380 = vmatpush1.msra.mxu0 %v632
      %1381 = vmatprep.subr.mxu0 0.0
      %1382 = vmatpush1.msra.mxu0 %v633
      %1383 = vmatprep.subr.mxu0 0.0
      %1384 = vmatpush1.msra.mxu0 %v634
      %1385 = vmatprep.subr.mxu0 0.0
      %1386 = vmatpush1.msra.mxu0 %v635
      %1387 = vmatprep.subr.mxu0 0.0
      %1388 = vmatpush1.msra.mxu0 %v636
      %1389 = vmatprep.subr.mxu0 0.0
      %1390 = vmatpush1.msra.mxu0 %v637
      %1391 = vmatprep.subr.mxu0 0.0
      %1392 = vmatpush1.msra.mxu0 %v638
      %1393 = vmatprep.subr.mxu0 0.0
      %1394 = vmatpush1.msra.mxu0 %v639
      %1395 = vmatprep.subr.mxu0 0.0
      %1396 = vmatpush1.msra.mxu0 %v640
      %1397 = vmatprep.subr.mxu0 0.0
      %1398 = vmatpush1.msra.mxu0 %v641
      %1399 = vmatprep.subr.mxu0 0.0
      %1400 = vmatpush1.msra.mxu0 %v642
      %1401 = vmatprep.subr.mxu0 0.0
      %1402 = vmatpush1.msra.mxu0 %v643
      %1403 = vmatprep.subr.mxu0 0.0
      %1404 = vmatpush1.msra.mxu0 %v644
      %1405 = vmatprep.subr.mxu0 0.0
      %1406 = vmatpush1.msra.mxu0 %v645
      %1407 = vmatprep.subr.mxu0 0.0
      %1408 = vmatpush1.msra.mxu0 %v646
      %1409 = vmatprep.subr.mxu0 0.0
      %1410 = vmatpush1.msra.mxu0 %v647
      %1411 = vmatprep.subr.mxu0 0.0
      %1412 = vmatpush1.msra.mxu0 %v648
      %1413 = vmatprep.subr.mxu0 0.0
      %1414 = vmatpush1.msra.mxu0 %v649
      %1415 = vmatprep.subr.mxu0 0.0
      %1416 = vmatpush1.msra.mxu0 %v650
      %1417 = vmatprep.subr.mxu0 0.0
      %1418 = vmatpush1.msra.mxu0 %v651
      %1419 = vmatprep.subr.mxu0 0.0
      %1420 = vmatpush1.msra.mxu0 %v652
      %1421 = vmatprep.subr.mxu0 0.0
      %1422 = vmatpush1.msra.mxu0 %v653
      %1423 = vmatprep.subr.mxu0 0.0
      %1424 = vmatpush1.msra.mxu0 %v654
      %1425 = vmatprep.subr.mxu0 0.0
      %1426 = vmatpush1.msra.mxu0 %v655
      %1427 = vmatprep.subr.mxu0 0.0
      %1428 = vmatpush1.msra.mxu0 %v656
      %1429 = vmatprep.subr.mxu0 0.0
      %1430 = vmatpush1.msra.mxu0 %v657
      %1431 = vmatprep.subr.mxu0 0.0
      %1432 = vmatpush1.msra.mxu0 %v658
      %1433 = vmatprep.subr.mxu0 0.0
      %1434 = vmatpush1.msra.mxu0 %v659
      %1435 = vmatprep.subr.mxu0 0.0
      %1436 = vmatpush1.msra.mxu0 %v660
      %1437 = vmatprep.subr.mxu0 0.0
      %1438 = vmatpush1.msra.mxu0 %v661
      %1439 = vmatprep.subr.mxu0 0.0
      %1440 = vmatpush1.msra.mxu0 %v662
      %1441 = vmatprep.subr.mxu0 0.0
      %1442 = vmatpush1.msra.mxu0 %v663
      %1443 = vmatprep.mubr.f32.mxu0 %v1306
      %1444 = vmatmul.mubr.f32.gmra.mrb[0].mxu0 %v1378
      %v1445 = vpop.f32.mrb[0].mxu0
      %v1446 = vadd.f32 %v539, %v1445
      %v1447 = vpop.f32.mrb[0].mxu0
      %1448 = vdwg.mxu0
      %v1449 = vtanh.pop %v1446
      %1450 = vmatprep.subr.mxu0 0.0
      %1451 = vmatpush1.msra.mxu0 %v544
      %1452 = vmatprep.subr.mxu0 0.0
      %1453 = vmatpush1.msra.mxu0 %v545
      %1454 = vmatprep.subr.mxu0 0.0
      %1455 = vmatpush1.msra.mxu0 %v546
      %1456 = vmatprep.subr.mxu0 0.0
      %1457 = vmatpush1.msra.mxu0 %v547
      %1458 = vmatprep.subr.mxu0 0.0
      %1459 = vmatpush1.msra.mxu0 %v548
      %1460 = vmatprep.subr.mxu0 0.0
      %1461 = vmatpush1.msra.mxu0 %v549
      %1462 = vmatprep.subr.mxu0 0.0
      %1463 = vmatpush1.msra.mxu0 %v550
      %1464 = vmatprep.subr.mxu0 0.0
      %1465 = vmatpush1.msra.mxu0 %v551
      %1466 = vmatprep.subr.mxu0 0.0
      %1467 = vmatpush1.msra.mxu0 %v552
      %1468 = vmatprep.subr.mxu0 0.0
      %1469 = vmatpush1.msra.mxu0 %v553
      %1470 = vmatprep.subr.mxu0 0.0
      %1471 = vmatpush1.msra.mxu0 %v554
      %1472 = vmatprep.subr.mxu0 0.0
      %1473 = vmatpush1.msra.mxu0 %v555
      %1474 = vmatprep.subr.mxu0 0.0
      %1475 = vmatpush1.msra.mxu0 %v556
      %1476 = vmatprep.subr.mxu0 0.0
      %1477 = vmatpush1.msra.mxu0 %v557
      %1478 = vmatprep.subr.mxu0 0.0
      %1479 = vmatpush1.msra.mxu0 %v558
      %1480 = vmatprep.subr.mxu0 0.0
      %1481 = vmatpush1.msra.mxu0 %v559
      %1482 = vmatprep.subr.mxu0 0.0
      %1483 = vmatpush1.msra.mxu0 0.0
      %1484 = vmatprep.subr.mxu0 0.0
      %1485 = vmatpush1.msra.mxu0 0.0
      %1486 = vmatprep.subr.mxu0 0.0
      %1487 = vmatpush1.msra.mxu0 0.0
      %1488 = vmatprep.subr.mxu0 0.0
      %1489 = vmatpush1.msra.mxu0 0.0
      %1490 = vmatprep.subr.mxu0 0.0
      %1491 = vmatpush1.msra.mxu0 0.0
      %1492 = vmatprep.subr.mxu0 0.0
      %1493 = vmatpush1.msra.mxu0 0.0
      %1494 = vmatprep.subr.mxu0 0.0
      %1495 = vmatpush1.msra.mxu0 0.0
      %1496 = vmatprep.subr.mxu0 0.0
      %1497 = vmatpush1.msra.mxu0 0.0
      %1498 = vmatprep.subr.mxu0 0.0
      %1499 = vmatpush1.msra.mxu0 0.0
      %1500 = vmatprep.subr.mxu0 0.0
      %1501 = vmatpush1.msra.mxu0 0.0
      %1502 = vmatprep.subr.mxu0 0.0
      %1503 = vmatpush1.msra.mxu0 0.0
      %1504 = vmatprep.subr.mxu0 0.0
      %1505 = vmatpush1.msra.mxu0 0.0
      %1506 = vmatprep.subr.mxu0 0.0
      %1507 = vmatpush1.msra.mxu0 0.0
      %1508 = vmatprep.subr.mxu0 0.0
      %1509 = vmatpush1.msra.mxu0 0.0
      %1510 = vmatprep.subr.mxu0 0.0
      %1511 = vmatpush1.msra.mxu0 0.0
      %1512 = vmatprep.subr.mxu0 0.0
      %1513 = vmatpush1.msra.mxu0 0.0
      %1514 = vmatprep.mubr.f32.mxu0 0.0
      %1515 = vmatmul.mubr.f32.gmra.mrb[0].mxu0 %v1378
      %v1516 = vpop.f32.mrb[0].mxu0
      %v1517 = vadd.f32 0.0, %v1516
      %v1518 = vpop.f32.mrb[0].mxu0
      %1519 = vdwg.mxu0
      %v1520 = vadd.f32 %v486, %v1517
      %v1521 = vtanh.pop %v1520
      %1522 = vmatprep.subr.mxu0 0.0
      %1523 = vmatpush1.msra.mxu0 %v632
      %1524 = vmatprep.subr.mxu0 0.0
      %1525 = vmatpush1.msra.mxu0 %v633
      %1526 = vmatprep.subr.mxu0 0.0
      %1527 = vmatpush1.msra.mxu0 %v634
      %1528 = vmatprep.subr.mxu0 0.0
      %1529 = vmatpush1.msra.mxu0 %v635
      %1530 = vmatprep.subr.mxu0 0.0
      %1531 = vmatpush1.msra.mxu0 %v636
      %1532 = vmatprep.subr.mxu0 0.0
      %1533 = vmatpush1.msra.mxu0 %v637
      %1534 = vmatprep.subr.mxu0 0.0
      %1535 = vmatpush1.msra.mxu0 %v638
      %1536 = vmatprep.subr.mxu0 0.0
      %1537 = vmatpush1.msra.mxu0 %v639
      %1538 = vmatprep.subr.mxu0 0.0
      %1539 = vmatpush1.msra.mxu0 %v640
      %1540 = vmatprep.subr.mxu0 0.0
      %1541 = vmatpush1.msra.mxu0 %v641
      %1542 = vmatprep.subr.mxu0 0.0
      %1543 = vmatpush1.msra.mxu0 %v642
      %1544 = vmatprep.subr.mxu0 0.0
      %1545 = vmatpush1.msra.mxu0 %v643
      %1546 = vmatprep.subr.mxu0 0.0
      %1547 = vmatpush1.msra.mxu0 %v644
      %1548 = vmatprep.subr.mxu0 0.0
      %1549 = vmatpush1.msra.mxu0 %v645
      %1550 = vmatprep.subr.mxu0 0.0
      %1551 = vmatpush1.msra.mxu0 %v646
      %1552 = vmatprep.subr.mxu0 0.0
      %1553 = vmatpush1.msra.mxu0 %v647
      %1554 = vmatprep.subr.mxu0 0.0
      %1555 = vmatpush1.msra.mxu0 %v648
      %1556 = vmatprep.subr.mxu0 0.0
      %1557 = vmatpush1.msra.mxu0 %v649
      %1558 = vmatprep.subr.mxu0 0.0
      %1559 = vmatpush1.msra.mxu0 %v650
      %1560 = vmatprep.subr.mxu0 0.0
      %1561 = vmatpush1.msra.mxu0 %v651
      %1562 = vmatprep.subr.mxu0 0.0
      %1563 = vmatpush1.msra.mxu0 %v652
      %1564 = vmatprep.subr.mxu0 0.0
      %1565 = vmatpush1.msra.mxu0 %v653
      %1566 = vmatprep.subr.mxu0 0.0
      %1567 = vmatpush1.msra.mxu0 %v654
      %1568 = vmatprep.subr.mxu0 0.0
      %1569 = vmatpush1.msra.mxu0 %v655
      %1570 = vmatprep.subr.mxu0 0.0
      %1571 = vmatpush1.msra.mxu0 %v656
      %1572 = vmatprep.subr.mxu0 0.0
      %1573 = vmatpush1.msra.mxu0 %v657
      %1574 = vmatprep.subr.mxu0 0.0
      %1575 = vmatpush1.msra.mxu0 %v658
      %1576 = vmatprep.subr.mxu0 0.0
      %1577 = vmatpush1.msra.mxu0 %v659
      %1578 = vmatprep.subr.mxu0 0.0
      %1579 = vmatpush1.msra.mxu0 %v660
      %1580 = vmatprep.subr.mxu0 0.0
      %1581 = vmatpush1.msra.mxu0 %v661
      %1582 = vmatprep.subr.mxu0 0.0
      %1583 = vmatpush1.msra.mxu0 %v662
      %1584 = vmatprep.subr.mxu0 0.0
      %1585 = vmatpush1.msra.mxu0 %v663
      %1586 = vmatprep.mubr.f32.mxu0 %v1449
      %1587 = vmatmul.mubr.f32.gmra.mrb[0].mxu0 %v1521
      %v1588 = vpop.f32.mrb[0].mxu0
      %v1589 = vadd.f32 %v539, %v1588
      %v1590 = vpop.f32.mrb[0].mxu0
      %1591 = vdwg.mxu0
      %v1592 = vtanh.pop %v1589
      %1593 = vmatprep.subr.mxu0 0.0
      %1594 = vmatpush1.msra.mxu0 %v544
      %1595 = vmatprep.subr.mxu0 0.0
      %1596 = vmatpush1.msra.mxu0 %v545
      %1597 = vmatprep.subr.mxu0 0.0
      %1598 = vmatpush1.msra.mxu0 %v546
      %1599 = vmatprep.subr.mxu0 0.0
      %1600 = vmatpush1.msra.mxu0 %v547
      %1601 = vmatprep.subr.mxu0 0.0
      %1602 = vmatpush1.msra.mxu0 %v548
      %1603 = vmatprep.subr.mxu0 0.0
      %1604 = vmatpush1.msra.mxu0 %v549
      %1605 = vmatprep.subr.mxu0 0.0
      %1606 = vmatpush1.msra.mxu0 %v550
      %1607 = vmatprep.subr.mxu0 0.0
      %1608 = vmatpush1.msra.mxu0 %v551
      %1609 = vmatprep.subr.mxu0 0.0
      %1610 = vmatpush1.msra.mxu0 %v552
      %1611 = vmatprep.subr.mxu0 0.0
      %1612 = vmatpush1.msra.mxu0 %v553
      %1613 = vmatprep.subr.mxu0 0.0
      %1614 = vmatpush1.msra.mxu0 %v554
      %1615 = vmatprep.subr.mxu0 0.0
      %1616 = vmatpush1.msra.mxu0 %v555
      %1617 = vmatprep.subr.mxu0 0.0
      %1618 = vmatpush1.msra.mxu0 %v556
      %1619 = vmatprep.subr.mxu0 0.0
      %1620 = vmatpush1.msra.mxu0 %v557
      %1621 = vmatprep.subr.mxu0 0.0
      %1622 = vmatpush1.msra.mxu0 %v558
      %1623 = vmatprep.subr.mxu0 0.0
      %1624 = vmatpush1.msra.mxu0 %v559
      %1625 = vmatprep.subr.mxu0 0.0
      %1626 = vmatpush1.msra.mxu0 0.0
      %1627 = vmatprep.subr.mxu0 0.0
      %1628 = vmatpush1.msra.mxu0 0.0
      %1629 = vmatprep.subr.mxu0 0.0
      %1630 = vmatpush1.msra.mxu0 0.0
      %1631 = vmatprep.subr.mxu0 0.0
      %1632 = vmatpush1.msra.mxu0 0.0
      %1633 = vmatprep.subr.mxu0 0.0
      %1634 = vmatpush1.msra.mxu0 0.0
      %1635 = vmatprep.subr.mxu0 0.0
      %1636 = vmatpush1.msra.mxu0 0.0
      %1637 = vmatprep.subr.mxu0 0.0
      %1638 = vmatpush1.msra.mxu0 0.0
      %1639 = vmatprep.subr.mxu0 0.0
      %1640 = vmatpush1.msra.mxu0 0.0
      %1641 = vmatprep.subr.mxu0 0.0
      %1642 = vmatpush1.msra.mxu0 0.0
      %1643 = vmatprep.subr.mxu0 0.0
      %1644 = vmatpush1.msra.mxu0 0.0
      %1645 = vmatprep.subr.mxu0 0.0
      %1646 = vmatpush1.msra.mxu0 0.0
      %1647 = vmatprep.subr.mxu0 0.0
      %1648 = vmatpush1.msra.mxu0 0.0
      %1649 = vmatprep.subr.mxu0 0.0
      %1650 = vmatpush1.msra.mxu0 0.0
      %1651 = vmatprep.subr.mxu0 0.0
      %1652 = vmatpush1.msra.mxu0 0.0
      %1653 = vmatprep.subr.mxu0 0.0
      %1654 = vmatpush1.msra.mxu0 0.0
      %1655 = vmatprep.subr.mxu0 0.0
      %1656 = vmatpush1.msra.mxu0 0.0
      %1657 = vmatprep.mubr.f32.mxu0 0.0
      %1658 = vmatmul.mubr.f32.gmra.mrb[0].mxu0 %v1521
      %v1659 = vpop.f32.mrb[0].mxu0
      %v1660 = vadd.f32 0.0, %v1659
      %v1661 = vpop.f32.mrb[0].mxu0
      %1662 = vdwg.mxu0
      %v1663 = vadd.f32 %v491, %v1660
      %v1664 = vtanh.pop %v1663
      %1665 = vmatprep.subr.mxu0 0.0
      %1666 = vmatpush1.msra.mxu0 %v632
      %1667 = vmatprep.subr.mxu0 0.0
      %1668 = vmatpush1.msra.mxu0 %v633
      %1669 = vmatprep.subr.mxu0 0.0
      %1670 = vmatpush1.msra.mxu0 %v634
      %1671 = vmatprep.subr.mxu0 0.0
      %1672 = vmatpush1.msra.mxu0 %v635
      %1673 = vmatprep.subr.mxu0 0.0
      %1674 = vmatpush1.msra.mxu0 %v636
      %1675 = vmatprep.subr.mxu0 0.0
      %1676 = vmatpush1.msra.mxu0 %v637
      %1677 = vmatprep.subr.mxu0 0.0
      %1678 = vmatpush1.msra.mxu0 %v638
      %1679 = vmatprep.subr.mxu0 0.0
      %1680 = vmatpush1.msra.mxu0 %v639
      %1681 = vmatprep.subr.mxu0 0.0
      %1682 = vmatpush1.msra.mxu0 %v640
      %1683 = vmatprep.subr.mxu0 0.0
      %1684 = vmatpush1.msra.mxu0 %v641
      %1685 = vmatprep.subr.mxu0 0.0
      %1686 = vmatpush1.msra.mxu0 %v642
      %1687 = vmatprep.subr.mxu0 0.0
      %1688 = vmatpush1.msra.mxu0 %v643
      %1689 = vmatprep.subr.mxu0 0.0
      %1690 = vmatpush1.msra.mxu0 %v644
      %1691 = vmatprep.subr.mxu0 0.0
      %1692 = vmatpush1.msra.mxu0 %v645
      %1693 = vmatprep.subr.mxu0 0.0
      %1694 = vmatpush1.msra.mxu0 %v646
      %1695 = vmatprep.subr.mxu0 0.0
      %1696 = vmatpush1.msra.mxu0 %v647
      %1697 = vmatprep.subr.mxu0 0.0
      %1698 = vmatpush1.msra.mxu0 %v648
      %1699 = vmatprep.subr.mxu0 0.0
      %1700 = vmatpush1.msra.mxu0 %v649
      %1701 = vmatprep.subr.mxu0 0.0
      %1702 = vmatpush1.msra.mxu0 %v650
      %1703 = vmatprep.subr.mxu0 0.0
      %1704 = vmatpush1.msra.mxu0 %v651
      %1705 = vmatprep.subr.mxu0 0.0
      %1706 = vmatpush1.msra.mxu0 %v652
      %1707 = vmatprep.subr.mxu0 0.0
      %1708 = vmatpush1.msra.mxu0 %v653
      %1709 = vmatprep.subr.mxu0 0.0
      %1710 = vmatpush1.msra.mxu0 %v654
      %1711 = vmatprep.subr.mxu0 0.0
      %1712 = vmatpush1.msra.mxu0 %v655
      %1713 = vmatprep.subr.mxu0 0.0
      %1714 = vmatpush1.msra.mxu0 %v656
      %1715 = vmatprep.subr.mxu0 0.0
      %1716 = vmatpush1.msra.mxu0 %v657
      %1717 = vmatprep.subr.mxu0 0.0
      %1718 = vmatpush1.msra.mxu0 %v658
      %1719 = vmatprep.subr.mxu0 0.0
      %1720 = vmatpush1.msra.mxu0 %v659
      %1721 = vmatprep.subr.mxu0 0.0
      %1722 = vmatpush1.msra.mxu0 %v660
      %1723 = vmatprep.subr.mxu0 0.0
      %1724 = vmatpush1.msra.mxu0 %v661
      %1725 = vmatprep.subr.mxu0 0.0
      %1726 = vmatpush1.msra.mxu0 %v662
      %1727 = vmatprep.subr.mxu0 0.0
      %1728 = vmatpush1.msra.mxu0 %v663
      %1729 = vmatprep.mubr.f32.mxu0 %v1592
      %1730 = vmatmul.mubr.f32.gmra.mrb[0].mxu0 %v1664
      %v1731 = vpop.f32.mrb[0].mxu0
      %v1732 = vadd.f32 %v539, %v1731
      %v1733 = vpop.f32.mrb[0].mxu0
      %1734 = vdwg.mxu0
      %v1735 = vtanh.pop %v1732
      %1736 = vmatprep.subr.mxu0 0.0
      %1737 = vmatpush1.msra.mxu0 %v544
      %1738 = vmatprep.subr.mxu0 0.0
      %1739 = vmatpush1.msra.mxu0 %v545
      %1740 = vmatprep.subr.mxu0 0.0
      %1741 = vmatpush1.msra.mxu0 %v546
      %1742 = vmatprep.subr.mxu0 0.0
      %1743 = vmatpush1.msra.mxu0 %v547
      %1744 = vmatprep.subr.mxu0 0.0
      %1745 = vmatpush1.msra.mxu0 %v548
      %1746 = vmatprep.subr.mxu0 0.0
      %1747 = vmatpush1.msra.mxu0 %v549
      %1748 = vmatprep.subr.mxu0 0.0
      %1749 = vmatpush1.msra.mxu0 %v550
      %1750 = vmatprep.subr.mxu0 0.0
      %1751 = vmatpush1.msra.mxu0 %v551
      %1752 = vmatprep.subr.mxu0 0.0
      %1753 = vmatpush1.msra.mxu0 %v552
      %1754 = vmatprep.subr.mxu0 0.0
      %1755 = vmatpush1.msra.mxu0 %v553
      %1756 = vmatprep.subr.mxu0 0.0
      %1757 = vmatpush1.msra.mxu0 %v554
      %1758 = vmatprep.subr.mxu0 0.0
      %1759 = vmatpush1.msra.mxu0 %v555
      %1760 = vmatprep.subr.mxu0 0.0
      %1761 = vmatpush1.msra.mxu0 %v556
      %1762 = vmatprep.subr.mxu0 0.0
      %1763 = vmatpush1.msra.mxu0 %v557
      %1764 = vmatprep.subr.mxu0 0.0
      %1765 = vmatpush1.msra.mxu0 %v558
      %1766 = vmatprep.subr.mxu0 0.0
      %1767 = vmatpush1.msra.mxu0 %v559
      %1768 = vmatprep.subr.mxu0 0.0
      %1769 = vmatpush1.msra.mxu0 0.0
      %1770 = vmatprep.subr.mxu0 0.0
      %1771 = vmatpush1.msra.mxu0 0.0
      %1772 = vmatprep.subr.mxu0 0.0
      %1773 = vmatpush1.msra.mxu0 0.0
      %1774 = vmatprep.subr.mxu0 0.0
      %1775 = vmatpush1.msra.mxu0 0.0
      %1776 = vmatprep.subr.mxu0 0.0
      %1777 = vmatpush1.msra.mxu0 0.0
      %1778 = vmatprep.subr.mxu0 0.0
      %1779 = vmatpush1.msra.mxu0 0.0
      %1780 = vmatprep.subr.mxu0 0.0
      %1781 = vmatpush1.msra.mxu0 0.0
      %1782 = vmatprep.subr.mxu0 0.0
      %1783 = vmatpush1.msra.mxu0 0.0
      %1784 = vmatprep.subr.mxu0 0.0
      %1785 = vmatpush1.msra.mxu0 0.0
      %1786 = vmatprep.subr.mxu0 0.0
      %1787 = vmatpush1.msra.mxu0 0.0
      %1788 = vmatprep.subr.mxu0 0.0
      %1789 = vmatpush1.msra.mxu0 0.0
      %1790 = vmatprep.subr.mxu0 0.0
      %1791 = vmatpush1.msra.mxu0 0.0
      %1792 = vmatprep.subr.mxu0 0.0
      %1793 = vmatpush1.msra.mxu0 0.0
      %1794 = vmatprep.subr.mxu0 0.0
      %1795 = vmatpush1.msra.mxu0 0.0
      %1796 = vmatprep.subr.mxu0 0.0
      %1797 = vmatpush1.msra.mxu0 0.0
      %1798 = vmatprep.subr.mxu0 0.0
      %1799 = vmatpush1.msra.mxu0 0.0
      %1800 = vmatprep.mubr.f32.mxu0 0.0
      %1801 = vmatmul.mubr.f32.gmra.mrb[0].mxu0 %v1664
      %v1802 = vpop.f32.mrb[0].mxu0
      %v1803 = vadd.f32 0.0, %v1802
      %v1804 = vpop.f32.mrb[0].mxu0
      %1805 = vdwg.mxu0
      %v1806 = vadd.f32 %v496, %v1803
      %v1807 = vtanh.pop %v1806
      %1808 = vmatprep.subr.mxu0 0.0
      %1809 = vmatpush1.msra.mxu0 %v632
      %1810 = vmatprep.subr.mxu0 0.0
      %1811 = vmatpush1.msra.mxu0 %v633
      %1812 = vmatprep.subr.mxu0 0.0
      %1813 = vmatpush1.msra.mxu0 %v634
      %1814 = vmatprep.subr.mxu0 0.0
      %1815 = vmatpush1.msra.mxu0 %v635
      %1816 = vmatprep.subr.mxu0 0.0
      %1817 = vmatpush1.msra.mxu0 %v636
      %1818 = vmatprep.subr.mxu0 0.0
      %1819 = vmatpush1.msra.mxu0 %v637
      %1820 = vmatprep.subr.mxu0 0.0
      %1821 = vmatpush1.msra.mxu0 %v638
      %1822 = vmatprep.subr.mxu0 0.0
      %1823 = vmatpush1.msra.mxu0 %v639
      %1824 = vmatprep.subr.mxu0 0.0
      %1825 = vmatpush1.msra.mxu0 %v640
      %1826 = vmatprep.subr.mxu0 0.0
      %1827 = vmatpush1.msra.mxu0 %v641
      %1828 = vmatprep.subr.mxu0 0.0
      %1829 = vmatpush1.msra.mxu0 %v642
      %1830 = vmatprep.subr.mxu0 0.0
      %1831 = vmatpush1.msra.mxu0 %v643
      %1832 = vmatprep.subr.mxu0 0.0
      %1833 = vmatpush1.msra.mxu0 %v644
      %1834 = vmatprep.subr.mxu0 0.0
      %1835 = vmatpush1.msra.mxu0 %v645
      %1836 = vmatprep.subr.mxu0 0.0
      %1837 = vmatpush1.msra.mxu0 %v646
      %1838 = vmatprep.subr.mxu0 0.0
      %1839 = vmatpush1.msra.mxu0 %v647
      %1840 = vmatprep.subr.mxu0 0.0
      %1841 = vmatpush1.msra.mxu0 %v648
      %1842 = vmatprep.subr.mxu0 0.0
      %1843 = vmatpush1.msra.mxu0 %v649
      %1844 = vmatprep.subr.mxu0 0.0
      %1845 = vmatpush1.msra.mxu0 %v650
      %1846 = vmatprep.subr.mxu0 0.0
      %1847 = vmatpush1.msra.mxu0 %v651
      %1848 = vmatprep.subr.mxu0 0.0
      %1849 = vmatpush1.msra.mxu0 %v652
      %1850 = vmatprep.subr.mxu0 0.0
      %1851 = vmatpush1.msra.mxu0 %v653
      %1852 = vmatprep.subr.mxu0 0.0
      %1853 = vmatpush1.msra.mxu0 %v654
      %1854 = vmatprep.subr.mxu0 0.0
      %1855 = vmatpush1.msra.mxu0 %v655
      %1856 = vmatprep.subr.mxu0 0.0
      %1857 = vmatpush1.msra.mxu0 %v656
      %1858 = vmatprep.subr.mxu0 0.0
      %1859 = vmatpush1.msra.mxu0 %v657
      %1860 = vmatprep.subr.mxu0 0.0
      %1861 = vmatpush1.msra.mxu0 %v658
      %1862 = vmatprep.subr.mxu0 0.0
      %1863 = vmatpush1.msra.mxu0 %v659
      %1864 = vmatprep.subr.mxu0 0.0
      %1865 = vmatpush1.msra.mxu0 %v660
      %1866 = vmatprep.subr.mxu0 0.0
      %1867 = vmatpush1.msra.mxu0 %v661
      %1868 = vmatprep.subr.mxu0 0.0
      %1869 = vmatpush1.msra.mxu0 %v662
      %1870 = vmatprep.subr.mxu0 0.0
      %1871 = vmatpush1.msra.mxu0 %v663
      %1872 = vmatprep.mubr.f32.mxu0 %v1735
      %1873 = vmatmul.mubr.f32.gmra.mrb[0].mxu0 %v1807
      %v1874 = vpop.f32.mrb[0].mxu0
      %v1875 = vadd.f32 %v539, %v1874
      %v1876 = vpop.f32.mrb[0].mxu0
      %1877 = vdwg.mxu0
      %v1878 = vtanh.pop %v1875
      %1879 = vmatprep.subr.mxu0 0.0
      %1880 = vmatpush1.msra.mxu0 %v544
      %1881 = vmatprep.subr.mxu0 0.0
      %1882 = vmatpush1.msra.mxu0 %v545
      %1883 = vmatprep.subr.mxu0 0.0
      %1884 = vmatpush1.msra.mxu0 %v546
      %1885 = vmatprep.subr.mxu0 0.0
      %1886 = vmatpush1.msra.mxu0 %v547
      %1887 = vmatprep.subr.mxu0 0.0
      %1888 = vmatpush1.msra.mxu0 %v548
      %1889 = vmatprep.subr.mxu0 0.0
      %1890 = vmatpush1.msra.mxu0 %v549
      %1891 = vmatprep.subr.mxu0 0.0
      %1892 = vmatpush1.msra.mxu0 %v550
      %1893 = vmatprep.subr.mxu0 0.0
      %1894 = vmatpush1.msra.mxu0 %v551
      %1895 = vmatprep.subr.mxu0 0.0
      %1896 = vmatpush1.msra.mxu0 %v552
      %1897 = vmatprep.subr.mxu0 0.0
      %1898 = vmatpush1.msra.mxu0 %v553
      %1899 = vmatprep.subr.mxu0 0.0
      %1900 = vmatpush1.msra.mxu0 %v554
      %1901 = vmatprep.subr.mxu0 0.0
      %1902 = vmatpush1.msra.mxu0 %v555
      %1903 = vmatprep.subr.mxu0 0.0
      %1904 = vmatpush1.msra.mxu0 %v556
      %1905 = vmatprep.subr.mxu0 0.0
      %1906 = vmatpush1.msra.mxu0 %v557
      %1907 = vmatprep.subr.mxu0 0.0
      %1908 = vmatpush1.msra.mxu0 %v558
      %1909 = vmatprep.subr.mxu0 0.0
      %1910 = vmatpush1.msra.mxu0 %v559
      %1911 = vmatprep.subr.mxu0 0.0
      %1912 = vmatpush1.msra.mxu0 0.0
      %1913 = vmatprep.subr.mxu0 0.0
      %1914 = vmatpush1.msra.mxu0 0.0
      %1915 = vmatprep.subr.mxu0 0.0
      %1916 = vmatpush1.msra.mxu0 0.0
      %1917 = vmatprep.subr.mxu0 0.0
      %1918 = vmatpush1.msra.mxu0 0.0
      %1919 = vmatprep.subr.mxu0 0.0
      %1920 = vmatpush1.msra.mxu0 0.0
      %1921 = vmatprep.subr.mxu0 0.0
      %1922 = vmatpush1.msra.mxu0 0.0
      %1923 = vmatprep.subr.mxu0 0.0
      %1924 = vmatpush1.msra.mxu0 0.0
      %1925 = vmatprep.subr.mxu0 0.0
      %1926 = vmatpush1.msra.mxu0 0.0
      %1927 = vmatprep.subr.mxu0 0.0
      %1928 = vmatpush1.msra.mxu0 0.0
      %1929 = vmatprep.subr.mxu0 0.0
      %1930 = vmatpush1.msra.mxu0 0.0
      %1931 = vmatprep.subr.mxu0 0.0
      %1932 = vmatpush1.msra.mxu0 0.0
      %1933 = vmatprep.subr.mxu0 0.0
      %1934 = vmatpush1.msra.mxu0 0.0
      %1935 = vmatprep.subr.mxu0 0.0
      %1936 = vmatpush1.msra.mxu0 0.0
      %1937 = vmatprep.subr.mxu0 0.0
      %1938 = vmatpush1.msra.mxu0 0.0
      %1939 = vmatprep.subr.mxu0 0.0
      %1940 = vmatpush1.msra.mxu0 0.0
      %1941 = vmatprep.subr.mxu0 0.0
      %1942 = vmatpush1.msra.mxu0 0.0
      %1943 = vmatprep.mubr.f32.mxu0 0.0
      %1944 = vmatmul.mubr.f32.gmra.mrb[0].mxu0 %v1807
      %v1945 = vpop.f32.mrb[0].mxu0
      %v1946 = vadd.f32 0.0, %v1945
      %v1947 = vpop.f32.mrb[0].mxu0
      %1948 = vdwg.mxu0
      %v1949 = vadd.f32 %v501, %v1946
      %v1950 = vtanh.pop %v1949
      %1951 = vmatprep.subr.mxu0 0.0
      %1952 = vmatpush1.msra.mxu0 %v632
      %1953 = vmatprep.subr.mxu0 0.0
      %1954 = vmatpush1.msra.mxu0 %v633
      %1955 = vmatprep.subr.mxu0 0.0
      %1956 = vmatpush1.msra.mxu0 %v634
      %1957 = vmatprep.subr.mxu0 0.0
      %1958 = vmatpush1.msra.mxu0 %v635
      %1959 = vmatprep.subr.mxu0 0.0
      %1960 = vmatpush1.msra.mxu0 %v636
      %1961 = vmatprep.subr.mxu0 0.0
      %1962 = vmatpush1.msra.mxu0 %v637
      %1963 = vmatprep.subr.mxu0 0.0
      %1964 = vmatpush1.msra.mxu0 %v638
      %1965 = vmatprep.subr.mxu0 0.0
      %1966 = vmatpush1.msra.mxu0 %v639
      %1967 = vmatprep.subr.mxu0 0.0
      %1968 = vmatpush1.msra.mxu0 %v640
      %1969 = vmatprep.subr.mxu0 0.0
      %1970 = vmatpush1.msra.mxu0 %v641
      %1971 = vmatprep.subr.mxu0 0.0
      %1972 = vmatpush1.msra.mxu0 %v642
      %1973 = vmatprep.subr.mxu0 0.0
      %1974 = vmatpush1.msra.mxu0 %v643
      %1975 = vmatprep.subr.mxu0 0.0
      %1976 = vmatpush1.msra.mxu0 %v644
      %1977 = vmatprep.subr.mxu0 0.0
      %1978 = vmatpush1.msra.mxu0 %v645
      %1979 = vmatprep.subr.mxu0 0.0
      %1980 = vmatpush1.msra.mxu0 %v646
      %1981 = vmatprep.subr.mxu0 0.0
      %1982 = vmatpush1.msra.mxu0 %v647
      %1983 = vmatprep.subr.mxu0 0.0
      %1984 = vmatpush1.msra.mxu0 %v648
      %1985 = vmatprep.subr.mxu0 0.0
      %1986 = vmatpush1.msra.mxu0 %v649
      %1987 = vmatprep.subr.mxu0 0.0
      %1988 = vmatpush1.msra.mxu0 %v650
      %1989 = vmatprep.subr.mxu0 0.0
      %1990 = vmatpush1.msra.mxu0 %v651
      %1991 = vmatprep.subr.mxu0 0.0
      %1992 = vmatpush1.msra.mxu0 %v652
      %1993 = vmatprep.subr.mxu0 0.0
      %1994 = vmatpush1.msra.mxu0 %v653
      %1995 = vmatprep.subr.mxu0 0.0
      %1996 = vmatpush1.msra.mxu0 %v654
      %1997 = vmatprep.subr.mxu0 0.0
      %1998 = vmatpush1.msra.mxu0 %v655
      %1999 = vmatprep.subr.mxu0 0.0
      %2000 = vmatpush1.msra.mxu0 %v656
      %2001 = vmatprep.subr.mxu0 0.0
      %2002 = vmatpush1.msra.mxu0 %v657
      %2003 = vmatprep.subr.mxu0 0.0
      %2004 = vmatpush1.msra.mxu0 %v658
      %2005 = vmatprep.subr.mxu0 0.0
      %2006 = vmatpush1.msra.mxu0 %v659
      %2007 = vmatprep.subr.mxu0 0.0
      %2008 = vmatpush1.msra.mxu0 %v660
      %2009 = vmatprep.subr.mxu0 0.0
      %2010 = vmatpush1.msra.mxu0 %v661
      %2011 = vmatprep.subr.mxu0 0.0
      %2012 = vmatpush1.msra.mxu0 %v662
      %2013 = vmatprep.subr.mxu0 0.0
      %2014 = vmatpush1.msra.mxu0 %v663
      %2015 = vmatprep.mubr.f32.mxu0 %v1878
      %2016 = vmatmul.mubr.f32.gmra.mrb[0].mxu0 %v1950
      %v2017 = vpop.f32.mrb[0].mxu0
      %v2018 = vadd.f32 %v539, %v2017
      %v2019 = vpop.f32.mrb[0].mxu0
      %2020 = vdwg.mxu0
      %v2021 = vtanh.pop %v2018
      %2022 = vmatprep.subr.mxu0 0.0
      %2023 = vmatpush1.msra.mxu0 %v544
      %2024 = vmatprep.subr.mxu0 0.0
      %2025 = vmatpush1.msra.mxu0 %v545
      %2026 = vmatprep.subr.mxu0 0.0
      %2027 = vmatpush1.msra.mxu0 %v546
      %2028 = vmatprep.subr.mxu0 0.0
      %2029 = vmatpush1.msra.mxu0 %v547
      %2030 = vmatprep.subr.mxu0 0.0
      %2031 = vmatpush1.msra.mxu0 %v548
      %2032 = vmatprep.subr.mxu0 0.0
      %2033 = vmatpush1.msra.mxu0 %v549
      %2034 = vmatprep.subr.mxu0 0.0
      %2035 = vmatpush1.msra.mxu0 %v550
      %2036 = vmatprep.subr.mxu0 0.0
      %2037 = vmatpush1.msra.mxu0 %v551
      %2038 = vmatprep.subr.mxu0 0.0
      %2039 = vmatpush1.msra.mxu0 %v552
      %2040 = vmatprep.subr.mxu0 0.0
      %2041 = vmatpush1.msra.mxu0 %v553
      %2042 = vmatprep.subr.mxu0 0.0
      %2043 = vmatpush1.msra.mxu0 %v554
      %2044 = vmatprep.subr.mxu0 0.0
      %2045 = vmatpush1.msra.mxu0 %v555
      %2046 = vmatprep.subr.mxu0 0.0
      %2047 = vmatpush1.msra.mxu0 %v556
      %2048 = vmatprep.subr.mxu0 0.0
      %2049 = vmatpush1.msra.mxu0 %v557
      %2050 = vmatprep.subr.mxu0 0.0
      %2051 = vmatpush1.msra.mxu0 %v558
      %2052 = vmatprep.subr.mxu0 0.0
      %2053 = vmatpush1.msra.mxu0 %v559
      %2054 = vmatprep.subr.mxu0 0.0
      %2055 = vmatpush1.msra.mxu0 0.0
      %2056 = vmatprep.subr.mxu0 0.0
      %2057 = vmatpush1.msra.mxu0 0.0
      %2058 = vmatprep.subr.mxu0 0.0
      %2059 = vmatpush1.msra.mxu0 0.0
      %2060 = vmatprep.subr.mxu0 0.0
      %2061 = vmatpush1.msra.mxu0 0.0
      %2062 = vmatprep.subr.mxu0 0.0
      %2063 = vmatpush1.msra.mxu0 0.0
      %2064 = vmatprep.subr.mxu0 0.0
      %2065 = vmatpush1.msra.mxu0 0.0
      %2066 = vmatprep.subr.mxu0 0.0
      %2067 = vmatpush1.msra.mxu0 0.0
      %2068 = vmatprep.subr.mxu0 0.0
      %2069 = vmatpush1.msra.mxu0 0.0
      %2070 = vmatprep.subr.mxu0 0.0
      %2071 = vmatpush1.msra.mxu0 0.0
      %2072 = vmatprep.subr.mxu0 0.0
      %2073 = vmatpush1.msra.mxu0 0.0
      %2074 = vmatprep.subr.mxu0 0.0
      %2075 = vmatpush1.msra.mxu0 0.0
      %2076 = vmatprep.subr.mxu0 0.0
      %2077 = vmatpush1.msra.mxu0 0.0
      %2078 = vmatprep.subr.mxu0 0.0
      %2079 = vmatpush1.msra.mxu0 0.0
      %2080 = vmatprep.subr.mxu0 0.0
      %2081 = vmatpush1.msra.mxu0 0.0
      %2082 = vmatprep.subr.mxu0 0.0
      %2083 = vmatpush1.msra.mxu0 0.0
      %2084 = vmatprep.subr.mxu0 0.0
      %2085 = vmatpush1.msra.mxu0 0.0
      %2086 = vmatprep.mubr.f32.mxu0 0.0
      %2087 = vmatmul.mubr.f32.gmra.mrb[0].mxu0 %v1950
      %v2088 = vpop.f32.mrb[0].mxu0
      %v2089 = vadd.f32 0.0, %v2088
      %v2090 = vpop.f32.mrb[0].mxu0
      %2091 = vdwg.mxu0
      %v2092 = vadd.f32 %v506, %v2089
      %v2093 = vtanh.pop %v2092
      %2094 = vmatprep.subr.mxu0 0.0
      %2095 = vmatpush1.msra.mxu0 %v632
      %2096 = vmatprep.subr.mxu0 0.0
      %2097 = vmatpush1.msra.mxu0 %v633
      %2098 = vmatprep.subr.mxu0 0.0
      %2099 = vmatpush1.msra.mxu0 %v634
      %2100 = vmatprep.subr.mxu0 0.0
      %2101 = vmatpush1.msra.mxu0 %v635
      %2102 = vmatprep.subr.mxu0 0.0
      %2103 = vmatpush1.msra.mxu0 %v636
      %2104 = vmatprep.subr.mxu0 0.0
      %2105 = vmatpush1.msra.mxu0 %v637
      %2106 = vmatprep.subr.mxu0 0.0
      %2107 = vmatpush1.msra.mxu0 %v638
      %2108 = vmatprep.subr.mxu0 0.0
      %2109 = vmatpush1.msra.mxu0 %v639
      %2110 = vmatprep.subr.mxu0 0.0
      %2111 = vmatpush1.msra.mxu0 %v640
      %2112 = vmatprep.subr.mxu0 0.0
      %2113 = vmatpush1.msra.mxu0 %v641
      %2114 = vmatprep.subr.mxu0 0.0
      %2115 = vmatpush1.msra.mxu0 %v642
      %2116 = vmatprep.subr.mxu0 0.0
      %2117 = vmatpush1.msra.mxu0 %v643
      %2118 = vmatprep.subr.mxu0 0.0
      %2119 = vmatpush1.msra.mxu0 %v644
      %2120 = vmatprep.subr.mxu0 0.0
      %2121 = vmatpush1.msra.mxu0 %v645
      %2122 = vmatprep.subr.mxu0 0.0
      %2123 = vmatpush1.msra.mxu0 %v646
      %2124 = vmatprep.subr.mxu0 0.0
      %2125 = vmatpush1.msra.mxu0 %v647
      %2126 = vmatprep.subr.mxu0 0.0
      %2127 = vmatpush1.msra.mxu0 %v648
      %2128 = vmatprep.subr.mxu0 0.0
      %2129 = vmatpush1.msra.mxu0 %v649
      %2130 = vmatprep.subr.mxu0 0.0
      %2131 = vmatpush1.msra.mxu0 %v650
      %2132 = vmatprep.subr.mxu0 0.0
      %2133 = vmatpush1.msra.mxu0 %v651
      %2134 = vmatprep.subr.mxu0 0.0
      %2135 = vmatpush1.msra.mxu0 %v652
      %2136 = vmatprep.subr.mxu0 0.0
      %2137 = vmatpush1.msra.mxu0 %v653
      %2138 = vmatprep.subr.mxu0 0.0
      %2139 = vmatpush1.msra.mxu0 %v654
      %2140 = vmatprep.subr.mxu0 0.0
      %2141 = vmatpush1.msra.mxu0 %v655
      %2142 = vmatprep.subr.mxu0 0.0
      %2143 = vmatpush1.msra.mxu0 %v656
      %2144 = vmatprep.subr.mxu0 0.0
      %2145 = vmatpush1.msra.mxu0 %v657
      %2146 = vmatprep.subr.mxu0 0.0
      %2147 = vmatpush1.msra.mxu0 %v658
      %2148 = vmatprep.subr.mxu0 0.0
      %2149 = vmatpush1.msra.mxu0 %v659
      %2150 = vmatprep.subr.mxu0 0.0
      %2151 = vmatpush1.msra.mxu0 %v660
      %2152 = vmatprep.subr.mxu0 0.0
      %2153 = vmatpush1.msra.mxu0 %v661
      %2154 = vmatprep.subr.mxu0 0.0
      %2155 = vmatpush1.msra.mxu0 %v662
      %2156 = vmatprep.subr.mxu0 0.0
      %2157 = vmatpush1.msra.mxu0 %v663
      %2158 = vmatprep.mubr.f32.mxu0 %v2021
      %2159 = vmatmul.mubr.f32.gmra.mrb[0].mxu0 %v2093
      %v2160 = vpop.f32.mrb[0].mxu0
      %v2161 = vadd.f32 %v539, %v2160
      %v2162 = vpop.f32.mrb[0].mxu0
      %2163 = vdwg.mxu0
      %v2164 = vtanh.pop %v2161
      %2165 = vmatprep.subr.mxu0 0.0
      %2166 = vmatpush1.msra.mxu0 %v544
      %2167 = vmatprep.subr.mxu0 0.0
      %2168 = vmatpush1.msra.mxu0 %v545
      %2169 = vmatprep.subr.mxu0 0.0
      %2170 = vmatpush1.msra.mxu0 %v546
      %2171 = vmatprep.subr.mxu0 0.0
      %2172 = vmatpush1.msra.mxu0 %v547
      %2173 = vmatprep.subr.mxu0 0.0
      %2174 = vmatpush1.msra.mxu0 %v548
      %2175 = vmatprep.subr.mxu0 0.0
      %2176 = vmatpush1.msra.mxu0 %v549
      %2177 = vmatprep.subr.mxu0 0.0
      %2178 = vmatpush1.msra.mxu0 %v550
      %2179 = vmatprep.subr.mxu0 0.0
      %2180 = vmatpush1.msra.mxu0 %v551
      %2181 = vmatprep.subr.mxu0 0.0
      %2182 = vmatpush1.msra.mxu0 %v552
      %2183 = vmatprep.subr.mxu0 0.0
      %2184 = vmatpush1.msra.mxu0 %v553
      %2185 = vmatprep.subr.mxu0 0.0
      %2186 = vmatpush1.msra.mxu0 %v554
      %2187 = vmatprep.subr.mxu0 0.0
      %2188 = vmatpush1.msra.mxu0 %v555
      %2189 = vmatprep.subr.mxu0 0.0
      %2190 = vmatpush1.msra.mxu0 %v556
      %2191 = vmatprep.subr.mxu0 0.0
      %2192 = vmatpush1.msra.mxu0 %v557
      %2193 = vmatprep.subr.mxu0 0.0
      %2194 = vmatpush1.msra.mxu0 %v558
      %2195 = vmatprep.subr.mxu0 0.0
      %2196 = vmatpush1.msra.mxu0 %v559
      %2197 = vmatprep.subr.mxu0 0.0
      %2198 = vmatpush1.msra.mxu0 0.0
      %2199 = vmatprep.subr.mxu0 0.0
      %2200 = vmatpush1.msra.mxu0 0.0
      %2201 = vmatprep.subr.mxu0 0.0
      %2202 = vmatpush1.msra.mxu0 0.0
      %2203 = vmatprep.subr.mxu0 0.0
      %2204 = vmatpush1.msra.mxu0 0.0
      %2205 = vmatprep.subr.mxu0 0.0
      %2206 = vmatpush1.msra.mxu0 0.0
      %2207 = vmatprep.subr.mxu0 0.0
      %2208 = vmatpush1.msra.mxu0 0.0
      %2209 = vmatprep.subr.mxu0 0.0
      %2210 = vmatpush1.msra.mxu0 0.0
      %2211 = vmatprep.subr.mxu0 0.0
      %2212 = vmatpush1.msra.mxu0 0.0
      %2213 = vmatprep.subr.mxu0 0.0
      %2214 = vmatpush1.msra.mxu0 0.0
      %2215 = vmatprep.subr.mxu0 0.0
      %2216 = vmatpush1.msra.mxu0 0.0
      %2217 = vmatprep.subr.mxu0 0.0
      %2218 = vmatpush1.msra.mxu0 0.0
      %2219 = vmatprep.subr.mxu0 0.0
      %2220 = vmatpush1.msra.mxu0 0.0
      %2221 = vmatprep.subr.mxu0 0.0
      %2222 = vmatpush1.msra.mxu0 0.0
      %2223 = vmatprep.subr.mxu0 0.0
      %2224 = vmatpush1.msra.mxu0 0.0
      %2225 = vmatprep.subr.mxu0 0.0
      %2226 = vmatpush1.msra.mxu0 0.0
      %2227 = vmatprep.subr.mxu0 0.0
      %2228 = vmatpush1.msra.mxu0 0.0
      %2229 = vmatprep.mubr.f32.mxu0 0.0
      %2230 = vmatmul.mubr.f32.gmra.mrb[0].mxu0 %v2093
      %v2231 = vpop.f32.mrb[0].mxu0
      %v2232 = vadd.f32 0.0, %v2231
      %v2233 = vpop.f32.mrb[0].mxu0
      %2234 = vdwg.mxu0
      %v2235 = vadd.f32 %v511, %v2232
      %v2236 = vtanh.pop %v2235
      %2237 = vmatprep.subr.mxu0 0.0
      %2238 = vmatpush1.msra.mxu0 %v632
      %2239 = vmatprep.subr.mxu0 0.0
      %2240 = vmatpush1.msra.mxu0 %v633
      %2241 = vmatprep.subr.mxu0 0.0
      %2242 = vmatpush1.msra.mxu0 %v634
      %2243 = vmatprep.subr.mxu0 0.0
      %2244 = vmatpush1.msra.mxu0 %v635
      %2245 = vmatprep.subr.mxu0 0.0
      %2246 = vmatpush1.msra.mxu0 %v636
      %2247 = vmatprep.subr.mxu0 0.0
      %2248 = vmatpush1.msra.mxu0 %v637
      %2249 = vmatprep.subr.mxu0 0.0
      %2250 = vmatpush1.msra.mxu0 %v638
      %2251 = vmatprep.subr.mxu0 0.0
      %2252 = vmatpush1.msra.mxu0 %v639
      %2253 = vmatprep.subr.mxu0 0.0
      %2254 = vmatpush1.msra.mxu0 %v640
      %2255 = vmatprep.subr.mxu0 0.0
      %2256 = vmatpush1.msra.mxu0 %v641
      %2257 = vmatprep.subr.mxu0 0.0
      %2258 = vmatpush1.msra.mxu0 %v642
      %2259 = vmatprep.subr.mxu0 0.0
      %2260 = vmatpush1.msra.mxu0 %v643
      %2261 = vmatprep.subr.mxu0 0.0
      %2262 = vmatpush1.msra.mxu0 %v644
      %2263 = vmatprep.subr.mxu0 0.0
      %2264 = vmatpush1.msra.mxu0 %v645
      %2265 = vmatprep.subr.mxu0 0.0
      %2266 = vmatpush1.msra.mxu0 %v646
      %2267 = vmatprep.subr.mxu0 0.0
      %2268 = vmatpush1.msra.mxu0 %v647
      %2269 = vmatprep.subr.mxu0 0.0
      %2270 = vmatpush1.msra.mxu0 %v648
      %2271 = vmatprep.subr.mxu0 0.0
      %2272 = vmatpush1.msra.mxu0 %v649
      %2273 = vmatprep.subr.mxu0 0.0
      %2274 = vmatpush1.msra.mxu0 %v650
      %2275 = vmatprep.subr.mxu0 0.0
      %2276 = vmatpush1.msra.mxu0 %v651
      %2277 = vmatprep.subr.mxu0 0.0
      %2278 = vmatpush1.msra.mxu0 %v652
      %2279 = vmatprep.subr.mxu0 0.0
      %2280 = vmatpush1.msra.mxu0 %v653
      %2281 = vmatprep.subr.mxu0 0.0
      %2282 = vmatpush1.msra.mxu0 %v654
      %2283 = vmatprep.subr.mxu0 0.0
      %2284 = vmatpush1.msra.mxu0 %v655
      %2285 = vmatprep.subr.mxu0 0.0
      %2286 = vmatpush1.msra.mxu0 %v656
      %2287 = vmatprep.subr.mxu0 0.0
      %2288 = vmatpush1.msra.mxu0 %v657
      %2289 = vmatprep.subr.mxu0 0.0
      %2290 = vmatpush1.msra.mxu0 %v658
      %2291 = vmatprep.subr.mxu0 0.0
      %2292 = vmatpush1.msra.mxu0 %v659
      %2293 = vmatprep.subr.mxu0 0.0
      %2294 = vmatpush1.msra.mxu0 %v660
      %2295 = vmatprep.subr.mxu0 0.0
      %2296 = vmatpush1.msra.mxu0 %v661
      %2297 = vmatprep.subr.mxu0 0.0
      %2298 = vmatpush1.msra.mxu0 %v662
      %2299 = vmatprep.subr.mxu0 0.0
      %2300 = vmatpush1.msra.mxu0 %v663
      %2301 = vmatprep.mubr.f32.mxu0 %v2164
      %2302 = vmatmul.mubr.f32.gmra.mrb[0].mxu0 %v2236
      %v2303 = vpop.f32.mrb[0].mxu0
      %v2304 = vadd.f32 %v539, %v2303
      %v2305 = vpop.f32.mrb[0].mxu0
      %2306 = vdwg.mxu0
      %v2307 = vtanh.pop %v2304
      %2308 = vmatprep.subr.mxu0 0.0
      %2309 = vmatpush1.msra.mxu0 %v544
      %2310 = vmatprep.subr.mxu0 0.0
      %2311 = vmatpush1.msra.mxu0 %v545
      %2312 = vmatprep.subr.mxu0 0.0
      %2313 = vmatpush1.msra.mxu0 %v546
      %2314 = vmatprep.subr.mxu0 0.0
      %2315 = vmatpush1.msra.mxu0 %v547
      %2316 = vmatprep.subr.mxu0 0.0
      %2317 = vmatpush1.msra.mxu0 %v548
      %2318 = vmatprep.subr.mxu0 0.0
      %2319 = vmatpush1.msra.mxu0 %v549
      %2320 = vmatprep.subr.mxu0 0.0
      %2321 = vmatpush1.msra.mxu0 %v550
      %2322 = vmatprep.subr.mxu0 0.0
      %2323 = vmatpush1.msra.mxu0 %v551
      %2324 = vmatprep.subr.mxu0 0.0
      %2325 = vmatpush1.msra.mxu0 %v552
      %2326 = vmatprep.subr.mxu0 0.0
      %2327 = vmatpush1.msra.mxu0 %v553
      %2328 = vmatprep.subr.mxu0 0.0
      %2329 = vmatpush1.msra.mxu0 %v554
      %2330 = vmatprep.subr.mxu0 0.0
      %2331 = vmatpush1.msra.mxu0 %v555
      %2332 = vmatprep.subr.mxu0 0.0
      %2333 = vmatpush1.msra.mxu0 %v556
      %2334 = vmatprep.subr.mxu0 0.0
      %2335 = vmatpush1.msra.mxu0 %v557
      %2336 = vmatprep.subr.mxu0 0.0
      %2337 = vmatpush1.msra.mxu0 %v558
      %2338 = vmatprep.subr.mxu0 0.0
      %2339 = vmatpush1.msra.mxu0 %v559
      %2340 = vmatprep.subr.mxu0 0.0
      %2341 = vmatpush1.msra.mxu0 0.0
      %2342 = vmatprep.subr.mxu0 0.0
      %2343 = vmatpush1.msra.mxu0 0.0
      %2344 = vmatprep.subr.mxu0 0.0
      %2345 = vmatpush1.msra.mxu0 0.0
      %2346 = vmatprep.subr.mxu0 0.0
      %2347 = vmatpush1.msra.mxu0 0.0
      %2348 = vmatprep.subr.mxu0 0.0
      %2349 = vmatpush1.msra.mxu0 0.0
      %2350 = vmatprep.subr.mxu0 0.0
      %2351 = vmatpush1.msra.mxu0 0.0
      %2352 = vmatprep.subr.mxu0 0.0
      %2353 = vmatpush1.msra.mxu0 0.0
      %2354 = vmatprep.subr.mxu0 0.0
      %2355 = vmatpush1.msra.mxu0 0.0
      %2356 = vmatprep.subr.mxu0 0.0
      %2357 = vmatpush1.msra.mxu0 0.0
      %2358 = vmatprep.subr.mxu0 0.0
      %2359 = vmatpush1.msra.mxu0 0.0
      %2360 = vmatprep.subr.mxu0 0.0
      %2361 = vmatpush1.msra.mxu0 0.0
      %2362 = vmatprep.subr.mxu0 0.0
      %2363 = vmatpush1.msra.mxu0 0.0
      %2364 = vmatprep.subr.mxu0 0.0
      %2365 = vmatpush1.msra.mxu0 0.0
      %2366 = vmatprep.subr.mxu0 0.0
      %2367 = vmatpush1.msra.mxu0 0.0
      %2368 = vmatprep.subr.mxu0 0.0
      %2369 = vmatpush1.msra.mxu0 0.0
      %2370 = vmatprep.subr.mxu0 0.0
      %2371 = vmatpush1.msra.mxu0 0.0
      %2372 = vmatprep.mubr.f32.mxu0 0.0
      %2373 = vmatmul.mubr.f32.gmra.mrb[0].mxu0 %v2236
      %v2374 = vpop.f32.mrb[0].mxu0
      %v2375 = vadd.f32 0.0, %v2374
      %v2376 = vpop.f32.mrb[0].mxu0
      %2377 = vdwg.mxu0
      %v2378 = vadd.f32 %v516, %v2375
      %v2379 = vtanh.pop %v2378
      %2380 = vmatprep.subr.mxu0 0.0
      %2381 = vmatpush1.msra.mxu0 %v632
      %2382 = vmatprep.subr.mxu0 0.0
      %2383 = vmatpush1.msra.mxu0 %v633
      %2384 = vmatprep.subr.mxu0 0.0
      %2385 = vmatpush1.msra.mxu0 %v634
      %2386 = vmatprep.subr.mxu0 0.0
      %2387 = vmatpush1.msra.mxu0 %v635
      %2388 = vmatprep.subr.mxu0 0.0
      %2389 = vmatpush1.msra.mxu0 %v636
      %2390 = vmatprep.subr.mxu0 0.0
      %2391 = vmatpush1.msra.mxu0 %v637
      %2392 = vmatprep.subr.mxu0 0.0
      %2393 = vmatpush1.msra.mxu0 %v638
      %2394 = vmatprep.subr.mxu0 0.0
      %2395 = vmatpush1.msra.mxu0 %v639
      %2396 = vmatprep.subr.mxu0 0.0
      %2397 = vmatpush1.msra.mxu0 %v640
      %2398 = vmatprep.subr.mxu0 0.0
      %2399 = vmatpush1.msra.mxu0 %v641
      %2400 = vmatprep.subr.mxu0 0.0
      %2401 = vmatpush1.msra.mxu0 %v642
      %2402 = vmatprep.subr.mxu0 0.0
      %2403 = vmatpush1.msra.mxu0 %v643
      %2404 = vmatprep.subr.mxu0 0.0
      %2405 = vmatpush1.msra.mxu0 %v644
      %2406 = vmatprep.subr.mxu0 0.0
      %2407 = vmatpush1.msra.mxu0 %v645
      %2408 = vmatprep.subr.mxu0 0.0
      %2409 = vmatpush1.msra.mxu0 %v646
      %2410 = vmatprep.subr.mxu0 0.0
      %2411 = vmatpush1.msra.mxu0 %v647
      %2412 = vmatprep.subr.mxu0 0.0
      %2413 = vmatpush1.msra.mxu0 %v648
      %2414 = vmatprep.subr.mxu0 0.0
      %2415 = vmatpush1.msra.mxu0 %v649
      %2416 = vmatprep.subr.mxu0 0.0
      %2417 = vmatpush1.msra.mxu0 %v650
      %2418 = vmatprep.subr.mxu0 0.0
      %2419 = vmatpush1.msra.mxu0 %v651
      %2420 = vmatprep.subr.mxu0 0.0
      %2421 = vmatpush1.msra.mxu0 %v652
      %2422 = vmatprep.subr.mxu0 0.0
      %2423 = vmatpush1.msra.mxu0 %v653
      %2424 = vmatprep.subr.mxu0 0.0
      %2425 = vmatpush1.msra.mxu0 %v654
      %2426 = vmatprep.subr.mxu0 0.0
      %2427 = vmatpush1.msra.mxu0 %v655
      %2428 = vmatprep.subr.mxu0 0.0
      %2429 = vmatpush1.msra.mxu0 %v656
      %2430 = vmatprep.subr.mxu0 0.0
      %2431 = vmatpush1.msra.mxu0 %v657
      %2432 = vmatprep.subr.mxu0 0.0
      %2433 = vmatpush1.msra.mxu0 %v658
      %2434 = vmatprep.subr.mxu0 0.0
      %2435 = vmatpush1.msra.mxu0 %v659
      %2436 = vmatprep.subr.mxu0 0.0
      %2437 = vmatpush1.msra.mxu0 %v660
      %2438 = vmatprep.subr.mxu0 0.0
      %2439 = vmatpush1.msra.mxu0 %v661
      %2440 = vmatprep.subr.mxu0 0.0
      %2441 = vmatpush1.msra.mxu0 %v662
      %2442 = vmatprep.subr.mxu0 0.0
      %2443 = vmatpush1.msra.mxu0 %v663
      %2444 = vmatprep.mubr.f32.mxu0 %v2307
      %2445 = vmatmul.mubr.f32.gmra.mrb[0].mxu0 %v2379
      %v2446 = vpop.f32.mrb[0].mxu0
      %v2447 = vadd.f32 %v539, %v2446
      %v2448 = vpop.f32.mrb[0].mxu0
      %2449 = vdwg.mxu0
      %v2450 = vtanh.pop %v2447
      %2451 = vmatprep.subr.mxu0 0.0
      %2452 = vmatpush1.msra.mxu0 %v544
      %2453 = vmatprep.subr.mxu0 0.0
      %2454 = vmatpush1.msra.mxu0 %v545
      %2455 = vmatprep.subr.mxu0 0.0
      %2456 = vmatpush1.msra.mxu0 %v546
      %2457 = vmatprep.subr.mxu0 0.0
      %2458 = vmatpush1.msra.mxu0 %v547
      %2459 = vmatprep.subr.mxu0 0.0
      %2460 = vmatpush1.msra.mxu0 %v548
      %2461 = vmatprep.subr.mxu0 0.0
      %2462 = vmatpush1.msra.mxu0 %v549
      %2463 = vmatprep.subr.mxu0 0.0
      %2464 = vmatpush1.msra.mxu0 %v550
      %2465 = vmatprep.subr.mxu0 0.0
      %2466 = vmatpush1.msra.mxu0 %v551
      %2467 = vmatprep.subr.mxu0 0.0
      %2468 = vmatpush1.msra.mxu0 %v552
      %2469 = vmatprep.subr.mxu0 0.0
      %2470 = vmatpush1.msra.mxu0 %v553
      %2471 = vmatprep.subr.mxu0 0.0
      %2472 = vmatpush1.msra.mxu0 %v554
      %2473 = vmatprep.subr.mxu0 0.0
      %2474 = vmatpush1.msra.mxu0 %v555
      %2475 = vmatprep.subr.mxu0 0.0
      %2476 = vmatpush1.msra.mxu0 %v556
      %2477 = vmatprep.subr.mxu0 0.0
      %2478 = vmatpush1.msra.mxu0 %v557
      %2479 = vmatprep.subr.mxu0 0.0
      %2480 = vmatpush1.msra.mxu0 %v558
      %2481 = vmatprep.subr.mxu0 0.0
      %2482 = vmatpush1.msra.mxu0 %v559
      %2483 = vmatprep.subr.mxu0 0.0
      %2484 = vmatpush1.msra.mxu0 0.0
      %2485 = vmatprep.subr.mxu0 0.0
      %2486 = vmatpush1.msra.mxu0 0.0
      %2487 = vmatprep.subr.mxu0 0.0
      %2488 = vmatpush1.msra.mxu0 0.0
      %2489 = vmatprep.subr.mxu0 0.0
      %2490 = vmatpush1.msra.mxu0 0.0
      %2491 = vmatprep.subr.mxu0 0.0
      %2492 = vmatpush1.msra.mxu0 0.0
      %2493 = vmatprep.subr.mxu0 0.0
      %2494 = vmatpush1.msra.mxu0 0.0
      %2495 = vmatprep.subr.mxu0 0.0
      %2496 = vmatpush1.msra.mxu0 0.0
      %2497 = vmatprep.subr.mxu0 0.0
      %2498 = vmatpush1.msra.mxu0 0.0
      %2499 = vmatprep.subr.mxu0 0.0
      %2500 = vmatpush1.msra.mxu0 0.0
      %2501 = vmatprep.subr.mxu0 0.0
      %2502 = vmatpush1.msra.mxu0 0.0
      %2503 = vmatprep.subr.mxu0 0.0
      %2504 = vmatpush1.msra.mxu0 0.0
      %2505 = vmatprep.subr.mxu0 0.0
      %2506 = vmatpush1.msra.mxu0 0.0
      %2507 = vmatprep.subr.mxu0 0.0
      %2508 = vmatpush1.msra.mxu0 0.0
      %2509 = vmatprep.subr.mxu0 0.0
      %2510 = vmatpush1.msra.mxu0 0.0
      %2511 = vmatprep.subr.mxu0 0.0
      %2512 = vmatpush1.msra.mxu0 0.0
      %2513 = vmatprep.subr.mxu0 0.0
      %2514 = vmatpush1.msra.mxu0 0.0
      %2515 = vmatprep.mubr.f32.mxu0 0.0
      %2516 = vmatmul.mubr.f32.gmra.mrb[0].mxu0 %v2379
      %v2517 = vpop.f32.mrb[0].mxu0
      %v2518 = vadd.f32 0.0, %v2517
      %v2519 = vpop.f32.mrb[0].mxu0
      %2520 = vdwg.mxu0
      %v2521 = vadd.f32 %v521, %v2518
      %v2522 = vtanh.pop %v2521
      %2523 = vmatprep.subr.mxu0 0.0
      %2524 = vmatpush1.msra.mxu0 %v632
      %2525 = vmatprep.subr.mxu0 0.0
      %2526 = vmatpush1.msra.mxu0 %v633
      %2527 = vmatprep.subr.mxu0 0.0
      %2528 = vmatpush1.msra.mxu0 %v634
      %2529 = vmatprep.subr.mxu0 0.0
      %2530 = vmatpush1.msra.mxu0 %v635
      %2531 = vmatprep.subr.mxu0 0.0
      %2532 = vmatpush1.msra.mxu0 %v636
      %2533 = vmatprep.subr.mxu0 0.0
      %2534 = vmatpush1.msra.mxu0 %v637
      %2535 = vmatprep.subr.mxu0 0.0
      %2536 = vmatpush1.msra.mxu0 %v638
      %2537 = vmatprep.subr.mxu0 0.0
      %2538 = vmatpush1.msra.mxu0 %v639
      %2539 = vmatprep.subr.mxu0 0.0
      %2540 = vmatpush1.msra.mxu0 %v640
      %2541 = vmatprep.subr.mxu0 0.0
      %2542 = vmatpush1.msra.mxu0 %v641
      %2543 = vmatprep.subr.mxu0 0.0
      %2544 = vmatpush1.msra.mxu0 %v642
      %2545 = vmatprep.subr.mxu0 0.0
      %2546 = vmatpush1.msra.mxu0 %v643
      %2547 = vmatprep.subr.mxu0 0.0
      %2548 = vmatpush1.msra.mxu0 %v644
      %2549 = vmatprep.subr.mxu0 0.0
      %2550 = vmatpush1.msra.mxu0 %v645
      %2551 = vmatprep.subr.mxu0 0.0
      %2552 = vmatpush1.msra.mxu0 %v646
      %2553 = vmatprep.subr.mxu0 0.0
      %2554 = vmatpush1.msra.mxu0 %v647
      %2555 = vmatprep.subr.mxu0 0.0
      %2556 = vmatpush1.msra.mxu0 %v648
      %2557 = vmatprep.subr.mxu0 0.0
      %2558 = vmatpush1.msra.mxu0 %v649
      %2559 = vmatprep.subr.mxu0 0.0
      %2560 = vmatpush1.msra.mxu0 %v650
      %2561 = vmatprep.subr.mxu0 0.0
      %2562 = vmatpush1.msra.mxu0 %v651
      %2563 = vmatprep.subr.mxu0 0.0
      %2564 = vmatpush1.msra.mxu0 %v652
      %2565 = vmatprep.subr.mxu0 0.0
      %2566 = vmatpush1.msra.mxu0 %v653
      %2567 = vmatprep.subr.mxu0 0.0
      %2568 = vmatpush1.msra.mxu0 %v654
      %2569 = vmatprep.subr.mxu0 0.0
      %2570 = vmatpush1.msra.mxu0 %v655
      %2571 = vmatprep.subr.mxu0 0.0
      %2572 = vmatpush1.msra.mxu0 %v656
      %2573 = vmatprep.subr.mxu0 0.0
      %2574 = vmatpush1.msra.mxu0 %v657
      %2575 = vmatprep.subr.mxu0 0.0
      %2576 = vmatpush1.msra.mxu0 %v658
      %2577 = vmatprep.subr.mxu0 0.0
      %2578 = vmatpush1.msra.mxu0 %v659
      %2579 = vmatprep.subr.mxu0 0.0
      %2580 = vmatpush1.msra.mxu0 %v660
      %2581 = vmatprep.subr.mxu0 0.0
      %2582 = vmatpush1.msra.mxu0 %v661
      %2583 = vmatprep.subr.mxu0 0.0
      %2584 = vmatpush1.msra.mxu0 %v662
      %2585 = vmatprep.subr.mxu0 0.0
      %2586 = vmatpush1.msra.mxu0 %v663
      %2587 = vmatprep.mubr.f32.mxu0 %v2450
      %2588 = vmatmul.mubr.f32.gmra.mrb[0].mxu0 %v2522
      %v2589 = vpop.f32.mrb[0].mxu0
      %v2590 = vadd.f32 %v539, %v2589
      %v2591 = vpop.f32.mrb[0].mxu0
      %2592 = vdwg.mxu0
      %v2593 = vtanh.pop %v2590
      %2594 = vmatprep.subr.mxu0 0.0
      %2595 = vmatpush1.msra.mxu0 %v544
      %2596 = vmatprep.subr.mxu0 0.0
      %2597 = vmatpush1.msra.mxu0 %v545
      %2598 = vmatprep.subr.mxu0 0.0
      %2599 = vmatpush1.msra.mxu0 %v546
      %2600 = vmatprep.subr.mxu0 0.0
      %2601 = vmatpush1.msra.mxu0 %v547
      %2602 = vmatprep.subr.mxu0 0.0
      %2603 = vmatpush1.msra.mxu0 %v548
      %2604 = vmatprep.subr.mxu0 0.0
      %2605 = vmatpush1.msra.mxu0 %v549
      %2606 = vmatprep.subr.mxu0 0.0
      %2607 = vmatpush1.msra.mxu0 %v550
      %2608 = vmatprep.subr.mxu0 0.0
      %2609 = vmatpush1.msra.mxu0 %v551
      %2610 = vmatprep.subr.mxu0 0.0
      %2611 = vmatpush1.msra.mxu0 %v552
      %2612 = vmatprep.subr.mxu0 0.0
      %2613 = vmatpush1.msra.mxu0 %v553
      %2614 = vmatprep.subr.mxu0 0.0
      %2615 = vmatpush1.msra.mxu0 %v554
      %2616 = vmatprep.subr.mxu0 0.0
      %2617 = vmatpush1.msra.mxu0 %v555
      %2618 = vmatprep.subr.mxu0 0.0
      %2619 = vmatpush1.msra.mxu0 %v556
      %2620 = vmatprep.subr.mxu0 0.0
      %2621 = vmatpush1.msra.mxu0 %v557
      %2622 = vmatprep.subr.mxu0 0.0
      %2623 = vmatpush1.msra.mxu0 %v558
      %2624 = vmatprep.subr.mxu0 0.0
      %2625 = vmatpush1.msra.mxu0 %v559
      %2626 = vmatprep.subr.mxu0 0.0
      %2627 = vmatpush1.msra.mxu0 0.0
      %2628 = vmatprep.subr.mxu0 0.0
      %2629 = vmatpush1.msra.mxu0 0.0
      %2630 = vmatprep.subr.mxu0 0.0
      %2631 = vmatpush1.msra.mxu0 0.0
      %2632 = vmatprep.subr.mxu0 0.0
      %2633 = vmatpush1.msra.mxu0 0.0
      %2634 = vmatprep.subr.mxu0 0.0
      %2635 = vmatpush1.msra.mxu0 0.0
      %2636 = vmatprep.subr.mxu0 0.0
      %2637 = vmatpush1.msra.mxu0 0.0
      %2638 = vmatprep.subr.mxu0 0.0
      %2639 = vmatpush1.msra.mxu0 0.0
      %2640 = vmatprep.subr.mxu0 0.0
      %2641 = vmatpush1.msra.mxu0 0.0
      %2642 = vmatprep.subr.mxu0 0.0
      %2643 = vmatpush1.msra.mxu0 0.0
      %2644 = vmatprep.subr.mxu0 0.0
      %2645 = vmatpush1.msra.mxu0 0.0
      %2646 = vmatprep.subr.mxu0 0.0
      %2647 = vmatpush1.msra.mxu0 0.0
      %2648 = vmatprep.subr.mxu0 0.0
      %2649 = vmatpush1.msra.mxu0 0.0
      %2650 = vmatprep.subr.mxu0 0.0
      %2651 = vmatpush1.msra.mxu0 0.0
      %2652 = vmatprep.subr.mxu0 0.0
      %2653 = vmatpush1.msra.mxu0 0.0
      %2654 = vmatprep.subr.mxu0 0.0
      %2655 = vmatpush1.msra.mxu0 0.0
      %2656 = vmatprep.subr.mxu0 0.0
      %2657 = vmatpush1.msra.mxu0 0.0
      %2658 = vmatprep.mubr.f32.mxu0 0.0
      %2659 = vmatmul.mubr.f32.gmra.mrb[0].mxu0 %v2522
      %v2660 = vpop.f32.mrb[0].mxu0
      %v2661 = vadd.f32 0.0, %v2660
      %v2662 = vpop.f32.mrb[0].mxu0
      %2663 = vdwg.mxu0
      %v2664 = vadd.f32 %v526, %v2661
      %v2665 = vtanh.pop %v2664
      %2666 = vmatprep.subr.mxu0 0.0
      %2667 = vmatpush1.msra.mxu0 %v632
      %2668 = vmatprep.subr.mxu0 0.0
      %2669 = vmatpush1.msra.mxu0 %v633
      %2670 = vmatprep.subr.mxu0 0.0
      %2671 = vmatpush1.msra.mxu0 %v634
      %2672 = vmatprep.subr.mxu0 0.0
      %2673 = vmatpush1.msra.mxu0 %v635
      %2674 = vmatprep.subr.mxu0 0.0
      %2675 = vmatpush1.msra.mxu0 %v636
      %2676 = vmatprep.subr.mxu0 0.0
      %2677 = vmatpush1.msra.mxu0 %v637
      %2678 = vmatprep.subr.mxu0 0.0
      %2679 = vmatpush1.msra.mxu0 %v638
      %2680 = vmatprep.subr.mxu0 0.0
      %2681 = vmatpush1.msra.mxu0 %v639
      %2682 = vmatprep.subr.mxu0 0.0
      %2683 = vmatpush1.msra.mxu0 %v640
      %2684 = vmatprep.subr.mxu0 0.0
      %2685 = vmatpush1.msra.mxu0 %v641
      %2686 = vmatprep.subr.mxu0 0.0
      %2687 = vmatpush1.msra.mxu0 %v642
      %2688 = vmatprep.subr.mxu0 0.0
      %2689 = vmatpush1.msra.mxu0 %v643
      %2690 = vmatprep.subr.mxu0 0.0
      %2691 = vmatpush1.msra.mxu0 %v644
      %2692 = vmatprep.subr.mxu0 0.0
      %2693 = vmatpush1.msra.mxu0 %v645
      %2694 = vmatprep.subr.mxu0 0.0
      %2695 = vmatpush1.msra.mxu0 %v646
      %2696 = vmatprep.subr.mxu0 0.0
      %2697 = vmatpush1.msra.mxu0 %v647
      %2698 = vmatprep.subr.mxu0 0.0
      %2699 = vmatpush1.msra.mxu0 %v648
      %2700 = vmatprep.subr.mxu0 0.0
      %2701 = vmatpush1.msra.mxu0 %v649
      %2702 = vmatprep.subr.mxu0 0.0
      %2703 = vmatpush1.msra.mxu0 %v650
      %2704 = vmatprep.subr.mxu0 0.0
      %2705 = vmatpush1.msra.mxu0 %v651
      %2706 = vmatprep.subr.mxu0 0.0
      %2707 = vmatpush1.msra.mxu0 %v652
      %2708 = vmatprep.subr.mxu0 0.0
      %2709 = vmatpush1.msra.mxu0 %v653
      %2710 = vmatprep.subr.mxu0 0.0
      %2711 = vmatpush1.msra.mxu0 %v654
      %2712 = vmatprep.subr.mxu0 0.0
      %2713 = vmatpush1.msra.mxu0 %v655
      %2714 = vmatprep.subr.mxu0 0.0
      %2715 = vmatpush1.msra.mxu0 %v656
      %2716 = vmatprep.subr.mxu0 0.0
      %2717 = vmatpush1.msra.mxu0 %v657
      %2718 = vmatprep.subr.mxu0 0.0
      %2719 = vmatpush1.msra.mxu0 %v658
      %2720 = vmatprep.subr.mxu0 0.0
      %2721 = vmatpush1.msra.mxu0 %v659
      %2722 = vmatprep.subr.mxu0 0.0
      %2723 = vmatpush1.msra.mxu0 %v660
      %2724 = vmatprep.subr.mxu0 0.0
      %2725 = vmatpush1.msra.mxu0 %v661
      %2726 = vmatprep.subr.mxu0 0.0
      %2727 = vmatpush1.msra.mxu0 %v662
      %2728 = vmatprep.subr.mxu0 0.0
      %2729 = vmatpush1.msra.mxu0 %v663
      %2730 = vmatprep.mubr.f32.mxu0 %v2593
      %2731 = vmatmul.mubr.f32.gmra.mrb[0].mxu0 %v2665
      %v2732 = vpop.f32.mrb[0].mxu0
      %v2733 = vadd.f32 %v539, %v2732
      %v2734 = vpop.f32.mrb[0].mxu0
      %2735 = vdwg.mxu0
      %v2736 = vtanh.pop %v2733
      %2737 = vmatprep.subr.mxu0 0.0
      %2738 = vmatpush1.msra.mxu0 %v544
      %2739 = vmatprep.subr.mxu0 0.0
      %2740 = vmatpush1.msra.mxu0 %v545
      %2741 = vmatprep.subr.mxu0 0.0
      %2742 = vmatpush1.msra.mxu0 %v546
      %2743 = vmatprep.subr.mxu0 0.0
      %2744 = vmatpush1.msra.mxu0 %v547
      %2745 = vmatprep.subr.mxu0 0.0
      %2746 = vmatpush1.msra.mxu0 %v548
      %2747 = vmatprep.subr.mxu0 0.0
      %2748 = vmatpush1.msra.mxu0 %v549
      %2749 = vmatprep.subr.mxu0 0.0
      %2750 = vmatpush1.msra.mxu0 %v550
      %2751 = vmatprep.subr.mxu0 0.0
      %2752 = vmatpush1.msra.mxu0 %v551
      %2753 = vmatprep.subr.mxu0 0.0
      %2754 = vmatpush1.msra.mxu0 %v552
      %2755 = vmatprep.subr.mxu0 0.0
      %2756 = vmatpush1.msra.mxu0 %v553
      %2757 = vmatprep.subr.mxu0 0.0
      %2758 = vmatpush1.msra.mxu0 %v554
      %2759 = vmatprep.subr.mxu0 0.0
      %2760 = vmatpush1.msra.mxu0 %v555
      %2761 = vmatprep.subr.mxu0 0.0
      %2762 = vmatpush1.msra.mxu0 %v556
      %2763 = vmatprep.subr.mxu0 0.0
      %2764 = vmatpush1.msra.mxu0 %v557
      %2765 = vmatprep.subr.mxu0 0.0
      %2766 = vmatpush1.msra.mxu0 %v558
      %2767 = vmatprep.subr.mxu0 0.0
      %2768 = vmatpush1.msra.mxu0 %v559
      %2769 = vmatprep.subr.mxu0 0.0
      %2770 = vmatpush1.msra.mxu0 0.0
      %2771 = vmatprep.subr.mxu0 0.0
      %2772 = vmatpush1.msra.mxu0 0.0
      %2773 = vmatprep.subr.mxu0 0.0
      %2774 = vmatpush1.msra.mxu0 0.0
      %2775 = vmatprep.subr.mxu0 0.0
      %2776 = vmatpush1.msra.mxu0 0.0
      %2777 = vmatprep.subr.mxu0 0.0
      %2778 = vmatpush1.msra.mxu0 0.0
      %2779 = vmatprep.subr.mxu0 0.0
      %2780 = vmatpush1.msra.mxu0 0.0
      %2781 = vmatprep.subr.mxu0 0.0
      %2782 = vmatpush1.msra.mxu0 0.0
      %2783 = vmatprep.subr.mxu0 0.0
      %2784 = vmatpush1.msra.mxu0 0.0
      %2785 = vmatprep.subr.mxu0 0.0
      %2786 = vmatpush1.msra.mxu0 0.0
      %2787 = vmatprep.subr.mxu0 0.0
      %2788 = vmatpush1.msra.mxu0 0.0
      %2789 = vmatprep.subr.mxu0 0.0
      %2790 = vmatpush1.msra.mxu0 0.0
      %2791 = vmatprep.subr.mxu0 0.0
      %2792 = vmatpush1.msra.mxu0 0.0
      %2793 = vmatprep.subr.mxu0 0.0
      %2794 = vmatpush1.msra.mxu0 0.0
      %2795 = vmatprep.subr.mxu0 0.0
      %2796 = vmatpush1.msra.mxu0 0.0
      %2797 = vmatprep.subr.mxu0 0.0
      %2798 = vmatpush1.msra.mxu0 0.0
      %2799 = vmatprep.subr.mxu0 0.0
      %2800 = vmatpush1.msra.mxu0 0.0
      %2801 = vmatprep.mubr.f32.mxu0 0.0
      %2802 = vmatmul.mubr.f32.gmra.mrb[0].mxu0 %v2665
      %v2803 = vpop.f32.mrb[0].mxu0
      %v2804 = vadd.f32 0.0, %v2803
      %v2805 = vpop.f32.mrb[0].mxu0
      %2806 = vdwg.mxu0
      %v2807 = vadd.f32 %v531, %v2804
      %v2808 = vtanh.pop %v2807
      %2809 = vmatprep.subr.mxu0 0.0
      %2810 = vmatpush1.msra.mxu0 %v632
      %2811 = vmatprep.subr.mxu0 0.0
      %2812 = vmatpush1.msra.mxu0 %v633
      %2813 = vmatprep.subr.mxu0 0.0
      %2814 = vmatpush1.msra.mxu0 %v634
      %2815 = vmatprep.subr.mxu0 0.0
      %2816 = vmatpush1.msra.mxu0 %v635
      %2817 = vmatprep.subr.mxu0 0.0
      %2818 = vmatpush1.msra.mxu0 %v636
      %2819 = vmatprep.subr.mxu0 0.0
      %2820 = vmatpush1.msra.mxu0 %v637
      %2821 = vmatprep.subr.mxu0 0.0
      %2822 = vmatpush1.msra.mxu0 %v638
      %2823 = vmatprep.subr.mxu0 0.0
      %2824 = vmatpush1.msra.mxu0 %v639
      %2825 = vmatprep.subr.mxu0 0.0
      %2826 = vmatpush1.msra.mxu0 %v640
      %2827 = vmatprep.subr.mxu0 0.0
      %2828 = vmatpush1.msra.mxu0 %v641
      %2829 = vmatprep.subr.mxu0 0.0
      %2830 = vmatpush1.msra.mxu0 %v642
      %2831 = vmatprep.subr.mxu0 0.0
      %2832 = vmatpush1.msra.mxu0 %v643
      %2833 = vmatprep.subr.mxu0 0.0
      %2834 = vmatpush1.msra.mxu0 %v644
      %2835 = vmatprep.subr.mxu0 0.0
      %2836 = vmatpush1.msra.mxu0 %v645
      %2837 = vmatprep.subr.mxu0 0.0
      %2838 = vmatpush1.msra.mxu0 %v646
      %2839 = vmatprep.subr.mxu0 0.0
      %2840 = vmatpush1.msra.mxu0 %v647
      %2841 = vmatprep.subr.mxu0 0.0
      %2842 = vmatpush1.msra.mxu0 %v648
      %2843 = vmatprep.subr.mxu0 0.0
      %2844 = vmatpush1.msra.mxu0 %v649
      %2845 = vmatprep.subr.mxu0 0.0
      %2846 = vmatpush1.msra.mxu0 %v650
      %2847 = vmatprep.subr.mxu0 0.0
      %2848 = vmatpush1.msra.mxu0 %v651
      %2849 = vmatprep.subr.mxu0 0.0
      %2850 = vmatpush1.msra.mxu0 %v652
      %2851 = vmatprep.subr.mxu0 0.0
      %2852 = vmatpush1.msra.mxu0 %v653
      %2853 = vmatprep.subr.mxu0 0.0
      %2854 = vmatpush1.msra.mxu0 %v654
      %2855 = vmatprep.subr.mxu0 0.0
      %2856 = vmatpush1.msra.mxu0 %v655
      %2857 = vmatprep.subr.mxu0 0.0
      %2858 = vmatpush1.msra.mxu0 %v656
      %2859 = vmatprep.subr.mxu0 0.0
      %2860 = vmatpush1.msra.mxu0 %v657
      %2861 = vmatprep.subr.mxu0 0.0
      %2862 = vmatpush1.msra.mxu0 %v658
      %2863 = vmatprep.subr.mxu0 0.0
      %2864 = vmatpush1.msra.mxu0 %v659
      %2865 = vmatprep.subr.mxu0 0.0
      %2866 = vmatpush1.msra.mxu0 %v660
      %2867 = vmatprep.subr.mxu0 0.0
      %2868 = vmatpush1.msra.mxu0 %v661
      %2869 = vmatprep.subr.mxu0 0.0
      %2870 = vmatpush1.msra.mxu0 %v662
      %2871 = vmatprep.subr.mxu0 0.0
      %2872 = vmatpush1.msra.mxu0 %v663
      %2873 = vmatprep.mubr.f32.mxu0 %v2736
      %2874 = vmatmul.mubr.f32.gmra.mrb[0].mxu0 %v2808
      %v2875 = vpop.f32.mrb[0].mxu0
      %v2876 = vadd.f32 %v539, %v2875
      %v2877 = vpop.f32.mrb[0].mxu0
      %2878 = vdwg.mxu0
      %v2879 = vtanh.pop %v2876
      %2880 = vst [vmem:[#allocation2] sm:$0xff] %v2808
      %2881 = vst [vmem:[%s542] sm:$0xff] %v2879
      %v2882 = vld [vmem:[%s6] sm:$0xff]
      %v2883 = vld [vmem:[%s6 + $0x8] sm:$0xff]
      %v2884 = vld [vmem:[%s6 + $0x10] sm:$0xff]
      %v2885 = vld [vmem:[%s6 + $0x18] sm:$0xff]
      %v2886 = vld [vmem:[%s6 + $0x20] sm:$0xff]
      %v2887 = vld [vmem:[%s6 + $0x28] sm:$0xff]
      %v2888 = vld [vmem:[%s6 + $0x30] sm:$0xff]
      %v2889 = vld [vmem:[%s6 + $0x38] sm:$0xff]
      %v2890 = vld [vmem:[%s6 + $0x40] sm:$0xff]
      %v2891 = vld [vmem:[%s6 + $0x48] sm:$0xff]
      %v2892 = vld [vmem:[%s6 + $0x50] sm:$0xff]
      %v2893 = vld [vmem:[%s6 + $0x58] sm:$0xff]
      %v2894 = vld [vmem:[%s6 + $0x60] sm:$0xff]
      %v2895 = vld [vmem:[%s6 + $0x68] sm:$0xff]
      %v2896 = vld [vmem:[%s6 + $0x70] sm:$0xff]
      %v2897 = vld [vmem:[%s6 + $0x78] sm:$0xff]
      %v2898 = vld [vmem:[%s7] sm:$0x1]
      %v2900 = vlaneseq
      %v2901 = vshrl.u32 %v2900, 7
      %v2902 = vsub.s32 0, %v2901
      %v2903 = vrot.slane %v2898, %v2902
      %2905 = vmatprep.subr.mxu0 0.0
      %2906 = vmatpush1.msra.mxu0 %v2882
      %2907 = vmatprep.subr.mxu0 0.0
      %2908 = vmatpush1.msra.mxu0 %v2883
      %2909 = vmatprep.subr.mxu0 0.0
      %2910 = vmatpush1.msra.mxu0 %v2884
      %2911 = vmatprep.subr.mxu0 0.0
      %2912 = vmatpush1.msra.mxu0 %v2885
      %2913 = vmatprep.subr.mxu0 0.0
      %2914 = vmatpush1.msra.mxu0 %v2886
      %2915 = vmatprep.subr.mxu0 0.0
      %2916 = vmatpush1.msra.mxu0 %v2887
      %2917 = vmatprep.subr.mxu0 0.0
      %2918 = vmatpush1.msra.mxu0 %v2888
      %2919 = vmatprep.subr.mxu0 0.0
      %2920 = vmatpush1.msra.mxu0 %v2889
      %2921 = vmatprep.subr.mxu0 0.0
      %2922 = vmatpush1.msra.mxu0 %v2890
      %2923 = vmatprep.subr.mxu0 0.0
      %2924 = vmatpush1.msra.mxu0 %v2891
      %2925 = vmatprep.subr.mxu0 0.0
      %2926 = vmatpush1.msra.mxu0 %v2892
      %2927 = vmatprep.subr.mxu0 0.0
      %2928 = vmatpush1.msra.mxu0 %v2893
      %2929 = vmatprep.subr.mxu0 0.0
      %2930 = vmatpush1.msra.mxu0 %v2894
      %2931 = vmatprep.subr.mxu0 0.0
      %2932 = vmatpush1.msra.mxu0 %v2895
      %2933 = vmatprep.subr.mxu0 0.0
      %2934 = vmatpush1.msra.mxu0 %v2896
      %2935 = vmatprep.subr.mxu0 0.0
      %2936 = vmatpush1.msra.mxu0 %v2897
      %2937 = vmatprep.subr.mxu0 0.0
      %2938 = vmatpush1.msra.mxu0 0.0
      %2939 = vmatprep.subr.mxu0 0.0
      %2940 = vmatpush1.msra.mxu0 0.0
      %2941 = vmatprep.subr.mxu0 0.0
      %2942 = vmatpush1.msra.mxu0 0.0
      %2943 = vmatprep.subr.mxu0 0.0
      %2944 = vmatpush1.msra.mxu0 0.0
      %2945 = vmatprep.subr.mxu0 0.0
      %2946 = vmatpush1.msra.mxu0 0.0
      %2947 = vmatprep.subr.mxu0 0.0
      %2948 = vmatpush1.msra.mxu0 0.0
      %2949 = vmatprep.subr.mxu0 0.0
      %2950 = vmatpush1.msra.mxu0 0.0
      %2951 = vmatprep.subr.mxu0 0.0
      %2952 = vmatpush1.msra.mxu0 0.0
      %2953 = vmatprep.subr.mxu0 0.0
      %2954 = vmatpush1.msra.mxu0 0.0
      %2955 = vmatprep.subr.mxu0 0.0
      %2956 = vmatpush1.msra.mxu0 0.0
      %2957 = vmatprep.subr.mxu0 0.0
      %2958 = vmatpush1.msra.mxu0 0.0
      %2959 = vmatprep.subr.mxu0 0.0
      %2960 = vmatpush1.msra.mxu0 0.0
      %2961 = vmatprep.subr.mxu0 0.0
      %2962 = vmatpush1.msra.mxu0 0.0
      %2963 = vmatprep.subr.mxu0 0.0
      %2964 = vmatpush1.msra.mxu0 0.0
      %2965 = vmatprep.subr.mxu0 0.0
      %2966 = vmatpush1.msra.mxu0 0.0
      %2967 = vmatprep.subr.mxu0 0.0
      %2968 = vmatpush1.msra.mxu0 0.0
      %2969 = vmatprep.mubr.f32.mxu0 0.0
      %2970 = vmatmul.mubr.f32.gmra.mrb[0].mxu0 %v734
      %v2971 = vpop.f32.mrb[0].mxu0
      %v2972 = vadd.f32 %v2903, %v2971
      %v2973 = vpop.f32.mrb[0].mxu0
      %2974 = vmatprep.mubr.f32.mxu0 0.0
      %2975 = vmatmul.mubr.f32.gmra.mrb[0].mxu0 %v877
      %v2976 = vpop.f32.mrb[0].mxu0
      %v2977 = vadd.f32 %v2903, %v2976
      %v2978 = vpop.f32.mrb[0].mxu0
      %2979 = vmatprep.mubr.f32.mxu0 0.0
      %2980 = vmatmul.mubr.f32.gmra.mrb[0].mxu0 %v1020
      %v2981 = vpop.f32.mrb[0].mxu0
      %v2982 = vadd.f32 %v2903, %v2981
      %v2983 = vpop.f32.mrb[0].mxu0
      %2984 = vmatprep.mubr.f32.mxu0 0.0
      %2985 = vmatmul.mubr.f32.gmra.mrb[0].mxu0 %v1163
      %v2986 = vpop.f32.mrb[0].mxu0
      %v2987 = vadd.f32 %v2903, %v2986
      %v2988 = vpop.f32.mrb[0].mxu0
      %2989 = vmatprep.mubr.f32.mxu0 0.0
      %2990 = vmatmul.mubr.f32.gmra.mrb[0].mxu0 %v1306
      %v2991 = vpop.f32.mrb[0].mxu0
      %v2992 = vadd.f32 %v2903, %v2991
      %v2993 = vpop.f32.mrb[0].mxu0
      %2994 = vmatprep.mubr.f32.mxu0 0.0
      %2995 = vmatmul.mubr.f32.gmra.mrb[0].mxu0 %v1449
      %v2996 = vpop.f32.mrb[0].mxu0
      %v2997 = vadd.f32 %v2903, %v2996
      %v2998 = vpop.f32.mrb[0].mxu0
      %2999 = vmatprep.mubr.f32.mxu0 0.0
      %3000 = vmatmul.mubr.f32.gmra.mrb[0].mxu0 %v1592
      %v3001 = vpop.f32.mrb[0].mxu0
      %v3002 = vadd.f32 %v2903, %v3001
      %v3003 = vpop.f32.mrb[0].mxu0
      %3004 = vmatprep.mubr.f32.mxu0 0.0
      %3005 = vmatmul.mubr.f32.gmra.mrb[0].mxu0 %v1735
      %v3006 = vpop.f32.mrb[0].mxu0
      %v3007 = vadd.f32 %v2903, %v3006
      %v3008 = vpop.f32.mrb[0].mxu0
      %3009 = vmatprep.mubr.f32.mxu0 0.0
      %3010 = vmatmul.mubr.f32.gmra.mrb[0].mxu0 %v1878
      %v3011 = vpop.f32.mrb[0].mxu0
      %v3012 = vadd.f32 %v2903, %v3011
      %v3013 = vpop.f32.mrb[0].mxu0
      %3014 = vmatprep.mubr.f32.mxu0 0.0
      %3015 = vmatmul.mubr.f32.gmra.mrb[0].mxu0 %v2021
      %v3016 = vpop.f32.mrb[0].mxu0
      %v3017 = vadd.f32 %v2903, %v3016
      %v3018 = vpop.f32.mrb[0].mxu0
      %3019 = vmatprep.mubr.f32.mxu0 0.0
      %3020 = vmatmul.mubr.f32.gmra.mrb[0].mxu0 %v2164
      %v3021 = vpop.f32.mrb[0].mxu0
      %v3022 = vadd.f32 %v2903, %v3021
      %v3023 = vpop.f32.mrb[0].mxu0
      %3024 = vmatprep.mubr.f32.mxu0 0.0
      %3025 = vmatmul.mubr.f32.gmra.mrb[0].mxu0 %v2307
      %v3026 = vpop.f32.mrb[0].mxu0
      %v3027 = vadd.f32 %v2903, %v3026
      %v3028 = vpop.f32.mrb[0].mxu0
      %3029 = vmatprep.mubr.f32.mxu0 0.0
      %3030 = vmatmul.mubr.f32.gmra.mrb[0].mxu0 %v2450
      %v3031 = vpop.f32.mrb[0].mxu0
      %v3032 = vadd.f32 %v2903, %v3031
      %v3033 = vpop.f32.mrb[0].mxu0
      %3034 = vmatprep.mubr.f32.mxu0 0.0
      %3035 = vmatmul.mubr.f32.gmra.mrb[0].mxu0 %v2593
      %v3036 = vpop.f32.mrb[0].mxu0
      %v3037 = vadd.f32 %v2903, %v3036
      %v3038 = vpop.f32.mrb[0].mxu0
      %3039 = vmatprep.mubr.f32.mxu0 0.0
      %3040 = vmatmul.mubr.f32.gmra.mrb[0].mxu0 %v2736
      %v3041 = vpop.f32.mrb[0].mxu0
      %v3042 = vadd.f32 %v2903, %v3041
      %v3043 = vpop.f32.mrb[0].mxu0
      %3044 = vmatprep.mubr.f32.mxu0 0.0
      %3045 = vmatmul.mubr.f32.gmra.mrb[0].mxu0 %v2879
      %v3046 = vpop.f32.mrb[0].mxu0
      %v3047 = vadd.f32 %v2903, %v3046
      %v3048 = vpop.f32.mrb[0].mxu0
      %3049 = vdwg.mxu0
      %3050 = vst [vmem:[%s307] sm:$0xff] %v2972
      %3051 = vst [vmem:[%s307 + $0x8] sm:$0xff] %v2977
      %3052 = vst [vmem:[%s307 + $0x10] sm:$0xff] %v2982
      %3053 = vst [vmem:[%s307 + $0x18] sm:$0xff] %v2987
      %3054 = vst [vmem:[%s307 + $0x20] sm:$0xff] %v2992
      %3055 = vst [vmem:[%s307 + $0x28] sm:$0xff] %v2997
      %3056 = vst [vmem:[%s307 + $0x30] sm:$0xff] %v3002
      %3057 = vst [vmem:[%s307 + $0x38] sm:$0xff] %v3007
      %3058 = vst [vmem:[%s307 + $0x40] sm:$0xff] %v3012
      %3059 = vst [vmem:[%s307 + $0x48] sm:$0xff] %v3017
      %3060 = vst [vmem:[%s307 + $0x50] sm:$0xff] %v3022
      %3061 = vst [vmem:[%s307 + $0x58] sm:$0xff] %v3027
      %3062 = vst [vmem:[%s307 + $0x60] sm:$0xff] %v3032
      %3063 = vst [vmem:[%s307 + $0x68] sm:$0xff] %v3037
      %3064 = vst [vmem:[%s307 + $0x70] sm:$0xff] %v3042
      %3065 = vst [vmem:[%s307 + $0x78] sm:$0xff] %v3047
      %s3066 = smul.u32 16, %s19
      %p3067 = scmp.lt.s32.totalorder %s3066, 63
      %s3068 = scalar_select %p3067, %s3066, 63
      %s3069 = smul.addr %s3068, 8
      %s3070 = scalar_lea.vmem %s8, %s3069
      // Predicated region
      $region57: #{rnn_net_forward.1} parent=51 // pred_check
        %p3071 = pneg %p210
      $region58: #{rnn_net_forward.1} parent=51 // pred_check_branch
        %3073 = sbr.rel (%p3071) target = $region60
      $region59: #{rnn_net_forward.1} parent=51 // pred_region
        %s3074 = smul.u32 16, %s19
      $region60: #{rnn_net_forward.1} parent=51 // pred_fallthru
        _
    $region52: #{rnn_net_forward.1} parent=5 // pred_fallthru
      _
    %p3075 = scmp.le.s32.totalorder 2, %s14
    // Predicated region
    $region61: #{rnn_net_forward.1} parent=5 // pred_check
      %p3076 = pneg %p3075
    $region62: #{rnn_net_forward.1} parent=5 // pred_check_branch
      %3078 = sbr.rel (%p3076) target = $region64
    $region63: #{rnn_net_forward.1} parent=5 // pred_region
      %s3079 = ssub.s32 %s14, 2
      // Predicated region
      $region65: #{rnn_net_forward.1} parent=63 // pred_check
        %p3080 = pneg %p216
      $region66: #{rnn_net_forward.1} parent=63 // pred_check_branch
        %3082 = sbr.rel (%p3080) target = $region68
      $region67: #{rnn_net_forward.1} parent=63 // pred_region
        %s3083 = smul.u32 16, %s20
        %p3084 = scmp.lt.s32.totalorder %s3083, 63
        %s3085 = scalar_select %p3084, %s3083, 63
        %s3086 = smul.addr %s3085, 8
        %s3087 = scalar_lea.vmem %s8, %s3086
      $region68: #{rnn_net_forward.1} parent=63 // pred_fallthru
        _
    $region64: #{rnn_net_forward.1} parent=5 // pred_fallthru
      _
  $region6: #{rnn_net_forward.1} parent=0 // loop_footer
    %s18 = sadd.s32 1, %s14
  $region7: #{rnn_net_forward.1} parent=0 // loop_footer_branch
    %13 = sbr.rel target = $region3
  $region8: #{rnn_net_forward.1} parent=0 // loop_exit
    _

</llo_original>
